<compile_context>
chip_gen: v7x
topology: tpu7x:2x2x1
jax: 0.10.0
libtpu: 0.0.40
codegen_flags: <defaults>
</compile_context>

<pallas_src>
import numpy as np
import jax
import jax.numpy as jnp
from jax.experimental import pallas as pl
from jax.experimental.pallas import tpu as pltpu


def _round_up(v, m):
    return (v + m - 1) // m * m


# ------------------------------ Pallas kernel ------------------------------ #

def cnn_kernel(x_ref, w1_ref, sh1_ref, w2_ref, sh2_ref, w3_ref, sh3_ref,
               fc1w_ref, fc1b_ref, fc2w_ref, fc2b_ref, out_ref):
    """One batch tile of the whole CNN forward, fully VMEM-resident.

    x_ref    : (TM, K1)     bf16, CHW-flattened images (K padded to mult. of 128)
    wL_ref   : (KL, 4*GL)   bf16, conv + BN-scale + pool-quadrant Toeplitz matrix
    shL_ref  : (1, 4*GL)    f32,  folded BN shift (incl. conv bias), 0 in pad lanes
    fc1w_ref : (G3, 128) bf16   fc1b_ref : (1, 128) f32
    fc2w_ref : (1, 128)  f32    fc2b_ref : (1, 1)   f32
    out_ref  : (TM, 128) f32    sigmoid prob broadcast across lanes (lane-dense)
    """

    def conv_bn_relu_pool(a_bf16, w_ref, sh_ref):
        g = w_ref.shape[1] // 4                       # quadrant group (multiple of 128)
        y = jnp.dot(a_bf16, w_ref[...], preferred_element_type=jnp.float32)
        y = jnp.maximum(y + sh_ref[...], 0.0)         # BN (scale pre-folded) + ReLU, f32
        p01 = jnp.maximum(y[:, 0 * g:1 * g], y[:, 1 * g:2 * g])
        p23 = jnp.maximum(y[:, 2 * g:3 * g], y[:, 3 * g:4 * g])
        return jnp.maximum(p01, p23)                  # MaxPool2d(2, 2)

    a = conv_bn_relu_pool(x_ref[...], w1_ref, sh1_ref)
    a = conv_bn_relu_pool(a.astype(jnp.bfloat16), w2_ref, sh2_ref)
    a = conv_bn_relu_pool(a.astype(jnp.bfloat16), w3_ref, sh3_ref)   # (TM, G3), CHW order

    h = jnp.dot(a.astype(jnp.bfloat16), fc1w_ref[...],
                preferred_element_type=jnp.float32) + fc1b_ref[...]
    h = jnp.maximum(h, 0.0)
    # TODO(synk): Dropout is eval-mode identity here (no stochastic mask).
    logits = jnp.sum(h * fc2w_ref[...], axis=-1, keepdims=True) + fc2b_ref[...]
    prob = pl.reciprocal(1.0 + jnp.exp(-logits), approx=True)        # sigmoid, EUP slot
    out_ref[...] = jnp.broadcast_to(prob, out_ref.shape).astype(out_ref.dtype)


def cnn_forward(x_nchw, p):
    n = x_nchw.shape[0]
    x_flat = x_nchw.reshape(n, -1)                    # NCHW flatten == CHW order per image
    kx = p["w1"].shape[0]                             # padded input feature count
    tm = min(128, _round_up(max(n, 1), 8))            # batch tile, sublane aligned
    n_pad = _round_up(n, tm)
    x_flat = jnp.pad(x_flat, ((0, n_pad - n), (0, kx - x_flat.shape[1])))
    x_flat = x_flat.astype(jnp.bfloat16)

    weight_keys = ("w1", "sh1", "w2", "sh2", "w3", "sh3",
                   "fc1_w", "fc1_b", "fc2_w", "fc2_b")
    weights = [p[k] for k in weight_keys]
    weight_bytes = sum(int(np.prod(w.shape)) * w.dtype.itemsize for w in weights)
    # TODO(synk): for non-toy input_size/out_channels the layer-1 Toeplitz matrix grows
    # quadratically; stream it in column blocks (extra grid axis + BlockSpec on w1)
    # instead of keeping it fully VMEM-resident (critical on v7x's 64 MiB VMEM).
    vmem_limit = int(min(64 * 2**20, weight_bytes + (16 << 20)))

    def const2d(a):
        return pl.BlockSpec(a.shape, lambda i: (0, 0))   # weights resident across tiles

    out = pl.pallas_call(
        cnn_kernel,
        out_shape=jax.ShapeDtypeStruct((n_pad, 128), jnp.float32),
        grid=(n_pad // tm,),
        in_specs=[pl.BlockSpec((tm, kx), lambda i: (i, 0))] + [const2d(w) for w in weights],
        out_specs=pl.BlockSpec((tm, 128), lambda i: (i, 0)),
        compiler_params=pltpu.CompilerParams(
            dimension_semantics=("parallel",),
            vmem_limit_bytes=vmem_limit),
    )(x_flat, *weights)
    return out[:n, :1]


# -------------------- host-side weight folding (no activations) -------------------- #

def _build_conv_pool_matrix(w, bn_scale, H, W, rows_pad, g_pad):
    """Fold Conv3x3(pad=1) + BN scale + the 4 MaxPool(2,2) quadrants into one dense
    (rows_pad, 4*g_pad) matrix.  Rows index CHW-flattened inputs (zero-padded to
    rows_pad), columns index [quadrant, c_out, i, j]; each quadrant group is padded
    to g_pad columns (lane alignment)."""
    w = np.asarray(w, np.float32) * np.asarray(bn_scale, np.float32)[:, None, None, None]
    Cout, Cin = w.shape[0], w.shape[1]
    Ph, Pw = H // 2, W // 2
    M = np.zeros((rows_pad, 4 * g_pad), np.float32)
    ci = np.arange(Cin)
    co = np.arange(Cout)
    for a in range(2):
        for b in range(2):
            q = 2 * a + b
            for i in range(Ph):
                for j in range(Pw):
                    cols = q * g_pad + co * (Ph * Pw) + i * Pw + j
                    ho, wo = 2 * i + a, 2 * j + b          # conv output feeding this pool cell
                    for dh in range(3):
                        for dw in range(3):
                            hi, wi = ho + dh - 1, wo + dw - 1
                            if 0 <= hi < H and 0 <= wi < W:  # padding=1 -> OOB taps are zero
                                rows = ci * (H * W) + hi * W + wi
                                M[np.ix_(rows, cols)] += w[:, :, dh, dw].T
    return M


def _tile_shift(shift, Ph, Pw, g_pad):
    """(Cout,) BN shift -> (1, 4*g_pad) row matching the matrix column order (pad = 0)."""
    s = np.repeat(np.asarray(shift, np.float32), Ph * Pw)
    s = np.pad(s, (0, g_pad - s.size))
    return jnp.asarray(np.tile(s, 4)[None])


def prepare_params(raw, input_size, eps=1e-5):
    assert input_size % 8 == 0, "three MaxPool(2,2) stages require input_size % 8 == 0"

    # BatchNorm2d eval-mode defaults: gamma=1, beta=0, running_mean=0, running_var=1.
    # TODO(synk): for a trained checkpoint, substitute real gamma/beta/running stats here.
    def fold(bias):
        scale = np.full(np.asarray(bias).shape, 1.0 / np.sqrt(1.0 + eps), np.float32)
        shift = np.asarray(bias, np.float32) * scale
        return scale, shift

    p = {}
    rows = _round_up(3 * input_size * input_size, 128)     # layer-1 K (== padded x columns)
    for layer, (wn, bn, s) in enumerate((("cw1", "cb1", input_size),
                                         ("cw2", "cb2", input_size // 2),
                                         ("cw3", "cb3", input_size // 4)), start=1):
        scale, shift = fold(raw[bn])
        Cout = raw[wn].shape[0]
        Ph = Pw = s // 2
        g_pad = _round_up(Cout * Ph * Pw, 128)              # lane-align pool groups
        M = _build_conv_pool_matrix(raw[wn], scale, s, s, rows_pad=rows, g_pad=g_pad)
        p[f"w{layer}"] = jnp.asarray(M, jnp.bfloat16)
        p[f"sh{layer}"] = _tile_shift(shift, Ph, Pw, g_pad)
        rows = g_pad                                        # next layer's (padded) K
    fc1 = np.zeros((rows, 128), np.float32)                 # zero rows for padded features
    fc1[:raw["fc1_w"].shape[0]] = np.asarray(raw["fc1_w"], np.float32)
    p["fc1_w"] = jnp.asarray(fc1, jnp.bfloat16)
    p["fc1_b"] = jnp.asarray(raw["fc1_b"], jnp.float32).reshape(1, -1)
    p["fc2_w"] = jnp.asarray(raw["fc2_w"], jnp.float32)     # (1, 128) row vector
    p["fc2_b"] = jnp.asarray(raw["fc2_b"], jnp.float32)     # (1, 1)
    return p


# --------------------------- deterministic raw params --------------------------- #

def init_params(key, input_size, out_channels):
    c1, c2, c3 = out_channels, out_channels * 2, out_channels * 4
    feat = (input_size // 8) * (input_size // 8) * c3
    ks = jax.random.split(key, 10)
    return dict(
        cw1=jax.random.normal(ks[0], (c1, 3, 3, 3), jnp.float32) * 0.2,   # (Cout,Cin,kh,kw)
        cb1=jax.random.normal(ks[1], (c1,), jnp.float32) * 0.1,
        cw2=jax.random.normal(ks[2], (c2, c1, 3, 3), jnp.float32) * 0.2,
        cb2=jax.random.normal(ks[3], (c2,), jnp.float32) * 0.1,
        cw3=jax.random.normal(ks[4], (c3, c2, 3, 3), jnp.float32) * 0.2,
        cb3=jax.random.normal(ks[5], (c3,), jnp.float32) * 0.1,
        fc1_w=jax.random.normal(ks[6], (feat, 128), jnp.float32) * 0.05,
        fc1_b=jax.random.normal(ks[7], (128,), jnp.float32) * 0.05,
        fc2_w=jax.random.normal(ks[8], (1, 128), jnp.float32) * 0.05,
        fc2_b=jax.random.normal(ks[9], (1, 1), jnp.float32) * 0.05,
    )


# ------------------------------ pure-JAX reference ------------------------------ #

def cnn_reference(x_nchw, raw, eps=1e-5):
    hi = jax.lax.Precision.HIGHEST
    x = jnp.transpose(x_nchw, (0, 2, 3, 1))                         # NCHW -> NHWC
    for w, b in ((raw["cw1"], raw["cb1"]),
                 (raw["cw2"], raw["cb2"]),
                 (raw["cw3"], raw["cb3"])):
        y = jax.lax.conv_general_dilated(
            x, jnp.transpose(w, (2, 3, 1, 0)), (1, 1), "SAME",
            dimension_numbers=("NHWC", "HWIO", "NHWC"), precision=hi)
        y = (y + b) / jnp.sqrt(1.0 + eps)                           # +bias, BN eval defaults
        y = jnp.maximum(y, 0.0)
        x = jax.lax.reduce_window(y, -jnp.inf, jax.lax.max,
                                  (1, 2, 2, 1), (1, 2, 2, 1), "VALID")
    n = x.shape[0]
    feat = jnp.transpose(x, (0, 3, 1, 2)).reshape(n, -1)            # PyTorch Flatten order
    h = jnp.maximum(jnp.dot(feat, raw["fc1_w"], precision=hi) + raw["fc1_b"], 0.0)
    logits = jnp.dot(h, raw["fc2_w"].T, precision=hi) + raw["fc2_b"]
    return jax.nn.sigmoid(logits)


# ----------------------------------- main ----------------------------------- #

if __name__ == "__main__":
    input_size = 16     # config['model']['classifier']['input_size']
    out_channels = 4    # config['model']['classifier']['out_channels']
    key = jax.random.PRNGKey(0)
    kx, kp = jax.random.split(key)
    x = jax.random.normal(kx, (2, 3, input_size, input_size), jnp.float32)  # NCHW like PyTorch
    raw = init_params(kp, input_size, out_channels)
    params = prepare_params(raw, input_size)

    out = jax.block_until_ready(cnn_forward(x, params))
    ref = jax.block_until_ready(cnn_reference(x, raw))

    assert out.shape == (2, 1)
    assert bool(jnp.all((out >= 0.0) & (out <= 1.0)))
    assert bool(jnp.allclose(out, ref, atol=1e-2, rtol=1e-2)), (out, ref)
    print("KERNEL_OK")
</pallas_src>

<mosaic_0001>
module attributes {stable_mosaic.version = 11 : i64} {
  func.func @cnn_kernel(%arg0: i32, %arg1: memref<8x768xbf16, #tpu.memory_space<vmem>>, %arg2: memref<768x1024xbf16, #tpu.memory_space<vmem>>, %arg3: memref<1x1024xf32, #tpu.memory_space<vmem>>, %arg4: memref<256x512xbf16, #tpu.memory_space<vmem>>, %arg5: memref<1x512xf32, #tpu.memory_space<vmem>>, %arg6: memref<128x512xbf16, #tpu.memory_space<vmem>>, %arg7: memref<1x512xf32, #tpu.memory_space<vmem>>, %arg8: memref<128x128xbf16, #tpu.memory_space<vmem>>, %arg9: memref<1x128xf32, #tpu.memory_space<vmem>>, %arg10: memref<1x128xf32, #tpu.memory_space<vmem>>, %arg11: memref<1x1xf32, #tpu.memory_space<vmem>>, %arg12: memref<8x128xf32, #tpu.memory_space<vmem>>) attributes {dimension_semantics = [#tpu.dimension_semantics<parallel>], iteration_bounds = array<i64: 1>, scalar_prefetch = 0 : i64, scratch_operands = 0 : i64, tpu.core_type = #tpu.core_type<tc>, window_params = [{transform_indices = @transform_0, window_bounds = array<i64: 8, 768>}, {pipeline_mode = #tpu.pipeline_mode<synchronous>, transform_indices = @transform_1, window_bounds = array<i64: 768, 1024>}, {pipeline_mode = #tpu.pipeline_mode<synchronous>, transform_indices = @transform_2, window_bounds = array<i64: 1, 1024>}, {pipeline_mode = #tpu.pipeline_mode<synchronous>, transform_indices = @transform_3, window_bounds = array<i64: 256, 512>}, {pipeline_mode = #tpu.pipeline_mode<synchronous>, transform_indices = @transform_4, window_bounds = array<i64: 1, 512>}, {pipeline_mode = #tpu.pipeline_mode<synchronous>, transform_indices = @transform_5, window_bounds = array<i64: 128, 512>}, {pipeline_mode = #tpu.pipeline_mode<synchronous>, transform_indices = @transform_6, window_bounds = array<i64: 1, 512>}, {pipeline_mode = #tpu.pipeline_mode<synchronous>, transform_indices = @transform_7, window_bounds = array<i64: 128, 128>}, {pipeline_mode = #tpu.pipeline_mode<synchronous>, transform_indices = @transform_8, window_bounds = array<i64: 1, 128>}, {pipeline_mode = #tpu.pipeline_mode<synchronous>, transform_indices = @transform_9, window_bounds = array<i64: 1, 128>}, {pipeline_mode = #tpu.pipeline_mode<synchronous>, transform_indices = @transform_10, window_bounds = array<i64: 1, 1>}, {transform_indices = @transform_11, window_bounds = array<i64: 8, 128>}]} {
    %c0 = arith.constant 0 : index
    %c0_0 = arith.constant 0 : index
    %0 = vector.load %arg1[%c0, %c0_0] : memref<8x768xbf16, #tpu.memory_space<vmem>>, vector<8x768xbf16>
    %c0_1 = arith.constant 0 : index
    %c0_2 = arith.constant 0 : index
    %1 = vector.load %arg2[%c0_1, %c0_2] : memref<768x1024xbf16, #tpu.memory_space<vmem>>, vector<768x1024xbf16>
    %cst = arith.constant dense<0.000000e+00> : vector<8x1024xf32>
    %2 = tpu.matmul %0, %1, %cst {dimension_numbers = #tpu.dot_dimension_numbers<[1], [0], [0], [1], [0, 0, 1, 1], [], []>} : vector<8x768xbf16>, vector<768x1024xbf16>, vector<8x1024xf32> -> vector<8x1024xf32>
    %c0_3 = arith.constant 0 : index
    %c0_4 = arith.constant 0 : index
    %3 = vector.load %arg3[%c0_3, %c0_4] : memref<1x1024xf32, #tpu.memory_space<vmem>>, vector<1x1024xf32>
    %4 = vector.broadcast %3 : vector<1x1024xf32> to vector<8x1024xf32>
    %5 = arith.addf %2, %4 : vector<8x1024xf32>
    %cst_5 = arith.constant 0.000000e+00 : f32
    %6 = vector.broadcast %cst_5 : f32 to vector<8x1024xf32>
    %7 = arith.maximumf %5, %6 : vector<8x1024xf32>
    %8 = vector.extract_strided_slice %7 {offsets = [0, 0], sizes = [8, 256], strides = [1, 1]} : vector<8x1024xf32> to vector<8x256xf32>
    %9 = vector.extract_strided_slice %7 {offsets = [0, 256], sizes = [8, 256], strides = [1, 1]} : vector<8x1024xf32> to vector<8x256xf32>
    %10 = arith.maximumf %8, %9 : vector<8x256xf32>
    %11 = vector.extract_strided_slice %7 {offsets = [0, 512], sizes = [8, 256], strides = [1, 1]} : vector<8x1024xf32> to vector<8x256xf32>
    %12 = vector.extract_strided_slice %7 {offsets = [0, 768], sizes = [8, 256], strides = [1, 1]} : vector<8x1024xf32> to vector<8x256xf32>
    %13 = arith.maximumf %11, %12 : vector<8x256xf32>
    %14 = arith.maximumf %10, %13 : vector<8x256xf32>
    %15 = arith.truncf %14 : vector<8x256xf32> to vector<8x256xbf16>
    %c0_6 = arith.constant 0 : index
    %c0_7 = arith.constant 0 : index
    %16 = vector.load %arg4[%c0_6, %c0_7] : memref<256x512xbf16, #tpu.memory_space<vmem>>, vector<256x512xbf16>
    %cst_8 = arith.constant dense<0.000000e+00> : vector<8x512xf32>
    %17 = tpu.matmul %15, %16, %cst_8 {dimension_numbers = #tpu.dot_dimension_numbers<[1], [0], [0], [1], [0, 0, 1, 1], [], []>} : vector<8x256xbf16>, vector<256x512xbf16>, vector<8x512xf32> -> vector<8x512xf32>
    %c0_9 = arith.constant 0 : index
    %c0_10 = arith.constant 0 : index
    %18 = vector.load %arg5[%c0_9, %c0_10] : memref<1x512xf32, #tpu.memory_space<vmem>>, vector<1x512xf32>
    %19 = vector.broadcast %18 : vector<1x512xf32> to vector<8x512xf32>
    %20 = arith.addf %17, %19 : vector<8x512xf32>
    %cst_11 = arith.constant 0.000000e+00 : f32
    %21 = vector.broadcast %cst_11 : f32 to vector<8x512xf32>
    %22 = arith.maximumf %20, %21 : vector<8x512xf32>
    %23 = vector.extract_strided_slice %22 {offsets = [0, 0], sizes = [8, 128], strides = [1, 1]} : vector<8x512xf32> to vector<8x128xf32>
    %24 = vector.extract_strided_slice %22 {offsets = [0, 128], sizes = [8, 128], strides = [1, 1]} : vector<8x512xf32> to vector<8x128xf32>
    %25 = arith.maximumf %23, %24 : vector<8x128xf32>
    %26 = vector.extract_strided_slice %22 {offsets = [0, 256], sizes = [8, 128], strides = [1, 1]} : vector<8x512xf32> to vector<8x128xf32>
    %27 = vector.extract_strided_slice %22 {offsets = [0, 384], sizes = [8, 128], strides = [1, 1]} : vector<8x512xf32> to vector<8x128xf32>
    %28 = arith.maximumf %26, %27 : vector<8x128xf32>
    %29 = arith.maximumf %25, %28 : vector<8x128xf32>
    %30 = arith.truncf %29 : vector<8x128xf32> to vector<8x128xbf16>
    %c0_12 = arith.constant 0 : index
    %c0_13 = arith.constant 0 : index
    %31 = vector.load %arg6[%c0_12, %c0_13] : memref<128x512xbf16, #tpu.memory_space<vmem>>, vector<128x512xbf16>
    %cst_14 = arith.constant dense<0.000000e+00> : vector<8x512xf32>
    %32 = tpu.matmul %30, %31, %cst_14 {dimension_numbers = #tpu.dot_dimension_numbers<[1], [0], [0], [1], [0, 0, 1, 1], [], []>} : vector<8x128xbf16>, vector<128x512xbf16>, vector<8x512xf32> -> vector<8x512xf32>
    %c0_15 = arith.constant 0 : index
    %c0_16 = arith.constant 0 : index
    %33 = vector.load %arg7[%c0_15, %c0_16] : memref<1x512xf32, #tpu.memory_space<vmem>>, vector<1x512xf32>
    %34 = vector.broadcast %33 : vector<1x512xf32> to vector<8x512xf32>
    %35 = arith.addf %32, %34 : vector<8x512xf32>
    %cst_17 = arith.constant 0.000000e+00 : f32
    %36 = vector.broadcast %cst_17 : f32 to vector<8x512xf32>
    %37 = arith.maximumf %35, %36 : vector<8x512xf32>
    %38 = vector.extract_strided_slice %37 {offsets = [0, 0], sizes = [8, 128], strides = [1, 1]} : vector<8x512xf32> to vector<8x128xf32>
    %39 = vector.extract_strided_slice %37 {offsets = [0, 128], sizes = [8, 128], strides = [1, 1]} : vector<8x512xf32> to vector<8x128xf32>
    %40 = arith.maximumf %38, %39 : vector<8x128xf32>
    %41 = vector.extract_strided_slice %37 {offsets = [0, 256], sizes = [8, 128], strides = [1, 1]} : vector<8x512xf32> to vector<8x128xf32>
    %42 = vector.extract_strided_slice %37 {offsets = [0, 384], sizes = [8, 128], strides = [1, 1]} : vector<8x512xf32> to vector<8x128xf32>
    %43 = arith.maximumf %41, %42 : vector<8x128xf32>
    %44 = arith.maximumf %40, %43 : vector<8x128xf32>
    %45 = arith.truncf %44 : vector<8x128xf32> to vector<8x128xbf16>
    %c0_18 = arith.constant 0 : index
    %c0_19 = arith.constant 0 : index
    %46 = vector.load %arg8[%c0_18, %c0_19] : memref<128x128xbf16, #tpu.memory_space<vmem>>, vector<128x128xbf16>
    %cst_20 = arith.constant dense<0.000000e+00> : vector<8x128xf32>
    %47 = tpu.matmul %45, %46, %cst_20 {dimension_numbers = #tpu.dot_dimension_numbers<[1], [0], [0], [1], [0, 0, 1, 1], [], []>} : vector<8x128xbf16>, vector<128x128xbf16>, vector<8x128xf32> -> vector<8x128xf32>
    %c0_21 = arith.constant 0 : index
    %c0_22 = arith.constant 0 : index
    %48 = vector.load %arg9[%c0_21, %c0_22] : memref<1x128xf32, #tpu.memory_space<vmem>>, vector<1x128xf32>
    %49 = vector.broadcast %48 : vector<1x128xf32> to vector<8x128xf32>
    %50 = arith.addf %47, %49 : vector<8x128xf32>
    %cst_23 = arith.constant 0.000000e+00 : f32
    %51 = vector.broadcast %cst_23 : f32 to vector<8x128xf32>
    %52 = arith.maximumf %50, %51 : vector<8x128xf32>
    %c0_24 = arith.constant 0 : index
    %c0_25 = arith.constant 0 : index
    %53 = vector.load %arg10[%c0_24, %c0_25] : memref<1x128xf32, #tpu.memory_space<vmem>>, vector<1x128xf32>
    %54 = vector.broadcast %53 : vector<1x128xf32> to vector<8x128xf32>
    %55 = arith.mulf %52, %54 : vector<8x128xf32>
    %cst_26 = arith.constant dense<0.000000e+00> : vector<8xf32>
    %56 = vector.multi_reduction <add>, %55, %cst_26 [1] : vector<8x128xf32> to vector<8xf32>
    %57 = vector.shape_cast %56 : vector<8xf32> to vector<8x1xf32>
    %c0_27 = arith.constant 0 : index
    %c0_28 = arith.constant 0 : index
    %58 = vector.load %arg11[%c0_27, %c0_28] : memref<1x1xf32, #tpu.memory_space<vmem>>, vector<1x1xf32>
    %59 = vector.broadcast %58 : vector<1x1xf32> to vector<8x1xf32>
    %60 = arith.addf %57, %59 : vector<8x1xf32>
    %cst_29 = arith.constant 0.000000e+00 : f32
    %61 = vector.broadcast %cst_29 : f32 to vector<8x1xf32>
    %62 = arith.subf %61, %60 : vector<8x1xf32>
    %63 = math.exp %62 : vector<8x1xf32>
    %cst_30 = arith.constant 1.000000e+00 : f32
    %64 = vector.broadcast %cst_30 : f32 to vector<8x1xf32>
    %65 = arith.addf %64, %63 : vector<8x1xf32>
    %66 = tpu.reciprocal %65 {approx = true} : vector<8x1xf32> -> vector<8x1xf32>
    %67 = vector.shape_cast %66 : vector<8x1xf32> to vector<8x1xf32>
    %68 = vector.broadcast %67 : vector<8x1xf32> to vector<8x128xf32>
    %c0_31 = arith.constant 0 : index
    %c0_32 = arith.constant 0 : index
    %69 = vector.load %arg12[%c0_31, %c0_32] : memref<8x128xf32, #tpu.memory_space<vmem>>, vector<8x128xf32>
    tpu.vector_store %arg12[%c0_31, %c0_32], %68 {strides = array<i32>} : memref<8x128xf32, #tpu.memory_space<vmem>>, vector<8x128xf32>,
    return
  }
  func.func @transform_0(%arg0: i32) -> (i32, i32) {
    %c0_i32 = arith.constant 0 : i32
    %c0_i32_0 = arith.constant 0 : i32
    return %arg0, %c0_i32 : i32, i32
  }
  func.func @transform_1(%arg0: i32) -> (i32, i32) {
    %c0_i32 = arith.constant 0 : i32
    %c0_i32_0 = arith.constant 0 : i32
    %c0_i32_1 = arith.constant 0 : i32
    return %c0_i32, %c0_i32_0 : i32, i32
  }
  func.func @transform_2(%arg0: i32) -> (i32, i32) {
    %c0_i32 = arith.constant 0 : i32
    %c0_i32_0 = arith.constant 0 : i32
    %c0_i32_1 = arith.constant 0 : i32
    return %c0_i32, %c0_i32_0 : i32, i32
  }
  func.func @transform_3(%arg0: i32) -> (i32, i32) {
    %c0_i32 = arith.constant 0 : i32
    %c0_i32_0 = arith.constant 0 : i32
    %c0_i32_1 = arith.constant 0 : i32
    return %c0_i32, %c0_i32_0 : i32, i32
  }
  func.func @transform_4(%arg0: i32) -> (i32, i32) {
    %c0_i32 = arith.constant 0 : i32
    %c0_i32_0 = arith.constant 0 : i32
    %c0_i32_1 = arith.constant 0 : i32
    return %c0_i32, %c0_i32_0 : i32, i32
  }
  func.func @transform_5(%arg0: i32) -> (i32, i32) {
    %c0_i32 = arith.constant 0 : i32
    %c0_i32_0 = arith.constant 0 : i32
    %c0_i32_1 = arith.constant 0 : i32
    return %c0_i32, %c0_i32_0 : i32, i32
  }
  func.func @transform_6(%arg0: i32) -> (i32, i32) {
    %c0_i32 = arith.constant 0 : i32
    %c0_i32_0 = arith.constant 0 : i32
    %c0_i32_1 = arith.constant 0 : i32
    return %c0_i32, %c0_i32_0 : i32, i32
  }
  func.func @transform_7(%arg0: i32) -> (i32, i32) {
    %c0_i32 = arith.constant 0 : i32
    %c0_i32_0 = arith.constant 0 : i32
    %c0_i32_1 = arith.constant 0 : i32
    return %c0_i32, %c0_i32_0 : i32, i32
  }
  func.func @transform_8(%arg0: i32) -> (i32, i32) {
    %c0_i32 = arith.constant 0 : i32
    %c0_i32_0 = arith.constant 0 : i32
    %c0_i32_1 = arith.constant 0 : i32
    return %c0_i32, %c0_i32_0 : i32, i32
  }
  func.func @transform_9(%arg0: i32) -> (i32, i32) {
    %c0_i32 = arith.constant 0 : i32
    %c0_i32_0 = arith.constant 0 : i32
    %c0_i32_1 = arith.constant 0 : i32
    return %c0_i32, %c0_i32_0 : i32, i32
  }
  func.func @transform_10(%arg0: i32) -> (i32, i32) {
    %c0_i32 = arith.constant 0 : i32
    %c0_i32_0 = arith.constant 0 : i32
    %c0_i32_1 = arith.constant 0 : i32
    return %c0_i32, %c0_i32_0 : i32, i32
  }
  func.func @transform_11(%arg0: i32) -> (i32, i32) {
    %c0_i32 = arith.constant 0 : i32
    %c0_i32_0 = arith.constant 0 : i32
    return %arg0, %c0_i32 : i32, i32
  }
}

</mosaic_0001>

<llo_original>
// kernel: tpu_custom_call.1
$region0: #{tpu_custom_call.1}
  #allocation0 [shape = 'u32[]', space=smem, size = 0x4, offset = 0x4, fixed_abs, tag = 'smem constant byte address 0x4 - core index']
  #allocation1 [shape = 'u32[144,128]{1,0:T(1,128)}', space=vmem, size = 0x12000, scoped, tag = 'internal scratch']
  #allocation2 [shape = 'f32[1,1]{1,0:T(1,128)S(1)}', space=vmem, size = 0x200, scoped, tag = 'scoped memory for tpu_custom_call.1']
  %s0 = inlined_call_operand.hbm [shape: bf16[8,768], index: 0, kind: input, shape index: {}]
  %s1 = inlined_call_operand.hbm [shape: bf16[768,1024], index: 1, kind: input, shape index: {}]
  %s2 = inlined_call_operand.hbm [shape: f32[1,1024], index: 2, kind: input, shape index: {}]
  %s3 = inlined_call_operand.hbm [shape: bf16[256,512], index: 3, kind: input, shape index: {}]
  %s4 = inlined_call_operand.hbm [shape: f32[1,512], index: 4, kind: input, shape index: {}]
  %s5 = inlined_call_operand.hbm [shape: bf16[128,512], index: 5, kind: input, shape index: {}]
  %s6 = inlined_call_operand.hbm [shape: f32[1,512], index: 6, kind: input, shape index: {}]
  %s7 = inlined_call_operand.hbm [shape: bf16[128,128], index: 7, kind: input, shape index: {}]
  %s8 = inlined_call_operand.hbm [shape: f32[1,128], index: 8, kind: input, shape index: {}]
  %s9 = inlined_call_operand.hbm [shape: f32[1,128], index: 9, kind: input, shape index: {}]
  %s10 = inlined_call_operand.<no memory space> [shape: f32[1,1], index: 10, kind: input, shape index: {}]
  %s11 = inlined_call_operand.hbm [shape: f32[8,128], index: 11, kind: output, shape index: {}]
  %s12 = sld [smem:[#allocation0]]
  $region94: #{tpu_custom_call.1} parent=0
    _
  %s14 = ssub.s32 1, %s12
  %s15 = scalar_select 0, %s14, %s12
  %v16 = vstv %s10
  %17 = vst [vmem:[#allocation2] sm:$0x1] %v16
  $region1: #{tpu_custom_call.1} parent=0
    #allocation3 [shape = 'u8[12288]{0}', space=vmem, size = 0x3000, scoped, tag = 'input window, operand 0, single buffered']
    #allocation4 [shape = 's32[1]{0}', space=sflag, size = 0x4, scoped, tag = 'scoped memory for tpu_custom_call.1']
    #allocation5 [shape = 's32[1]{0}', space=sflag, size = 0x4, scoped, tag = 'scoped memory for tpu_custom_call.1']
    #allocation6 [shape = 'u8[1572864]{0}', space=vmem, size = 0x180000, scoped, tag = 'input window, operand 1, single buffered']
    #allocation7 [shape = 's32[1]{0}', space=sflag, size = 0x4, scoped, tag = 'scoped memory for tpu_custom_call.1']
    #allocation8 [shape = 'u8[4096]{0}', space=vmem, size = 0x1000, scoped, tag = 'input window, operand 2, single buffered']
    #allocation9 [shape = 'u8[262144]{0}', space=vmem, size = 0x40000, scoped, tag = 'input window, operand 3, single buffered']
    #allocation10 [shape = 's32[1]{0}', space=sflag, size = 0x4, scoped, tag = 'scoped memory for tpu_custom_call.1']
    #allocation11 [shape = 'u8[2048]{0}', space=vmem, size = 0x800, scoped, tag = 'input window, operand 4, single buffered']
    #allocation12 [shape = 'u8[131072]{0}', space=vmem, size = 0x20000, scoped, tag = 'input window, operand 5, single buffered']
    #allocation13 [shape = 's32[1]{0}', space=sflag, size = 0x4, scoped, tag = 'scoped memory for tpu_custom_call.1']
    #allocation14 [shape = 'u8[2048]{0}', space=vmem, size = 0x800, scoped, tag = 'input window, operand 6, single buffered']
    #allocation15 [shape = 'u8[32768]{0}', space=vmem, size = 0x8000, scoped, tag = 'input window, operand 7, single buffered']
    #allocation16 [shape = 's32[1]{0}', space=sflag, size = 0x4, scoped, tag = 'scoped memory for tpu_custom_call.1']
    #allocation17 [shape = 'u8[512]{0}', space=vmem, size = 0x400, scoped, tag = 'input window, operand 8, single buffered']
    #allocation18 [shape = 'u8[512]{0}', space=vmem, size = 0x400, scoped, tag = 'input window, operand 9, single buffered']
    #allocation19 [shape = 's32[1]{0}', space=sflag, size = 0x4, scoped, tag = 'scoped memory for tpu_custom_call.1']
    #allocation20 [shape = 'u8[4096]{0}', space=vmem, size = 0x1000, scoped, tag = 'output window, operand 0, single buffered']
    %18 = vsyncpa [#allocation4], 0
    %19 = vsyncpa [#allocation7], 0
    %20 = vsyncpa [#allocation10], 0
    %21 = vsyncpa [#allocation13], 0
    %22 = vsyncpa [#allocation16], 0
    %23 = vsyncpa [#allocation19], 0
    %24 = vsyncpa [#allocation5], 0
    // Predicated region
    $region2: #{tpu_custom_call.1} parent=1 // pred_check
      _
    $region3: #{tpu_custom_call.1} parent=1 // pred_check_branch
      %26 = sbr.rel (0) target = $region5
    $region4: #{tpu_custom_call.1} parent=1 // pred_region
      %s28 = ssub.s32 384, 384
      %29 = vsyncadd [#allocation4], %s28
      %s31 = sshll.u32 [#allocation3], 4
      %s32 = int_to_ptr.vmem [resolvable:$true] %s31
      %34 = dma.hbm_to_vmem [thread:$0]  %s0, 384, %s32, [#allocation4]
    $region5: #{tpu_custom_call.1} parent=1 // pred_fallthru
      _
    // Predicated region
    $region6: #{tpu_custom_call.1} parent=1 // pred_check
      _
    $region7: #{tpu_custom_call.1} parent=1 // pred_check_branch
      %36 = sbr.rel (0) target = $region9
    $region8: #{tpu_custom_call.1} parent=1 // pred_region
      %s38 = ssub.s32 49152, 49152
      %39 = vsyncadd [#allocation7], %s38
      %s40 = sshll.u32 [#allocation6], 4
      %s41 = int_to_ptr.vmem [resolvable:$true] %s40
      %46 = dma.hbm_to_vmem [thread:$0]  %s1, 49152, %s41, [#allocation7], 512, 512, 32
    $region9: #{tpu_custom_call.1} parent=1 // pred_fallthru
      _
    // Predicated region
    $region10: #{tpu_custom_call.1} parent=1 // pred_check
      _
    $region11: #{tpu_custom_call.1} parent=1 // pred_check_branch
      %48 = sbr.rel (0) target = $region13
    $region12: #{tpu_custom_call.1} parent=1 // pred_region
      %s50 = ssub.s32 128, 128
      %51 = vsyncadd [#allocation7], %s50
      %s53 = sshll.u32 [#allocation8], 4
      %s54 = int_to_ptr.vmem [resolvable:$true] %s53
      %56 = dma.hbm_to_vmem [thread:$0]  %s2, 128, %s54, [#allocation7]
    $region13: #{tpu_custom_call.1} parent=1 // pred_fallthru
      _
    // Predicated region
    $region14: #{tpu_custom_call.1} parent=1 // pred_check
      _
    $region15: #{tpu_custom_call.1} parent=1 // pred_check_branch
      %58 = sbr.rel (0) target = $region17
    $region16: #{tpu_custom_call.1} parent=1 // pred_region
      %s60 = ssub.s32 8192, 8192
      %61 = vsyncadd [#allocation10], %s60
      %s62 = sshll.u32 [#allocation9], 4
      %s63 = int_to_ptr.vmem [resolvable:$true] %s62
      %68 = dma.hbm_to_vmem [thread:$0]  %s3, 8192, %s63, [#allocation10], 256, 256, 16
    $region17: #{tpu_custom_call.1} parent=1 // pred_fallthru
      _
    // Predicated region
    $region18: #{tpu_custom_call.1} parent=1 // pred_check
      _
    $region19: #{tpu_custom_call.1} parent=1 // pred_check_branch
      %70 = sbr.rel (0) target = $region21
    $region20: #{tpu_custom_call.1} parent=1 // pred_region
      %s72 = ssub.s32 64, 64
      %73 = vsyncadd [#allocation10], %s72
      %s75 = sshll.u32 [#allocation11], 4
      %s76 = int_to_ptr.vmem [resolvable:$true] %s75
      %78 = dma.hbm_to_vmem [thread:$0]  %s4, 64, %s76, [#allocation10]
    $region21: #{tpu_custom_call.1} parent=1 // pred_fallthru
      _
    // Predicated region
    $region22: #{tpu_custom_call.1} parent=1 // pred_check
      _
    $region23: #{tpu_custom_call.1} parent=1 // pred_check_branch
      %80 = sbr.rel (0) target = $region25
    $region24: #{tpu_custom_call.1} parent=1 // pred_region
      %s82 = ssub.s32 4096, 4096
      %83 = vsyncadd [#allocation13], %s82
      %s84 = sshll.u32 [#allocation12], 4
      %s85 = int_to_ptr.vmem [resolvable:$true] %s84
      %90 = dma.hbm_to_vmem [thread:$0]  %s5, 4096, %s85, [#allocation13], 256, 256, 16
    $region25: #{tpu_custom_call.1} parent=1 // pred_fallthru
      _
    // Predicated region
    $region26: #{tpu_custom_call.1} parent=1 // pred_check
      _
    $region27: #{tpu_custom_call.1} parent=1 // pred_check_branch
      %92 = sbr.rel (0) target = $region29
    $region28: #{tpu_custom_call.1} parent=1 // pred_region
      %s94 = ssub.s32 64, 64
      %95 = vsyncadd [#allocation13], %s94
      %s97 = sshll.u32 [#allocation14], 4
      %s98 = int_to_ptr.vmem [resolvable:$true] %s97
      %100 = dma.hbm_to_vmem [thread:$0]  %s6, 64, %s98, [#allocation13]
    $region29: #{tpu_custom_call.1} parent=1 // pred_fallthru
      _
    // Predicated region
    $region30: #{tpu_custom_call.1} parent=1 // pred_check
      _
    $region31: #{tpu_custom_call.1} parent=1 // pred_check_branch
      %102 = sbr.rel (0) target = $region33
    $region32: #{tpu_custom_call.1} parent=1 // pred_region
      %s104 = ssub.s32 1024, 1024
      %105 = vsyncadd [#allocation16], %s104
      %s106 = sshll.u32 [#allocation15], 4
      %s107 = int_to_ptr.vmem [resolvable:$true] %s106
      %112 = dma.hbm_to_vmem [thread:$0]  %s7, 1024, %s107, [#allocation16], 64, 64, 4
    $region33: #{tpu_custom_call.1} parent=1 // pred_fallthru
      _
    // Predicated region
    $region34: #{tpu_custom_call.1} parent=1 // pred_check
      _
    $region35: #{tpu_custom_call.1} parent=1 // pred_check_branch
      %114 = sbr.rel (0) target = $region37
    $region36: #{tpu_custom_call.1} parent=1 // pred_region
      %s116 = ssub.s32 16, 16
      %117 = vsyncadd [#allocation16], %s116
      %s119 = sshll.u32 [#allocation17], 4
      %s120 = int_to_ptr.vmem [resolvable:$true] %s119
      %122 = dma.hbm_to_vmem [thread:$0]  %s8, 16, %s120, [#allocation16]
    $region37: #{tpu_custom_call.1} parent=1 // pred_fallthru
      _
    // Predicated region
    $region38: #{tpu_custom_call.1} parent=1 // pred_check
      _
    $region39: #{tpu_custom_call.1} parent=1 // pred_check_branch
      %124 = sbr.rel (0) target = $region41
    $region40: #{tpu_custom_call.1} parent=1 // pred_region
      %s126 = ssub.s32 16, 16
      %127 = vsyncadd [#allocation19], %s126
      %s129 = sshll.u32 [#allocation18], 4
      %s130 = int_to_ptr.vmem [resolvable:$true] %s129
      %132 = dma.hbm_to_vmem [thread:$0]  %s9, 16, %s130, [#allocation19]
    $region41: #{tpu_custom_call.1} parent=1 // pred_fallthru
      _
    // Predicated region
    $region42: #{tpu_custom_call.1} parent=1 // pred_check
      _
    $region43: #{tpu_custom_call.1} parent=1 // pred_check_branch
      %134 = sbr.rel (0) target = $region45
    $region44: #{tpu_custom_call.1} parent=1 // pred_region
      _
    $region45: #{tpu_custom_call.1} parent=1 // pred_fallthru
      _
    // Predicated region
    $region46: #{tpu_custom_call.1} parent=1 // pred_check
      _
    $region47: #{tpu_custom_call.1} parent=1 // pred_check_branch
      %136 = sbr.rel (0) target = $region49
    $region48: #{tpu_custom_call.1} parent=1 // pred_region
      %137 = dma.done [#allocation4], 384
    $region49: #{tpu_custom_call.1} parent=1 // pred_fallthru
      _
    // Predicated region
    $region50: #{tpu_custom_call.1} parent=1 // pred_check
      _
    $region51: #{tpu_custom_call.1} parent=1 // pred_check_branch
      %139 = sbr.rel (0) target = $region53
    $region52: #{tpu_custom_call.1} parent=1 // pred_region
      %140 = dma.done [#allocation7], 49152
    $region53: #{tpu_custom_call.1} parent=1 // pred_fallthru
      _
    // Predicated region
    $region54: #{tpu_custom_call.1} parent=1 // pred_check
      _
    $region55: #{tpu_custom_call.1} parent=1 // pred_check_branch
      %142 = sbr.rel (0) target = $region57
    $region56: #{tpu_custom_call.1} parent=1 // pred_region
      %143 = dma.done [#allocation7], 128
    $region57: #{tpu_custom_call.1} parent=1 // pred_fallthru
      _
    // Predicated region
    $region58: #{tpu_custom_call.1} parent=1 // pred_check
      _
    $region59: #{tpu_custom_call.1} parent=1 // pred_check_branch
      %145 = sbr.rel (0) target = $region61
    $region60: #{tpu_custom_call.1} parent=1 // pred_region
      %146 = dma.done [#allocation10], 8192
    $region61: #{tpu_custom_call.1} parent=1 // pred_fallthru
      _
    // Predicated region
    $region62: #{tpu_custom_call.1} parent=1 // pred_check
      _
    $region63: #{tpu_custom_call.1} parent=1 // pred_check_branch
      %148 = sbr.rel (0) target = $region65
    $region64: #{tpu_custom_call.1} parent=1 // pred_region
      %149 = dma.done [#allocation10], 64
    $region65: #{tpu_custom_call.1} parent=1 // pred_fallthru
      _
    // Predicated region
    $region66: #{tpu_custom_call.1} parent=1 // pred_check
      _
    $region67: #{tpu_custom_call.1} parent=1 // pred_check_branch
      %151 = sbr.rel (0) target = $region69
    $region68: #{tpu_custom_call.1} parent=1 // pred_region
      %152 = dma.done [#allocation13], 4096
    $region69: #{tpu_custom_call.1} parent=1 // pred_fallthru
      _
    // Predicated region
    $region70: #{tpu_custom_call.1} parent=1 // pred_check
      _
    $region71: #{tpu_custom_call.1} parent=1 // pred_check_branch
      %154 = sbr.rel (0) target = $region73
    $region72: #{tpu_custom_call.1} parent=1 // pred_region
      %155 = dma.done [#allocation13], 64
    $region73: #{tpu_custom_call.1} parent=1 // pred_fallthru
      _
    // Predicated region
    $region74: #{tpu_custom_call.1} parent=1 // pred_check
      _
    $region75: #{tpu_custom_call.1} parent=1 // pred_check_branch
      %157 = sbr.rel (0) target = $region77
    $region76: #{tpu_custom_call.1} parent=1 // pred_region
      %158 = dma.done [#allocation16], 1024
    $region77: #{tpu_custom_call.1} parent=1 // pred_fallthru
      _
    // Predicated region
    $region78: #{tpu_custom_call.1} parent=1 // pred_check
      _
    $region79: #{tpu_custom_call.1} parent=1 // pred_check_branch
      %160 = sbr.rel (0) target = $region81
    $region80: #{tpu_custom_call.1} parent=1 // pred_region
      %161 = dma.done [#allocation16], 16
    $region81: #{tpu_custom_call.1} parent=1 // pred_fallthru
      _
    // Predicated region
    $region82: #{tpu_custom_call.1} parent=1 // pred_check
      _
    $region83: #{tpu_custom_call.1} parent=1 // pred_check_branch
      %163 = sbr.rel (0) target = $region85
    $region84: #{tpu_custom_call.1} parent=1 // pred_region
      %164 = dma.done [#allocation19], 16
    $region85: #{tpu_custom_call.1} parent=1 // pred_fallthru
      _
    %v166 = vld [vmem:[#allocation3] sm:$0xff]
    %v167 = vld [vmem:[#allocation3 + $0x8] sm:$0xff]
    %v168 = vld [vmem:[#allocation3 + $0x10] sm:$0xff]
    %v169 = vld [vmem:[#allocation6] sm:$0xff]
    %v170 = vld [vmem:[#allocation6 + $0x8] sm:$0xff]
    %v171 = vld [vmem:[#allocation6 + $0x10] sm:$0xff]
    %v172 = vld [vmem:[#allocation6 + $0x18] sm:$0xff]
    %v173 = vld [vmem:[#allocation6 + $0x20] sm:$0xff]
    %v174 = vld [vmem:[#allocation6 + $0x28] sm:$0xff]
    %v175 = vld [vmem:[#allocation6 + $0x30] sm:$0xff]
    %v176 = vld [vmem:[#allocation6 + $0x38] sm:$0xff]
    %v177 = vld [vmem:[#allocation6 + $0x40] sm:$0xff]
    %v178 = vld [vmem:[#allocation6 + $0x48] sm:$0xff]
    %v179 = vld [vmem:[#allocation6 + $0x50] sm:$0xff]
    %v180 = vld [vmem:[#allocation6 + $0x58] sm:$0xff]
    %v181 = vld [vmem:[#allocation6 + $0x60] sm:$0xff]
    %v182 = vld [vmem:[#allocation6 + $0x68] sm:$0xff]
    %v183 = vld [vmem:[#allocation6 + $0x70] sm:$0xff]
    %v184 = vld [vmem:[#allocation6 + $0x78] sm:$0xff]
    %v185 = vld [vmem:[#allocation6 + $0x80] sm:$0xff]
    %v186 = vld [vmem:[#allocation6 + $0x88] sm:$0xff]
    %v187 = vld [vmem:[#allocation6 + $0x90] sm:$0xff]
    %v188 = vld [vmem:[#allocation6 + $0x98] sm:$0xff]
    %v189 = vld [vmem:[#allocation6 + $0xa0] sm:$0xff]
    %v190 = vld [vmem:[#allocation6 + $0xa8] sm:$0xff]
    %v191 = vld [vmem:[#allocation6 + $0xb0] sm:$0xff]
    %v192 = vld [vmem:[#allocation6 + $0xb8] sm:$0xff]
    %v193 = vld [vmem:[#allocation6 + $0xc0] sm:$0xff]
    %v194 = vld [vmem:[#allocation6 + $0xc8] sm:$0xff]
    %v195 = vld [vmem:[#allocation6 + $0xd0] sm:$0xff]
    %v196 = vld [vmem:[#allocation6 + $0xd8] sm:$0xff]
    %v197 = vld [vmem:[#allocation6 + $0xe0] sm:$0xff]
    %v198 = vld [vmem:[#allocation6 + $0xe8] sm:$0xff]
    %v199 = vld [vmem:[#allocation6 + $0xf0] sm:$0xff]
    %v200 = vld [vmem:[#allocation6 + $0xf8] sm:$0xff]
    %v201 = vld [vmem:[#allocation6 + $0x100] sm:$0xff]
    %v202 = vld [vmem:[#allocation6 + $0x108] sm:$0xff]
    %v203 = vld [vmem:[#allocation6 + $0x110] sm:$0xff]
    %v204 = vld [vmem:[#allocation6 + $0x118] sm:$0xff]
    %v205 = vld [vmem:[#allocation6 + $0x120] sm:$0xff]
    %v206 = vld [vmem:[#allocation6 + $0x128] sm:$0xff]
    %v207 = vld [vmem:[#allocation6 + $0x130] sm:$0xff]
    %v208 = vld [vmem:[#allocation6 + $0x138] sm:$0xff]
    %v209 = vld [vmem:[#allocation6 + $0x140] sm:$0xff]
    %v210 = vld [vmem:[#allocation6 + $0x148] sm:$0xff]
    %v211 = vld [vmem:[#allocation6 + $0x150] sm:$0xff]
    %v212 = vld [vmem:[#allocation6 + $0x158] sm:$0xff]
    %v213 = vld [vmem:[#allocation6 + $0x160] sm:$0xff]
    %v214 = vld [vmem:[#allocation6 + $0x168] sm:$0xff]
    %v215 = vld [vmem:[#allocation6 + $0x170] sm:$0xff]
    %v216 = vld [vmem:[#allocation6 + $0x178] sm:$0xff]
    %v217 = vld [vmem:[#allocation6 + $0x180] sm:$0xff]
    %v218 = vld [vmem:[#allocation6 + $0x188] sm:$0xff]
    %v219 = vld [vmem:[#allocation6 + $0x190] sm:$0xff]
    %v220 = vld [vmem:[#allocation6 + $0x198] sm:$0xff]
    %v221 = vld [vmem:[#allocation6 + $0x1a0] sm:$0xff]
    %v222 = vld [vmem:[#allocation6 + $0x1a8] sm:$0xff]
    %v223 = vld [vmem:[#allocation6 + $0x1b0] sm:$0xff]
    %v224 = vld [vmem:[#allocation6 + $0x1b8] sm:$0xff]
    %v225 = vld [vmem:[#allocation6 + $0x1c0] sm:$0xff]
    %v226 = vld [vmem:[#allocation6 + $0x1c8] sm:$0xff]
    %v227 = vld [vmem:[#allocation6 + $0x1d0] sm:$0xff]
    %v228 = vld [vmem:[#allocation6 + $0x1d8] sm:$0xff]
    %v229 = vld [vmem:[#allocation6 + $0x1e0] sm:$0xff]
    %v230 = vld [vmem:[#allocation6 + $0x1e8] sm:$0xff]
    %v231 = vld [vmem:[#allocation6 + $0x1f0] sm:$0xff]
    %v232 = vld [vmem:[#allocation6 + $0x1f8] sm:$0xff]
    %v233 = vld [vmem:[#allocation6 + $0x200] sm:$0xff]
    %v234 = vld [vmem:[#allocation6 + $0x208] sm:$0xff]
    %v235 = vld [vmem:[#allocation6 + $0x210] sm:$0xff]
    %v236 = vld [vmem:[#allocation6 + $0x218] sm:$0xff]
    %v237 = vld [vmem:[#allocation6 + $0x220] sm:$0xff]
    %v238 = vld [vmem:[#allocation6 + $0x228] sm:$0xff]
    %v239 = vld [vmem:[#allocation6 + $0x230] sm:$0xff]
    %v240 = vld [vmem:[#allocation6 + $0x238] sm:$0xff]
    %v241 = vld [vmem:[#allocation6 + $0x240] sm:$0xff]
    %v242 = vld [vmem:[#allocation6 + $0x248] sm:$0xff]
    %v243 = vld [vmem:[#allocation6 + $0x250] sm:$0xff]
    %v244 = vld [vmem:[#allocation6 + $0x258] sm:$0xff]
    %v245 = vld [vmem:[#allocation6 + $0x260] sm:$0xff]
    %v246 = vld [vmem:[#allocation6 + $0x268] sm:$0xff]
    %v247 = vld [vmem:[#allocation6 + $0x270] sm:$0xff]
    %v248 = vld [vmem:[#allocation6 + $0x278] sm:$0xff]
    %v249 = vld [vmem:[#allocation6 + $0x280] sm:$0xff]
    %v250 = vld [vmem:[#allocation6 + $0x288] sm:$0xff]
    %v251 = vld [vmem:[#allocation6 + $0x290] sm:$0xff]
    %v252 = vld [vmem:[#allocation6 + $0x298] sm:$0xff]
    %v253 = vld [vmem:[#allocation6 + $0x2a0] sm:$0xff]
    %v254 = vld [vmem:[#allocation6 + $0x2a8] sm:$0xff]
    %v255 = vld [vmem:[#allocation6 + $0x2b0] sm:$0xff]
    %v256 = vld [vmem:[#allocation6 + $0x2b8] sm:$0xff]
    %v257 = vld [vmem:[#allocation6 + $0x2c0] sm:$0xff]
    %v258 = vld [vmem:[#allocation6 + $0x2c8] sm:$0xff]
    %v259 = vld [vmem:[#allocation6 + $0x2d0] sm:$0xff]
    %v260 = vld [vmem:[#allocation6 + $0x2d8] sm:$0xff]
    %v261 = vld [vmem:[#allocation6 + $0x2e0] sm:$0xff]
    %v262 = vld [vmem:[#allocation6 + $0x2e8] sm:$0xff]
    %v263 = vld [vmem:[#allocation6 + $0x2f0] sm:$0xff]
    %v264 = vld [vmem:[#allocation6 + $0x2f8] sm:$0xff]
    %v265 = vld [vmem:[#allocation6 + $0x300] sm:$0xff]
    %v266 = vld [vmem:[#allocation6 + $0x308] sm:$0xff]
    %v267 = vld [vmem:[#allocation6 + $0x310] sm:$0xff]
    %v268 = vld [vmem:[#allocation6 + $0x318] sm:$0xff]
    %v269 = vld [vmem:[#allocation6 + $0x320] sm:$0xff]
    %v270 = vld [vmem:[#allocation6 + $0x328] sm:$0xff]
    %v271 = vld [vmem:[#allocation6 + $0x330] sm:$0xff]
    %v272 = vld [vmem:[#allocation6 + $0x338] sm:$0xff]
    %v273 = vld [vmem:[#allocation6 + $0x340] sm:$0xff]
    %v274 = vld [vmem:[#allocation6 + $0x348] sm:$0xff]
    %v275 = vld [vmem:[#allocation6 + $0x350] sm:$0xff]
    %v276 = vld [vmem:[#allocation6 + $0x358] sm:$0xff]
    %v277 = vld [vmem:[#allocation6 + $0x360] sm:$0xff]
    %v278 = vld [vmem:[#allocation6 + $0x368] sm:$0xff]
    %v279 = vld [vmem:[#allocation6 + $0x370] sm:$0xff]
    %v280 = vld [vmem:[#allocation6 + $0x378] sm:$0xff]
    %v281 = vld [vmem:[#allocation6 + $0x380] sm:$0xff]
    %v282 = vld [vmem:[#allocation6 + $0x388] sm:$0xff]
    %v283 = vld [vmem:[#allocation6 + $0x390] sm:$0xff]
    %v284 = vld [vmem:[#allocation6 + $0x398] sm:$0xff]
    %v285 = vld [vmem:[#allocation6 + $0x3a0] sm:$0xff]
    %v286 = vld [vmem:[#allocation6 + $0x3a8] sm:$0xff]
    %v287 = vld [vmem:[#allocation6 + $0x3b0] sm:$0xff]
    %v288 = vld [vmem:[#allocation6 + $0x3b8] sm:$0xff]
    %v289 = vld [vmem:[#allocation6 + $0x3c0] sm:$0xff]
    %v290 = vld [vmem:[#allocation6 + $0x3c8] sm:$0xff]
    %v291 = vld [vmem:[#allocation6 + $0x3d0] sm:$0xff]
    %v292 = vld [vmem:[#allocation6 + $0x3d8] sm:$0xff]
    %v293 = vld [vmem:[#allocation6 + $0x3e0] sm:$0xff]
    %v294 = vld [vmem:[#allocation6 + $0x3e8] sm:$0xff]
    %v295 = vld [vmem:[#allocation6 + $0x3f0] sm:$0xff]
    %v296 = vld [vmem:[#allocation6 + $0x3f8] sm:$0xff]
    %v297 = vld [vmem:[#allocation6 + $0x400] sm:$0xff]
    %v298 = vld [vmem:[#allocation6 + $0x408] sm:$0xff]
    %v299 = vld [vmem:[#allocation6 + $0x410] sm:$0xff]
    %v300 = vld [vmem:[#allocation6 + $0x418] sm:$0xff]
    %v301 = vld [vmem:[#allocation6 + $0x420] sm:$0xff]
    %v302 = vld [vmem:[#allocation6 + $0x428] sm:$0xff]
    %v303 = vld [vmem:[#allocation6 + $0x430] sm:$0xff]
    %v304 = vld [vmem:[#allocation6 + $0x438] sm:$0xff]
    %v305 = vld [vmem:[#allocation6 + $0x440] sm:$0xff]
    %v306 = vld [vmem:[#allocation6 + $0x448] sm:$0xff]
    %v307 = vld [vmem:[#allocation6 + $0x450] sm:$0xff]
    %v308 = vld [vmem:[#allocation6 + $0x458] sm:$0xff]
    %v309 = vld [vmem:[#allocation6 + $0x460] sm:$0xff]
    %v310 = vld [vmem:[#allocation6 + $0x468] sm:$0xff]
    %v311 = vld [vmem:[#allocation6 + $0x470] sm:$0xff]
    %v312 = vld [vmem:[#allocation6 + $0x478] sm:$0xff]
    %v313 = vld [vmem:[#allocation6 + $0x480] sm:$0xff]
    %v314 = vld [vmem:[#allocation6 + $0x488] sm:$0xff]
    %v315 = vld [vmem:[#allocation6 + $0x490] sm:$0xff]
    %v316 = vld [vmem:[#allocation6 + $0x498] sm:$0xff]
    %v317 = vld [vmem:[#allocation6 + $0x4a0] sm:$0xff]
    %v318 = vld [vmem:[#allocation6 + $0x4a8] sm:$0xff]
    %v319 = vld [vmem:[#allocation6 + $0x4b0] sm:$0xff]
    %v320 = vld [vmem:[#allocation6 + $0x4b8] sm:$0xff]
    %v321 = vld [vmem:[#allocation6 + $0x4c0] sm:$0xff]
    %v322 = vld [vmem:[#allocation6 + $0x4c8] sm:$0xff]
    %v323 = vld [vmem:[#allocation6 + $0x4d0] sm:$0xff]
    %v324 = vld [vmem:[#allocation6 + $0x4d8] sm:$0xff]
    %v325 = vld [vmem:[#allocation6 + $0x4e0] sm:$0xff]
    %v326 = vld [vmem:[#allocation6 + $0x4e8] sm:$0xff]
    %v327 = vld [vmem:[#allocation6 + $0x4f0] sm:$0xff]
    %v328 = vld [vmem:[#allocation6 + $0x4f8] sm:$0xff]
    %v329 = vld [vmem:[#allocation6 + $0x500] sm:$0xff]
    %v330 = vld [vmem:[#allocation6 + $0x508] sm:$0xff]
    %v331 = vld [vmem:[#allocation6 + $0x510] sm:$0xff]
    %v332 = vld [vmem:[#allocation6 + $0x518] sm:$0xff]
    %v333 = vld [vmem:[#allocation6 + $0x520] sm:$0xff]
    %v334 = vld [vmem:[#allocation6 + $0x528] sm:$0xff]
    %v335 = vld [vmem:[#allocation6 + $0x530] sm:$0xff]
    %v336 = vld [vmem:[#allocation6 + $0x538] sm:$0xff]
    %v337 = vld [vmem:[#allocation6 + $0x540] sm:$0xff]
    %v338 = vld [vmem:[#allocation6 + $0x548] sm:$0xff]
    %v339 = vld [vmem:[#allocation6 + $0x550] sm:$0xff]
    %v340 = vld [vmem:[#allocation6 + $0x558] sm:$0xff]
    %v341 = vld [vmem:[#allocation6 + $0x560] sm:$0xff]
    %v342 = vld [vmem:[#allocation6 + $0x568] sm:$0xff]
    %v343 = vld [vmem:[#allocation6 + $0x570] sm:$0xff]
    %v344 = vld [vmem:[#allocation6 + $0x578] sm:$0xff]
    %v345 = vld [vmem:[#allocation6 + $0x580] sm:$0xff]
    %v346 = vld [vmem:[#allocation6 + $0x588] sm:$0xff]
    %v347 = vld [vmem:[#allocation6 + $0x590] sm:$0xff]
    %v348 = vld [vmem:[#allocation6 + $0x598] sm:$0xff]
    %v349 = vld [vmem:[#allocation6 + $0x5a0] sm:$0xff]
    %v350 = vld [vmem:[#allocation6 + $0x5a8] sm:$0xff]
    %v351 = vld [vmem:[#allocation6 + $0x5b0] sm:$0xff]
    %v352 = vld [vmem:[#allocation6 + $0x5b8] sm:$0xff]
    %v353 = vld [vmem:[#allocation6 + $0x5c0] sm:$0xff]
    %v354 = vld [vmem:[#allocation6 + $0x5c8] sm:$0xff]
    %v355 = vld [vmem:[#allocation6 + $0x5d0] sm:$0xff]
    %v356 = vld [vmem:[#allocation6 + $0x5d8] sm:$0xff]
    %v357 = vld [vmem:[#allocation6 + $0x5e0] sm:$0xff]
    %v358 = vld [vmem:[#allocation6 + $0x5e8] sm:$0xff]
    %v359 = vld [vmem:[#allocation6 + $0x5f0] sm:$0xff]
    %v360 = vld [vmem:[#allocation6 + $0x5f8] sm:$0xff]
    %v361 = vld [vmem:[#allocation6 + $0x600] sm:$0xff]
    %v362 = vld [vmem:[#allocation6 + $0x608] sm:$0xff]
    %v363 = vld [vmem:[#allocation6 + $0x610] sm:$0xff]
    %v364 = vld [vmem:[#allocation6 + $0x618] sm:$0xff]
    %v365 = vld [vmem:[#allocation6 + $0x620] sm:$0xff]
    %v366 = vld [vmem:[#allocation6 + $0x628] sm:$0xff]
    %v367 = vld [vmem:[#allocation6 + $0x630] sm:$0xff]
    %v368 = vld [vmem:[#allocation6 + $0x638] sm:$0xff]
    %v369 = vld [vmem:[#allocation6 + $0x640] sm:$0xff]
    %v370 = vld [vmem:[#allocation6 + $0x648] sm:$0xff]
    %v371 = vld [vmem:[#allocation6 + $0x650] sm:$0xff]
    %v372 = vld [vmem:[#allocation6 + $0x658] sm:$0xff]
    %v373 = vld [vmem:[#allocation6 + $0x660] sm:$0xff]
    %v374 = vld [vmem:[#allocation6 + $0x668] sm:$0xff]
    %v375 = vld [vmem:[#allocation6 + $0x670] sm:$0xff]
    %v376 = vld [vmem:[#allocation6 + $0x678] sm:$0xff]
    %v377 = vld [vmem:[#allocation6 + $0x680] sm:$0xff]
    %v378 = vld [vmem:[#allocation6 + $0x688] sm:$0xff]
    %v379 = vld [vmem:[#allocation6 + $0x690] sm:$0xff]
    %v380 = vld [vmem:[#allocation6 + $0x698] sm:$0xff]
    %v381 = vld [vmem:[#allocation6 + $0x6a0] sm:$0xff]
    %v382 = vld [vmem:[#allocation6 + $0x6a8] sm:$0xff]
    %v383 = vld [vmem:[#allocation6 + $0x6b0] sm:$0xff]
    %v384 = vld [vmem:[#allocation6 + $0x6b8] sm:$0xff]
    %v385 = vld [vmem:[#allocation6 + $0x6c0] sm:$0xff]
    %v386 = vld [vmem:[#allocation6 + $0x6c8] sm:$0xff]
    %v387 = vld [vmem:[#allocation6 + $0x6d0] sm:$0xff]
    %v388 = vld [vmem:[#allocation6 + $0x6d8] sm:$0xff]
    %v389 = vld [vmem:[#allocation6 + $0x6e0] sm:$0xff]
    %v390 = vld [vmem:[#allocation6 + $0x6e8] sm:$0xff]
    %v391 = vld [vmem:[#allocation6 + $0x6f0] sm:$0xff]
    %v392 = vld [vmem:[#allocation6 + $0x6f8] sm:$0xff]
    %v393 = vld [vmem:[#allocation6 + $0x700] sm:$0xff]
    %v394 = vld [vmem:[#allocation6 + $0x708] sm:$0xff]
    %v395 = vld [vmem:[#allocation6 + $0x710] sm:$0xff]
    %v396 = vld [vmem:[#allocation6 + $0x718] sm:$0xff]
    %v397 = vld [vmem:[#allocation6 + $0x720] sm:$0xff]
    %v398 = vld [vmem:[#allocation6 + $0x728] sm:$0xff]
    %v399 = vld [vmem:[#allocation6 + $0x730] sm:$0xff]
    %v400 = vld [vmem:[#allocation6 + $0x738] sm:$0xff]
    %v401 = vld [vmem:[#allocation6 + $0x740] sm:$0xff]
    %v402 = vld [vmem:[#allocation6 + $0x748] sm:$0xff]
    %v403 = vld [vmem:[#allocation6 + $0x750] sm:$0xff]
    %v404 = vld [vmem:[#allocation6 + $0x758] sm:$0xff]
    %v405 = vld [vmem:[#allocation6 + $0x760] sm:$0xff]
    %v406 = vld [vmem:[#allocation6 + $0x768] sm:$0xff]
    %v407 = vld [vmem:[#allocation6 + $0x770] sm:$0xff]
    %v408 = vld [vmem:[#allocation6 + $0x778] sm:$0xff]
    %v409 = vld [vmem:[#allocation6 + $0x780] sm:$0xff]
    %v410 = vld [vmem:[#allocation6 + $0x788] sm:$0xff]
    %v411 = vld [vmem:[#allocation6 + $0x790] sm:$0xff]
    %v412 = vld [vmem:[#allocation6 + $0x798] sm:$0xff]
    %v413 = vld [vmem:[#allocation6 + $0x7a0] sm:$0xff]
    %v414 = vld [vmem:[#allocation6 + $0x7a8] sm:$0xff]
    %v415 = vld [vmem:[#allocation6 + $0x7b0] sm:$0xff]
    %v416 = vld [vmem:[#allocation6 + $0x7b8] sm:$0xff]
    %v417 = vld [vmem:[#allocation6 + $0x7c0] sm:$0xff]
    %v418 = vld [vmem:[#allocation6 + $0x7c8] sm:$0xff]
    %v419 = vld [vmem:[#allocation6 + $0x7d0] sm:$0xff]
    %v420 = vld [vmem:[#allocation6 + $0x7d8] sm:$0xff]
    %v421 = vld [vmem:[#allocation6 + $0x7e0] sm:$0xff]
    %v422 = vld [vmem:[#allocation6 + $0x7e8] sm:$0xff]
    %v423 = vld [vmem:[#allocation6 + $0x7f0] sm:$0xff]
    %v424 = vld [vmem:[#allocation6 + $0x7f8] sm:$0xff]
    %v425 = vld [vmem:[#allocation6 + $0x800] sm:$0xff]
    %v426 = vld [vmem:[#allocation6 + $0x808] sm:$0xff]
    %v427 = vld [vmem:[#allocation6 + $0x810] sm:$0xff]
    %v428 = vld [vmem:[#allocation6 + $0x818] sm:$0xff]
    %v429 = vld [vmem:[#allocation6 + $0x820] sm:$0xff]
    %v430 = vld [vmem:[#allocation6 + $0x828] sm:$0xff]
    %v431 = vld [vmem:[#allocation6 + $0x830] sm:$0xff]
    %v432 = vld [vmem:[#allocation6 + $0x838] sm:$0xff]
    %v433 = vld [vmem:[#allocation6 + $0x840] sm:$0xff]
    %v434 = vld [vmem:[#allocation6 + $0x848] sm:$0xff]
    %v435 = vld [vmem:[#allocation6 + $0x850] sm:$0xff]
    %v436 = vld [vmem:[#allocation6 + $0x858] sm:$0xff]
    %v437 = vld [vmem:[#allocation6 + $0x860] sm:$0xff]
    %v438 = vld [vmem:[#allocation6 + $0x868] sm:$0xff]
    %v439 = vld [vmem:[#allocation6 + $0x870] sm:$0xff]
    %v440 = vld [vmem:[#allocation6 + $0x878] sm:$0xff]
    %v441 = vld [vmem:[#allocation6 + $0x880] sm:$0xff]
    %v442 = vld [vmem:[#allocation6 + $0x888] sm:$0xff]
    %v443 = vld [vmem:[#allocation6 + $0x890] sm:$0xff]
    %v444 = vld [vmem:[#allocation6 + $0x898] sm:$0xff]
    %v445 = vld [vmem:[#allocation6 + $0x8a0] sm:$0xff]
    %v446 = vld [vmem:[#allocation6 + $0x8a8] sm:$0xff]
    %v447 = vld [vmem:[#allocation6 + $0x8b0] sm:$0xff]
    %v448 = vld [vmem:[#allocation6 + $0x8b8] sm:$0xff]
    %v449 = vld [vmem:[#allocation6 + $0x8c0] sm:$0xff]
    %v450 = vld [vmem:[#allocation6 + $0x8c8] sm:$0xff]
    %v451 = vld [vmem:[#allocation6 + $0x8d0] sm:$0xff]
    %v452 = vld [vmem:[#allocation6 + $0x8d8] sm:$0xff]
    %v453 = vld [vmem:[#allocation6 + $0x8e0] sm:$0xff]
    %v454 = vld [vmem:[#allocation6 + $0x8e8] sm:$0xff]
    %v455 = vld [vmem:[#allocation6 + $0x8f0] sm:$0xff]
    %v456 = vld [vmem:[#allocation6 + $0x8f8] sm:$0xff]
    %v457 = vld [vmem:[#allocation6 + $0x900] sm:$0xff]
    %v458 = vld [vmem:[#allocation6 + $0x908] sm:$0xff]
    %v459 = vld [vmem:[#allocation6 + $0x910] sm:$0xff]
    %v460 = vld [vmem:[#allocation6 + $0x918] sm:$0xff]
    %v461 = vld [vmem:[#allocation6 + $0x920] sm:$0xff]
    %v462 = vld [vmem:[#allocation6 + $0x928] sm:$0xff]
    %v463 = vld [vmem:[#allocation6 + $0x930] sm:$0xff]
    %v464 = vld [vmem:[#allocation6 + $0x938] sm:$0xff]
    %v465 = vld [vmem:[#allocation6 + $0x940] sm:$0xff]
    %v466 = vld [vmem:[#allocation6 + $0x948] sm:$0xff]
    %v467 = vld [vmem:[#allocation6 + $0x950] sm:$0xff]
    %v468 = vld [vmem:[#allocation6 + $0x958] sm:$0xff]
    %v469 = vld [vmem:[#allocation6 + $0x960] sm:$0xff]
    %v470 = vld [vmem:[#allocation6 + $0x968] sm:$0xff]
    %v471 = vld [vmem:[#allocation6 + $0x970] sm:$0xff]
    %v472 = vld [vmem:[#allocation6 + $0x978] sm:$0xff]
    %v473 = vld [vmem:[#allocation6 + $0x980] sm:$0xff]
    %v474 = vld [vmem:[#allocation6 + $0x988] sm:$0xff]
    %v475 = vld [vmem:[#allocation6 + $0x990] sm:$0xff]
    %v476 = vld [vmem:[#allocation6 + $0x998] sm:$0xff]
    %v477 = vld [vmem:[#allocation6 + $0x9a0] sm:$0xff]
    %v478 = vld [vmem:[#allocation6 + $0x9a8] sm:$0xff]
    %v479 = vld [vmem:[#allocation6 + $0x9b0] sm:$0xff]
    %v480 = vld [vmem:[#allocation6 + $0x9b8] sm:$0xff]
    %v481 = vld [vmem:[#allocation6 + $0x9c0] sm:$0xff]
    %v482 = vld [vmem:[#allocation6 + $0x9c8] sm:$0xff]
    %v483 = vld [vmem:[#allocation6 + $0x9d0] sm:$0xff]
    %v484 = vld [vmem:[#allocation6 + $0x9d8] sm:$0xff]
    %v485 = vld [vmem:[#allocation6 + $0x9e0] sm:$0xff]
    %v486 = vld [vmem:[#allocation6 + $0x9e8] sm:$0xff]
    %v487 = vld [vmem:[#allocation6 + $0x9f0] sm:$0xff]
    %v488 = vld [vmem:[#allocation6 + $0x9f8] sm:$0xff]
    %v489 = vld [vmem:[#allocation6 + $0xa00] sm:$0xff]
    %v490 = vld [vmem:[#allocation6 + $0xa08] sm:$0xff]
    %v491 = vld [vmem:[#allocation6 + $0xa10] sm:$0xff]
    %v492 = vld [vmem:[#allocation6 + $0xa18] sm:$0xff]
    %v493 = vld [vmem:[#allocation6 + $0xa20] sm:$0xff]
    %v494 = vld [vmem:[#allocation6 + $0xa28] sm:$0xff]
    %v495 = vld [vmem:[#allocation6 + $0xa30] sm:$0xff]
    %v496 = vld [vmem:[#allocation6 + $0xa38] sm:$0xff]
    %v497 = vld [vmem:[#allocation6 + $0xa40] sm:$0xff]
    %v498 = vld [vmem:[#allocation6 + $0xa48] sm:$0xff]
    %v499 = vld [vmem:[#allocation6 + $0xa50] sm:$0xff]
    %v500 = vld [vmem:[#allocation6 + $0xa58] sm:$0xff]
    %v501 = vld [vmem:[#allocation6 + $0xa60] sm:$0xff]
    %v502 = vld [vmem:[#allocation6 + $0xa68] sm:$0xff]
    %v503 = vld [vmem:[#allocation6 + $0xa70] sm:$0xff]
    %v504 = vld [vmem:[#allocation6 + $0xa78] sm:$0xff]
    %v505 = vld [vmem:[#allocation6 + $0xa80] sm:$0xff]
    %v506 = vld [vmem:[#allocation6 + $0xa88] sm:$0xff]
    %v507 = vld [vmem:[#allocation6 + $0xa90] sm:$0xff]
    %v508 = vld [vmem:[#allocation6 + $0xa98] sm:$0xff]
    %v509 = vld [vmem:[#allocation6 + $0xaa0] sm:$0xff]
    %v510 = vld [vmem:[#allocation6 + $0xaa8] sm:$0xff]
    %v511 = vld [vmem:[#allocation6 + $0xab0] sm:$0xff]
    %v512 = vld [vmem:[#allocation6 + $0xab8] sm:$0xff]
    %v513 = vld [vmem:[#allocation6 + $0xac0] sm:$0xff]
    %v514 = vld [vmem:[#allocation6 + $0xac8] sm:$0xff]
    %v515 = vld [vmem:[#allocation6 + $0xad0] sm:$0xff]
    %v516 = vld [vmem:[#allocation6 + $0xad8] sm:$0xff]
    %v517 = vld [vmem:[#allocation6 + $0xae0] sm:$0xff]
    %v518 = vld [vmem:[#allocation6 + $0xae8] sm:$0xff]
    %v519 = vld [vmem:[#allocation6 + $0xaf0] sm:$0xff]
    %v520 = vld [vmem:[#allocation6 + $0xaf8] sm:$0xff]
    %v521 = vld [vmem:[#allocation6 + $0xb00] sm:$0xff]
    %v522 = vld [vmem:[#allocation6 + $0xb08] sm:$0xff]
    %v523 = vld [vmem:[#allocation6 + $0xb10] sm:$0xff]
    %v524 = vld [vmem:[#allocation6 + $0xb18] sm:$0xff]
    %v525 = vld [vmem:[#allocation6 + $0xb20] sm:$0xff]
    %v526 = vld [vmem:[#allocation6 + $0xb28] sm:$0xff]
    %v527 = vld [vmem:[#allocation6 + $0xb30] sm:$0xff]
    %v528 = vld [vmem:[#allocation6 + $0xb38] sm:$0xff]
    %v529 = vld [vmem:[#allocation6 + $0xb40] sm:$0xff]
    %v530 = vld [vmem:[#allocation6 + $0xb48] sm:$0xff]
    %v531 = vld [vmem:[#allocation6 + $0xb50] sm:$0xff]
    %v532 = vld [vmem:[#allocation6 + $0xb58] sm:$0xff]
    %v533 = vld [vmem:[#allocation6 + $0xb60] sm:$0xff]
    %v534 = vld [vmem:[#allocation6 + $0xb68] sm:$0xff]
    %v535 = vld [vmem:[#allocation6 + $0xb70] sm:$0xff]
    %v536 = vld [vmem:[#allocation6 + $0xb78] sm:$0xff]
    %v537 = vld [vmem:[#allocation6 + $0xb80] sm:$0xff]
    %v538 = vld [vmem:[#allocation6 + $0xb88] sm:$0xff]
    %v539 = vld [vmem:[#allocation6 + $0xb90] sm:$0xff]
    %v540 = vld [vmem:[#allocation6 + $0xb98] sm:$0xff]
    %v541 = vld [vmem:[#allocation6 + $0xba0] sm:$0xff]
    %v542 = vld [vmem:[#allocation6 + $0xba8] sm:$0xff]
    %v543 = vld [vmem:[#allocation6 + $0xbb0] sm:$0xff]
    %v544 = vld [vmem:[#allocation6 + $0xbb8] sm:$0xff]
    %v545 = vld [vmem:[#allocation6 + $0xbc0] sm:$0xff]
    %v546 = vld [vmem:[#allocation6 + $0xbc8] sm:$0xff]
    %v547 = vld [vmem:[#allocation6 + $0xbd0] sm:$0xff]
    %v548 = vld [vmem:[#allocation6 + $0xbd8] sm:$0xff]
    %v549 = vld [vmem:[#allocation6 + $0xbe0] sm:$0xff]
    %v550 = vld [vmem:[#allocation6 + $0xbe8] sm:$0xff]
    %v551 = vld [vmem:[#allocation6 + $0xbf0] sm:$0xff]
    %v552 = vld [vmem:[#allocation6 + $0xbf8] sm:$0xff]
    %v553 = vld [vmem:[#allocation8] sm:$0xff]
    %v555 = vlaneseq
    %v556 = vshrl.u32 %v555, 7
    %v557 = vsub.s32 0, %v556
    %v558 = vrot.slane %v553, %v557
    %v559 = vlaneseq
    %v560 = vshrl.u32 %v559, 7
    %v561 = vsub.s32 1, %v560
    %v562 = vrot.slane %v553, %v561
    %v563 = vlaneseq
    %v564 = vshrl.u32 %v563, 7
    %v565 = vsub.s32 2, %v564
    %v566 = vrot.slane %v553, %v565
    %v567 = vlaneseq
    %v568 = vshrl.u32 %v567, 7
    %v569 = vsub.s32 3, %v568
    %v570 = vrot.slane %v553, %v569
    %v571 = vlaneseq
    %v572 = vshrl.u32 %v571, 7
    %v573 = vsub.s32 4, %v572
    %v574 = vrot.slane %v553, %v573
    %v575 = vlaneseq
    %v576 = vshrl.u32 %v575, 7
    %v577 = vsub.s32 5, %v576
    %v578 = vrot.slane %v553, %v577
    %v579 = vlaneseq
    %v580 = vshrl.u32 %v579, 7
    %v581 = vsub.s32 6, %v580
    %v582 = vrot.slane %v553, %v581
    %v583 = vlaneseq
    %v584 = vshrl.u32 %v583, 7
    %v585 = vsub.s32 7, %v584
    %v586 = vrot.slane %v553, %v585
    %v598 = vunpack.c.l.b16 %v166
    %v599 = vunpack.c.h.b16 %v166
    %v600 = vunpack.c.l.b16 %v167
    %v601 = vunpack.c.h.b16 %v167
    %v602 = vunpack.c.l.b16 %v168
    %v603 = vunpack.c.h.b16 %v168
    %v604 = vpack.c.b16 %v598, %v598
    %v605 = vpack.c.b16 %v599, %v599
    %v606 = vpack.c.b16 %v600, %v600
    %v607 = vpack.c.b16 %v601, %v601
    %v608 = vpack.c.b16 %v602, %v602
    %v609 = vpack.c.b16 %v603, %v603
    %v1000 = vunpack.c.l.b16 %v169
    %v1001 = vunpack.c.h.b16 %v169
    %v1002 = vunpack.c.l.b16 %v170
    %v1003 = vunpack.c.h.b16 %v170
    %v1004 = vunpack.c.l.b16 %v171
    %v1005 = vunpack.c.h.b16 %v171
    %v1006 = vunpack.c.l.b16 %v172
    %v1007 = vunpack.c.h.b16 %v172
    %v1008 = vunpack.c.l.b16 %v173
    %v1009 = vunpack.c.h.b16 %v173
    %v1010 = vunpack.c.l.b16 %v174
    %v1011 = vunpack.c.h.b16 %v174
    %v1012 = vunpack.c.l.b16 %v175
    %v1013 = vunpack.c.h.b16 %v175
    %v1014 = vunpack.c.l.b16 %v176
    %v1015 = vunpack.c.h.b16 %v176
    %v1016 = vunpack.c.l.b16 %v177
    %v1017 = vunpack.c.h.b16 %v177
    %v1018 = vunpack.c.l.b16 %v178
    %v1019 = vunpack.c.h.b16 %v178
    %v1020 = vunpack.c.l.b16 %v179
    %v1021 = vunpack.c.h.b16 %v179
    %v1022 = vunpack.c.l.b16 %v180
    %v1023 = vunpack.c.h.b16 %v180
    %v1024 = vunpack.c.l.b16 %v181
    %v1025 = vunpack.c.h.b16 %v181
    %v1026 = vunpack.c.l.b16 %v182
    %v1027 = vunpack.c.h.b16 %v182
    %v1028 = vunpack.c.l.b16 %v183
    %v1029 = vunpack.c.h.b16 %v183
    %v1030 = vunpack.c.l.b16 %v184
    %v1031 = vunpack.c.h.b16 %v184
    %v1032 = vunpack.c.l.b16 %v185
    %v1033 = vunpack.c.h.b16 %v185
    %v1034 = vunpack.c.l.b16 %v186
    %v1035 = vunpack.c.h.b16 %v186
    %v1036 = vunpack.c.l.b16 %v187
    %v1037 = vunpack.c.h.b16 %v187
    %v1038 = vunpack.c.l.b16 %v188
    %v1039 = vunpack.c.h.b16 %v188
    %v1040 = vunpack.c.l.b16 %v189
    %v1041 = vunpack.c.h.b16 %v189
    %v1042 = vunpack.c.l.b16 %v190
    %v1043 = vunpack.c.h.b16 %v190
    %v1044 = vunpack.c.l.b16 %v191
    %v1045 = vunpack.c.h.b16 %v191
    %v1046 = vunpack.c.l.b16 %v192
    %v1047 = vunpack.c.h.b16 %v192
    %v1048 = vunpack.c.l.b16 %v193
    %v1049 = vunpack.c.h.b16 %v193
    %v1050 = vunpack.c.l.b16 %v194
    %v1051 = vunpack.c.h.b16 %v194
    %v1052 = vunpack.c.l.b16 %v195
    %v1053 = vunpack.c.h.b16 %v195
    %v1054 = vunpack.c.l.b16 %v196
    %v1055 = vunpack.c.h.b16 %v196
    %v1056 = vunpack.c.l.b16 %v197
    %v1057 = vunpack.c.h.b16 %v197
    %v1058 = vunpack.c.l.b16 %v198
    %v1059 = vunpack.c.h.b16 %v198
    %v1060 = vunpack.c.l.b16 %v199
    %v1061 = vunpack.c.h.b16 %v199
    %v1062 = vunpack.c.l.b16 %v200
    %v1063 = vunpack.c.h.b16 %v200
    %v1064 = vunpack.c.l.b16 %v201
    %v1065 = vunpack.c.h.b16 %v201
    %v1066 = vunpack.c.l.b16 %v202
    %v1067 = vunpack.c.h.b16 %v202
    %v1068 = vunpack.c.l.b16 %v203
    %v1069 = vunpack.c.h.b16 %v203
    %v1070 = vunpack.c.l.b16 %v204
    %v1071 = vunpack.c.h.b16 %v204
    %v1072 = vunpack.c.l.b16 %v205
    %v1073 = vunpack.c.h.b16 %v205
    %v1074 = vunpack.c.l.b16 %v206
    %v1075 = vunpack.c.h.b16 %v206
    %v1076 = vunpack.c.l.b16 %v207
    %v1077 = vunpack.c.h.b16 %v207
    %v1078 = vunpack.c.l.b16 %v208
    %v1079 = vunpack.c.h.b16 %v208
    %v1080 = vunpack.c.l.b16 %v209
    %v1081 = vunpack.c.h.b16 %v209
    %v1082 = vunpack.c.l.b16 %v210
    %v1083 = vunpack.c.h.b16 %v210
    %v1084 = vunpack.c.l.b16 %v211
    %v1085 = vunpack.c.h.b16 %v211
    %v1086 = vunpack.c.l.b16 %v212
    %v1087 = vunpack.c.h.b16 %v212
    %v1088 = vunpack.c.l.b16 %v213
    %v1089 = vunpack.c.h.b16 %v213
    %v1090 = vunpack.c.l.b16 %v214
    %v1091 = vunpack.c.h.b16 %v214
    %v1092 = vunpack.c.l.b16 %v215
    %v1093 = vunpack.c.h.b16 %v215
    %v1094 = vunpack.c.l.b16 %v216
    %v1095 = vunpack.c.h.b16 %v216
    %v1096 = vunpack.c.l.b16 %v217
    %v1097 = vunpack.c.h.b16 %v217
    %v1098 = vunpack.c.l.b16 %v218
    %v1099 = vunpack.c.h.b16 %v218
    %v1100 = vunpack.c.l.b16 %v219
    %v1101 = vunpack.c.h.b16 %v219
    %v1102 = vunpack.c.l.b16 %v220
    %v1103 = vunpack.c.h.b16 %v220
    %v1104 = vunpack.c.l.b16 %v221
    %v1105 = vunpack.c.h.b16 %v221
    %v1106 = vunpack.c.l.b16 %v222
    %v1107 = vunpack.c.h.b16 %v222
    %v1108 = vunpack.c.l.b16 %v223
    %v1109 = vunpack.c.h.b16 %v223
    %v1110 = vunpack.c.l.b16 %v224
    %v1111 = vunpack.c.h.b16 %v224
    %v1112 = vunpack.c.l.b16 %v225
    %v1113 = vunpack.c.h.b16 %v225
    %v1114 = vunpack.c.l.b16 %v226
    %v1115 = vunpack.c.h.b16 %v226
    %v1116 = vunpack.c.l.b16 %v227
    %v1117 = vunpack.c.h.b16 %v227
    %v1118 = vunpack.c.l.b16 %v228
    %v1119 = vunpack.c.h.b16 %v228
    %v1120 = vunpack.c.l.b16 %v229
    %v1121 = vunpack.c.h.b16 %v229
    %v1122 = vunpack.c.l.b16 %v230
    %v1123 = vunpack.c.h.b16 %v230
    %v1124 = vunpack.c.l.b16 %v231
    %v1125 = vunpack.c.h.b16 %v231
    %v1126 = vunpack.c.l.b16 %v232
    %v1127 = vunpack.c.h.b16 %v232
    %v1128 = vunpack.c.l.b16 %v233
    %v1129 = vunpack.c.h.b16 %v233
    %v1130 = vunpack.c.l.b16 %v234
    %v1131 = vunpack.c.h.b16 %v234
    %v1132 = vunpack.c.l.b16 %v235
    %v1133 = vunpack.c.h.b16 %v235
    %v1134 = vunpack.c.l.b16 %v236
    %v1135 = vunpack.c.h.b16 %v236
    %v1136 = vunpack.c.l.b16 %v237
    %v1137 = vunpack.c.h.b16 %v237
    %v1138 = vunpack.c.l.b16 %v238
    %v1139 = vunpack.c.h.b16 %v238
    %v1140 = vunpack.c.l.b16 %v239
    %v1141 = vunpack.c.h.b16 %v239
    %v1142 = vunpack.c.l.b16 %v240
    %v1143 = vunpack.c.h.b16 %v240
    %v1144 = vunpack.c.l.b16 %v241
    %v1145 = vunpack.c.h.b16 %v241
    %v1146 = vunpack.c.l.b16 %v242
    %v1147 = vunpack.c.h.b16 %v242
    %v1148 = vunpack.c.l.b16 %v243
    %v1149 = vunpack.c.h.b16 %v243
    %v1150 = vunpack.c.l.b16 %v244
    %v1151 = vunpack.c.h.b16 %v244
    %v1152 = vunpack.c.l.b16 %v245
    %v1153 = vunpack.c.h.b16 %v245
    %v1154 = vunpack.c.l.b16 %v246
    %v1155 = vunpack.c.h.b16 %v246
    %v1156 = vunpack.c.l.b16 %v247
    %v1157 = vunpack.c.h.b16 %v247
    %v1158 = vunpack.c.l.b16 %v248
    %v1159 = vunpack.c.h.b16 %v248
    %v1160 = vunpack.c.l.b16 %v249
    %v1161 = vunpack.c.h.b16 %v249
    %v1162 = vunpack.c.l.b16 %v250
    %v1163 = vunpack.c.h.b16 %v250
    %v1164 = vunpack.c.l.b16 %v251
    %v1165 = vunpack.c.h.b16 %v251
    %v1166 = vunpack.c.l.b16 %v252
    %v1167 = vunpack.c.h.b16 %v252
    %v1168 = vunpack.c.l.b16 %v253
    %v1169 = vunpack.c.h.b16 %v253
    %v1170 = vunpack.c.l.b16 %v254
    %v1171 = vunpack.c.h.b16 %v254
    %v1172 = vunpack.c.l.b16 %v255
    %v1173 = vunpack.c.h.b16 %v255
    %v1174 = vunpack.c.l.b16 %v256
    %v1175 = vunpack.c.h.b16 %v256
    %v1176 = vunpack.c.l.b16 %v257
    %v1177 = vunpack.c.h.b16 %v257
    %v1178 = vunpack.c.l.b16 %v258
    %v1179 = vunpack.c.h.b16 %v258
    %v1180 = vunpack.c.l.b16 %v259
    %v1181 = vunpack.c.h.b16 %v259
    %v1182 = vunpack.c.l.b16 %v260
    %v1183 = vunpack.c.h.b16 %v260
    %v1184 = vunpack.c.l.b16 %v261
    %v1185 = vunpack.c.h.b16 %v261
    %v1186 = vunpack.c.l.b16 %v262
    %v1187 = vunpack.c.h.b16 %v262
    %v1188 = vunpack.c.l.b16 %v263
    %v1189 = vunpack.c.h.b16 %v263
    %v1190 = vunpack.c.l.b16 %v264
    %v1191 = vunpack.c.h.b16 %v264
    %v1192 = vunpack.c.l.b16 %v265
    %v1193 = vunpack.c.h.b16 %v265
    %v1194 = vunpack.c.l.b16 %v266
    %v1195 = vunpack.c.h.b16 %v266
    %v1196 = vunpack.c.l.b16 %v267
    %v1197 = vunpack.c.h.b16 %v267
    %v1198 = vunpack.c.l.b16 %v268
    %v1199 = vunpack.c.h.b16 %v268
    %v1200 = vunpack.c.l.b16 %v269
    %v1201 = vunpack.c.h.b16 %v269
    %v1202 = vunpack.c.l.b16 %v270
    %v1203 = vunpack.c.h.b16 %v270
    %v1204 = vunpack.c.l.b16 %v271
    %v1205 = vunpack.c.h.b16 %v271
    %v1206 = vunpack.c.l.b16 %v272
    %v1207 = vunpack.c.h.b16 %v272
    %v1208 = vunpack.c.l.b16 %v273
    %v1209 = vunpack.c.h.b16 %v273
    %v1210 = vunpack.c.l.b16 %v274
    %v1211 = vunpack.c.h.b16 %v274
    %v1212 = vunpack.c.l.b16 %v275
    %v1213 = vunpack.c.h.b16 %v275
    %v1214 = vunpack.c.l.b16 %v276
    %v1215 = vunpack.c.h.b16 %v276
    %v1216 = vunpack.c.l.b16 %v277
    %v1217 = vunpack.c.h.b16 %v277
    %v1218 = vunpack.c.l.b16 %v278
    %v1219 = vunpack.c.h.b16 %v278
    %v1220 = vunpack.c.l.b16 %v279
    %v1221 = vunpack.c.h.b16 %v279
    %v1222 = vunpack.c.l.b16 %v280
    %v1223 = vunpack.c.h.b16 %v280
    %v1224 = vunpack.c.l.b16 %v281
    %v1225 = vunpack.c.h.b16 %v281
    %v1226 = vunpack.c.l.b16 %v282
    %v1227 = vunpack.c.h.b16 %v282
    %v1228 = vunpack.c.l.b16 %v283
    %v1229 = vunpack.c.h.b16 %v283
    %v1230 = vunpack.c.l.b16 %v284
    %v1231 = vunpack.c.h.b16 %v284
    %v1232 = vunpack.c.l.b16 %v285
    %v1233 = vunpack.c.h.b16 %v285
    %v1234 = vunpack.c.l.b16 %v286
    %v1235 = vunpack.c.h.b16 %v286
    %v1236 = vunpack.c.l.b16 %v287
    %v1237 = vunpack.c.h.b16 %v287
    %v1238 = vunpack.c.l.b16 %v288
    %v1239 = vunpack.c.h.b16 %v288
    %v1240 = vunpack.c.l.b16 %v289
    %v1241 = vunpack.c.h.b16 %v289
    %v1242 = vunpack.c.l.b16 %v290
    %v1243 = vunpack.c.h.b16 %v290
    %v1244 = vunpack.c.l.b16 %v291
    %v1245 = vunpack.c.h.b16 %v291
    %v1246 = vunpack.c.l.b16 %v292
    %v1247 = vunpack.c.h.b16 %v292
    %v1248 = vunpack.c.l.b16 %v293
    %v1249 = vunpack.c.h.b16 %v293
    %v1250 = vunpack.c.l.b16 %v294
    %v1251 = vunpack.c.h.b16 %v294
    %v1252 = vunpack.c.l.b16 %v295
    %v1253 = vunpack.c.h.b16 %v295
    %v1254 = vunpack.c.l.b16 %v296
    %v1255 = vunpack.c.h.b16 %v296
    %v1256 = vunpack.c.l.b16 %v297
    %v1257 = vunpack.c.h.b16 %v297
    %v1258 = vunpack.c.l.b16 %v298
    %v1259 = vunpack.c.h.b16 %v298
    %v1260 = vunpack.c.l.b16 %v299
    %v1261 = vunpack.c.h.b16 %v299
    %v1262 = vunpack.c.l.b16 %v300
    %v1263 = vunpack.c.h.b16 %v300
    %v1264 = vunpack.c.l.b16 %v301
    %v1265 = vunpack.c.h.b16 %v301
    %v1266 = vunpack.c.l.b16 %v302
    %v1267 = vunpack.c.h.b16 %v302
    %v1268 = vunpack.c.l.b16 %v303
    %v1269 = vunpack.c.h.b16 %v303
    %v1270 = vunpack.c.l.b16 %v304
    %v1271 = vunpack.c.h.b16 %v304
    %v1272 = vunpack.c.l.b16 %v305
    %v1273 = vunpack.c.h.b16 %v305
    %v1274 = vunpack.c.l.b16 %v306
    %v1275 = vunpack.c.h.b16 %v306
    %v1276 = vunpack.c.l.b16 %v307
    %v1277 = vunpack.c.h.b16 %v307
    %v1278 = vunpack.c.l.b16 %v308
    %v1279 = vunpack.c.h.b16 %v308
    %v1280 = vunpack.c.l.b16 %v309
    %v1281 = vunpack.c.h.b16 %v309
    %v1282 = vunpack.c.l.b16 %v310
    %v1283 = vunpack.c.h.b16 %v310
    %v1284 = vunpack.c.l.b16 %v311
    %v1285 = vunpack.c.h.b16 %v311
    %v1286 = vunpack.c.l.b16 %v312
    %v1287 = vunpack.c.h.b16 %v312
    %v1288 = vunpack.c.l.b16 %v313
    %v1289 = vunpack.c.h.b16 %v313
    %v1290 = vunpack.c.l.b16 %v314
    %v1291 = vunpack.c.h.b16 %v314
    %v1292 = vunpack.c.l.b16 %v315
    %v1293 = vunpack.c.h.b16 %v315
    %v1294 = vunpack.c.l.b16 %v316
    %v1295 = vunpack.c.h.b16 %v316
    %v1296 = vunpack.c.l.b16 %v317
    %v1297 = vunpack.c.h.b16 %v317
    %v1298 = vunpack.c.l.b16 %v318
    %v1299 = vunpack.c.h.b16 %v318
    %v1300 = vunpack.c.l.b16 %v319
    %v1301 = vunpack.c.h.b16 %v319
    %v1302 = vunpack.c.l.b16 %v320
    %v1303 = vunpack.c.h.b16 %v320
    %v1304 = vunpack.c.l.b16 %v321
    %v1305 = vunpack.c.h.b16 %v321
    %v1306 = vunpack.c.l.b16 %v322
    %v1307 = vunpack.c.h.b16 %v322
    %v1308 = vunpack.c.l.b16 %v323
    %v1309 = vunpack.c.h.b16 %v323
    %v1310 = vunpack.c.l.b16 %v324
    %v1311 = vunpack.c.h.b16 %v324
    %v1312 = vunpack.c.l.b16 %v325
    %v1313 = vunpack.c.h.b16 %v325
    %v1314 = vunpack.c.l.b16 %v326
    %v1315 = vunpack.c.h.b16 %v326
    %v1316 = vunpack.c.l.b16 %v327
    %v1317 = vunpack.c.h.b16 %v327
    %v1318 = vunpack.c.l.b16 %v328
    %v1319 = vunpack.c.h.b16 %v328
    %v1320 = vunpack.c.l.b16 %v329
    %v1321 = vunpack.c.h.b16 %v329
    %v1322 = vunpack.c.l.b16 %v330
    %v1323 = vunpack.c.h.b16 %v330
    %v1324 = vunpack.c.l.b16 %v331
    %v1325 = vunpack.c.h.b16 %v331
    %v1326 = vunpack.c.l.b16 %v332
    %v1327 = vunpack.c.h.b16 %v332
    %v1328 = vunpack.c.l.b16 %v333
    %v1329 = vunpack.c.h.b16 %v333
    %v1330 = vunpack.c.l.b16 %v334
    %v1331 = vunpack.c.h.b16 %v334
    %v1332 = vunpack.c.l.b16 %v335
    %v1333 = vunpack.c.h.b16 %v335
    %v1334 = vunpack.c.l.b16 %v336
    %v1335 = vunpack.c.h.b16 %v336
    %v1336 = vunpack.c.l.b16 %v337
    %v1337 = vunpack.c.h.b16 %v337
    %v1338 = vunpack.c.l.b16 %v338
    %v1339 = vunpack.c.h.b16 %v338
    %v1340 = vunpack.c.l.b16 %v339
    %v1341 = vunpack.c.h.b16 %v339
    %v1342 = vunpack.c.l.b16 %v340
    %v1343 = vunpack.c.h.b16 %v340
    %v1344 = vunpack.c.l.b16 %v341
    %v1345 = vunpack.c.h.b16 %v341
    %v1346 = vunpack.c.l.b16 %v342
    %v1347 = vunpack.c.h.b16 %v342
    %v1348 = vunpack.c.l.b16 %v343
    %v1349 = vunpack.c.h.b16 %v343
    %v1350 = vunpack.c.l.b16 %v344
    %v1351 = vunpack.c.h.b16 %v344
    %v1352 = vunpack.c.l.b16 %v345
    %v1353 = vunpack.c.h.b16 %v345
    %v1354 = vunpack.c.l.b16 %v346
    %v1355 = vunpack.c.h.b16 %v346
    %v1356 = vunpack.c.l.b16 %v347
    %v1357 = vunpack.c.h.b16 %v347
    %v1358 = vunpack.c.l.b16 %v348
    %v1359 = vunpack.c.h.b16 %v348
    %v1360 = vunpack.c.l.b16 %v349
    %v1361 = vunpack.c.h.b16 %v349
    %v1362 = vunpack.c.l.b16 %v350
    %v1363 = vunpack.c.h.b16 %v350
    %v1364 = vunpack.c.l.b16 %v351
    %v1365 = vunpack.c.h.b16 %v351
    %v1366 = vunpack.c.l.b16 %v352
    %v1367 = vunpack.c.h.b16 %v352
    %v1368 = vunpack.c.l.b16 %v353
    %v1369 = vunpack.c.h.b16 %v353
    %v1370 = vunpack.c.l.b16 %v354
    %v1371 = vunpack.c.h.b16 %v354
    %v1372 = vunpack.c.l.b16 %v355
    %v1373 = vunpack.c.h.b16 %v355
    %v1374 = vunpack.c.l.b16 %v356
    %v1375 = vunpack.c.h.b16 %v356
    %v1376 = vunpack.c.l.b16 %v357
    %v1377 = vunpack.c.h.b16 %v357
    %v1378 = vunpack.c.l.b16 %v358
    %v1379 = vunpack.c.h.b16 %v358
    %v1380 = vunpack.c.l.b16 %v359
    %v1381 = vunpack.c.h.b16 %v359
    %v1382 = vunpack.c.l.b16 %v360
    %v1383 = vunpack.c.h.b16 %v360
    %v1384 = vunpack.c.l.b16 %v361
    %v1385 = vunpack.c.h.b16 %v361
    %v1386 = vunpack.c.l.b16 %v362
    %v1387 = vunpack.c.h.b16 %v362
    %v1388 = vunpack.c.l.b16 %v363
    %v1389 = vunpack.c.h.b16 %v363
    %v1390 = vunpack.c.l.b16 %v364
    %v1391 = vunpack.c.h.b16 %v364
    %v1392 = vunpack.c.l.b16 %v365
    %v1393 = vunpack.c.h.b16 %v365
    %v1394 = vunpack.c.l.b16 %v366
    %v1395 = vunpack.c.h.b16 %v366
    %v1396 = vunpack.c.l.b16 %v367
    %v1397 = vunpack.c.h.b16 %v367
    %v1398 = vunpack.c.l.b16 %v368
    %v1399 = vunpack.c.h.b16 %v368
    %v1400 = vunpack.c.l.b16 %v369
    %v1401 = vunpack.c.h.b16 %v369
    %v1402 = vunpack.c.l.b16 %v370
    %v1403 = vunpack.c.h.b16 %v370
    %v1404 = vunpack.c.l.b16 %v371
    %v1405 = vunpack.c.h.b16 %v371
    %v1406 = vunpack.c.l.b16 %v372
    %v1407 = vunpack.c.h.b16 %v372
    %v1408 = vunpack.c.l.b16 %v373
    %v1409 = vunpack.c.h.b16 %v373
    %v1410 = vunpack.c.l.b16 %v374
    %v1411 = vunpack.c.h.b16 %v374
    %v1412 = vunpack.c.l.b16 %v375
    %v1413 = vunpack.c.h.b16 %v375
    %v1414 = vunpack.c.l.b16 %v376
    %v1415 = vunpack.c.h.b16 %v376
    %v1416 = vunpack.c.l.b16 %v377
    %v1417 = vunpack.c.h.b16 %v377
    %v1418 = vunpack.c.l.b16 %v378
    %v1419 = vunpack.c.h.b16 %v378
    %v1420 = vunpack.c.l.b16 %v379
    %v1421 = vunpack.c.h.b16 %v379
    %v1422 = vunpack.c.l.b16 %v380
    %v1423 = vunpack.c.h.b16 %v380
    %v1424 = vunpack.c.l.b16 %v381
    %v1425 = vunpack.c.h.b16 %v381
    %v1426 = vunpack.c.l.b16 %v382
    %v1427 = vunpack.c.h.b16 %v382
    %v1428 = vunpack.c.l.b16 %v383
    %v1429 = vunpack.c.h.b16 %v383
    %v1430 = vunpack.c.l.b16 %v384
    %v1431 = vunpack.c.h.b16 %v384
    %v1432 = vunpack.c.l.b16 %v385
    %v1433 = vunpack.c.h.b16 %v385
    %v1434 = vunpack.c.l.b16 %v386
    %v1435 = vunpack.c.h.b16 %v386
    %v1436 = vunpack.c.l.b16 %v387
    %v1437 = vunpack.c.h.b16 %v387
    %v1438 = vunpack.c.l.b16 %v388
    %v1439 = vunpack.c.h.b16 %v388
    %v1440 = vunpack.c.l.b16 %v389
    %v1441 = vunpack.c.h.b16 %v389
    %v1442 = vunpack.c.l.b16 %v390
    %v1443 = vunpack.c.h.b16 %v390
    %v1444 = vunpack.c.l.b16 %v391
    %v1445 = vunpack.c.h.b16 %v391
    %v1446 = vunpack.c.l.b16 %v392
    %v1447 = vunpack.c.h.b16 %v392
    %v1448 = vunpack.c.l.b16 %v393
    %v1449 = vunpack.c.h.b16 %v393
    %v1450 = vunpack.c.l.b16 %v394
    %v1451 = vunpack.c.h.b16 %v394
    %v1452 = vunpack.c.l.b16 %v395
    %v1453 = vunpack.c.h.b16 %v395
    %v1454 = vunpack.c.l.b16 %v396
    %v1455 = vunpack.c.h.b16 %v396
    %v1456 = vunpack.c.l.b16 %v397
    %v1457 = vunpack.c.h.b16 %v397
    %v1458 = vunpack.c.l.b16 %v398
    %v1459 = vunpack.c.h.b16 %v398
    %v1460 = vunpack.c.l.b16 %v399
    %v1461 = vunpack.c.h.b16 %v399
    %v1462 = vunpack.c.l.b16 %v400
    %v1463 = vunpack.c.h.b16 %v400
    %v1464 = vunpack.c.l.b16 %v401
    %v1465 = vunpack.c.h.b16 %v401
    %v1466 = vunpack.c.l.b16 %v402
    %v1467 = vunpack.c.h.b16 %v402
    %v1468 = vunpack.c.l.b16 %v403
    %v1469 = vunpack.c.h.b16 %v403
    %v1470 = vunpack.c.l.b16 %v404
    %v1471 = vunpack.c.h.b16 %v404
    %v1472 = vunpack.c.l.b16 %v405
    %v1473 = vunpack.c.h.b16 %v405
    %v1474 = vunpack.c.l.b16 %v406
    %v1475 = vunpack.c.h.b16 %v406
    %v1476 = vunpack.c.l.b16 %v407
    %v1477 = vunpack.c.h.b16 %v407
    %v1478 = vunpack.c.l.b16 %v408
    %v1479 = vunpack.c.h.b16 %v408
    %v1480 = vunpack.c.l.b16 %v409
    %v1481 = vunpack.c.h.b16 %v409
    %v1482 = vunpack.c.l.b16 %v410
    %v1483 = vunpack.c.h.b16 %v410
    %v1484 = vunpack.c.l.b16 %v411
    %v1485 = vunpack.c.h.b16 %v411
    %v1486 = vunpack.c.l.b16 %v412
    %v1487 = vunpack.c.h.b16 %v412
    %v1488 = vunpack.c.l.b16 %v413
    %v1489 = vunpack.c.h.b16 %v413
    %v1490 = vunpack.c.l.b16 %v414
    %v1491 = vunpack.c.h.b16 %v414
    %v1492 = vunpack.c.l.b16 %v415
    %v1493 = vunpack.c.h.b16 %v415
    %v1494 = vunpack.c.l.b16 %v416
    %v1495 = vunpack.c.h.b16 %v416
    %v1496 = vunpack.c.l.b16 %v417
    %v1497 = vunpack.c.h.b16 %v417
    %v1498 = vunpack.c.l.b16 %v418
    %v1499 = vunpack.c.h.b16 %v418
    %v1500 = vunpack.c.l.b16 %v419
    %v1501 = vunpack.c.h.b16 %v419
    %v1502 = vunpack.c.l.b16 %v420
    %v1503 = vunpack.c.h.b16 %v420
    %v1504 = vunpack.c.l.b16 %v421
    %v1505 = vunpack.c.h.b16 %v421
    %v1506 = vunpack.c.l.b16 %v422
    %v1507 = vunpack.c.h.b16 %v422
    %v1508 = vunpack.c.l.b16 %v423
    %v1509 = vunpack.c.h.b16 %v423
    %v1510 = vunpack.c.l.b16 %v424
    %v1511 = vunpack.c.h.b16 %v424
    %v1512 = vunpack.c.l.b16 %v425
    %v1513 = vunpack.c.h.b16 %v425
    %v1514 = vunpack.c.l.b16 %v426
    %v1515 = vunpack.c.h.b16 %v426
    %v1516 = vunpack.c.l.b16 %v427
    %v1517 = vunpack.c.h.b16 %v427
    %v1518 = vunpack.c.l.b16 %v428
    %v1519 = vunpack.c.h.b16 %v428
    %v1520 = vunpack.c.l.b16 %v429
    %v1521 = vunpack.c.h.b16 %v429
    %v1522 = vunpack.c.l.b16 %v430
    %v1523 = vunpack.c.h.b16 %v430
    %v1524 = vunpack.c.l.b16 %v431
    %v1525 = vunpack.c.h.b16 %v431
    %v1526 = vunpack.c.l.b16 %v432
    %v1527 = vunpack.c.h.b16 %v432
    %v1528 = vunpack.c.l.b16 %v433
    %v1529 = vunpack.c.h.b16 %v433
    %v1530 = vunpack.c.l.b16 %v434
    %v1531 = vunpack.c.h.b16 %v434
    %v1532 = vunpack.c.l.b16 %v435
    %v1533 = vunpack.c.h.b16 %v435
    %v1534 = vunpack.c.l.b16 %v436
    %v1535 = vunpack.c.h.b16 %v436
    %v1536 = vunpack.c.l.b16 %v437
    %v1537 = vunpack.c.h.b16 %v437
    %v1538 = vunpack.c.l.b16 %v438
    %v1539 = vunpack.c.h.b16 %v438
    %v1540 = vunpack.c.l.b16 %v439
    %v1541 = vunpack.c.h.b16 %v439
    %v1542 = vunpack.c.l.b16 %v440
    %v1543 = vunpack.c.h.b16 %v440
    %v1544 = vunpack.c.l.b16 %v441
    %v1545 = vunpack.c.h.b16 %v441
    %v1546 = vunpack.c.l.b16 %v442
    %v1547 = vunpack.c.h.b16 %v442
    %v1548 = vunpack.c.l.b16 %v443
    %v1549 = vunpack.c.h.b16 %v443
    %v1550 = vunpack.c.l.b16 %v444
    %v1551 = vunpack.c.h.b16 %v444
    %v1552 = vunpack.c.l.b16 %v445
    %v1553 = vunpack.c.h.b16 %v445
    %v1554 = vunpack.c.l.b16 %v446
    %v1555 = vunpack.c.h.b16 %v446
    %v1556 = vunpack.c.l.b16 %v447
    %v1557 = vunpack.c.h.b16 %v447
    %v1558 = vunpack.c.l.b16 %v448
    %v1559 = vunpack.c.h.b16 %v448
    %v1560 = vunpack.c.l.b16 %v449
    %v1561 = vunpack.c.h.b16 %v449
    %v1562 = vunpack.c.l.b16 %v450
    %v1563 = vunpack.c.h.b16 %v450
    %v1564 = vunpack.c.l.b16 %v451
    %v1565 = vunpack.c.h.b16 %v451
    %v1566 = vunpack.c.l.b16 %v452
    %v1567 = vunpack.c.h.b16 %v452
    %v1568 = vunpack.c.l.b16 %v453
    %v1569 = vunpack.c.h.b16 %v453
    %v1570 = vunpack.c.l.b16 %v454
    %v1571 = vunpack.c.h.b16 %v454
    %v1572 = vunpack.c.l.b16 %v455
    %v1573 = vunpack.c.h.b16 %v455
    %v1574 = vunpack.c.l.b16 %v456
    %v1575 = vunpack.c.h.b16 %v456
    %v1576 = vunpack.c.l.b16 %v457
    %v1577 = vunpack.c.h.b16 %v457
    %v1578 = vunpack.c.l.b16 %v458
    %v1579 = vunpack.c.h.b16 %v458
    %v1580 = vunpack.c.l.b16 %v459
    %v1581 = vunpack.c.h.b16 %v459
    %v1582 = vunpack.c.l.b16 %v460
    %v1583 = vunpack.c.h.b16 %v460
    %v1584 = vunpack.c.l.b16 %v461
    %v1585 = vunpack.c.h.b16 %v461
    %v1586 = vunpack.c.l.b16 %v462
    %v1587 = vunpack.c.h.b16 %v462
    %v1588 = vunpack.c.l.b16 %v463
    %v1589 = vunpack.c.h.b16 %v463
    %v1590 = vunpack.c.l.b16 %v464
    %v1591 = vunpack.c.h.b16 %v464
    %v1592 = vunpack.c.l.b16 %v465
    %v1593 = vunpack.c.h.b16 %v465
    %v1594 = vunpack.c.l.b16 %v466
    %v1595 = vunpack.c.h.b16 %v466
    %v1596 = vunpack.c.l.b16 %v467
    %v1597 = vunpack.c.h.b16 %v467
    %v1598 = vunpack.c.l.b16 %v468
    %v1599 = vunpack.c.h.b16 %v468
    %v1600 = vunpack.c.l.b16 %v469
    %v1601 = vunpack.c.h.b16 %v469
    %v1602 = vunpack.c.l.b16 %v470
    %v1603 = vunpack.c.h.b16 %v470
    %v1604 = vunpack.c.l.b16 %v471
    %v1605 = vunpack.c.h.b16 %v471
    %v1606 = vunpack.c.l.b16 %v472
    %v1607 = vunpack.c.h.b16 %v472
    %v1608 = vunpack.c.l.b16 %v473
    %v1609 = vunpack.c.h.b16 %v473
    %v1610 = vunpack.c.l.b16 %v474
    %v1611 = vunpack.c.h.b16 %v474
    %v1612 = vunpack.c.l.b16 %v475
    %v1613 = vunpack.c.h.b16 %v475
    %v1614 = vunpack.c.l.b16 %v476
    %v1615 = vunpack.c.h.b16 %v476
    %v1616 = vunpack.c.l.b16 %v477
    %v1617 = vunpack.c.h.b16 %v477
    %v1618 = vunpack.c.l.b16 %v478
    %v1619 = vunpack.c.h.b16 %v478
    %v1620 = vunpack.c.l.b16 %v479
    %v1621 = vunpack.c.h.b16 %v479
    %v1622 = vunpack.c.l.b16 %v480
    %v1623 = vunpack.c.h.b16 %v480
    %v1624 = vunpack.c.l.b16 %v481
    %v1625 = vunpack.c.h.b16 %v481
    %v1626 = vunpack.c.l.b16 %v482
    %v1627 = vunpack.c.h.b16 %v482
    %v1628 = vunpack.c.l.b16 %v483
    %v1629 = vunpack.c.h.b16 %v483
    %v1630 = vunpack.c.l.b16 %v484
    %v1631 = vunpack.c.h.b16 %v484
    %v1632 = vunpack.c.l.b16 %v485
    %v1633 = vunpack.c.h.b16 %v485
    %v1634 = vunpack.c.l.b16 %v486
    %v1635 = vunpack.c.h.b16 %v486
    %v1636 = vunpack.c.l.b16 %v487
    %v1637 = vunpack.c.h.b16 %v487
    %v1638 = vunpack.c.l.b16 %v488
    %v1639 = vunpack.c.h.b16 %v488
    %v1640 = vunpack.c.l.b16 %v489
    %v1641 = vunpack.c.h.b16 %v489
    %v1642 = vunpack.c.l.b16 %v490
    %v1643 = vunpack.c.h.b16 %v490
    %v1644 = vunpack.c.l.b16 %v491
    %v1645 = vunpack.c.h.b16 %v491
    %v1646 = vunpack.c.l.b16 %v492
    %v1647 = vunpack.c.h.b16 %v492
    %v1648 = vunpack.c.l.b16 %v493
    %v1649 = vunpack.c.h.b16 %v493
    %v1650 = vunpack.c.l.b16 %v494
    %v1651 = vunpack.c.h.b16 %v494
    %v1652 = vunpack.c.l.b16 %v495
    %v1653 = vunpack.c.h.b16 %v495
    %v1654 = vunpack.c.l.b16 %v496
    %v1655 = vunpack.c.h.b16 %v496
    %v1656 = vunpack.c.l.b16 %v497
    %v1657 = vunpack.c.h.b16 %v497
    %v1658 = vunpack.c.l.b16 %v498
    %v1659 = vunpack.c.h.b16 %v498
    %v1660 = vunpack.c.l.b16 %v499
    %v1661 = vunpack.c.h.b16 %v499
    %v1662 = vunpack.c.l.b16 %v500
    %v1663 = vunpack.c.h.b16 %v500
    %v1664 = vunpack.c.l.b16 %v501
    %v1665 = vunpack.c.h.b16 %v501
    %v1666 = vunpack.c.l.b16 %v502
    %v1667 = vunpack.c.h.b16 %v502
    %v1668 = vunpack.c.l.b16 %v503
    %v1669 = vunpack.c.h.b16 %v503
    %v1670 = vunpack.c.l.b16 %v504
    %v1671 = vunpack.c.h.b16 %v504
    %v1672 = vunpack.c.l.b16 %v505
    %v1673 = vunpack.c.h.b16 %v505
    %v1674 = vunpack.c.l.b16 %v506
    %v1675 = vunpack.c.h.b16 %v506
    %v1676 = vunpack.c.l.b16 %v507
    %v1677 = vunpack.c.h.b16 %v507
    %v1678 = vunpack.c.l.b16 %v508
    %v1679 = vunpack.c.h.b16 %v508
    %v1680 = vunpack.c.l.b16 %v509
    %v1681 = vunpack.c.h.b16 %v509
    %v1682 = vunpack.c.l.b16 %v510
    %v1683 = vunpack.c.h.b16 %v510
    %v1684 = vunpack.c.l.b16 %v511
    %v1685 = vunpack.c.h.b16 %v511
    %v1686 = vunpack.c.l.b16 %v512
    %v1687 = vunpack.c.h.b16 %v512
    %v1688 = vunpack.c.l.b16 %v513
    %v1689 = vunpack.c.h.b16 %v513
    %v1690 = vunpack.c.l.b16 %v514
    %v1691 = vunpack.c.h.b16 %v514
    %v1692 = vunpack.c.l.b16 %v515
    %v1693 = vunpack.c.h.b16 %v515
    %v1694 = vunpack.c.l.b16 %v516
    %v1695 = vunpack.c.h.b16 %v516
    %v1696 = vunpack.c.l.b16 %v517
    %v1697 = vunpack.c.h.b16 %v517
    %v1698 = vunpack.c.l.b16 %v518
    %v1699 = vunpack.c.h.b16 %v518
    %v1700 = vunpack.c.l.b16 %v519
    %v1701 = vunpack.c.h.b16 %v519
    %v1702 = vunpack.c.l.b16 %v520
    %v1703 = vunpack.c.h.b16 %v520
    %v1704 = vunpack.c.l.b16 %v521
    %v1705 = vunpack.c.h.b16 %v521
    %v1706 = vunpack.c.l.b16 %v522
    %v1707 = vunpack.c.h.b16 %v522
    %v1708 = vunpack.c.l.b16 %v523
    %v1709 = vunpack.c.h.b16 %v523
    %v1710 = vunpack.c.l.b16 %v524
    %v1711 = vunpack.c.h.b16 %v524
    %v1712 = vunpack.c.l.b16 %v525
    %v1713 = vunpack.c.h.b16 %v525
    %v1714 = vunpack.c.l.b16 %v526
    %v1715 = vunpack.c.h.b16 %v526
    %v1716 = vunpack.c.l.b16 %v527
    %v1717 = vunpack.c.h.b16 %v527
    %v1718 = vunpack.c.l.b16 %v528
    %v1719 = vunpack.c.h.b16 %v528
    %v1720 = vunpack.c.l.b16 %v529
    %v1721 = vunpack.c.h.b16 %v529
    %v1722 = vunpack.c.l.b16 %v530
    %v1723 = vunpack.c.h.b16 %v530
    %v1724 = vunpack.c.l.b16 %v531
    %v1725 = vunpack.c.h.b16 %v531
    %v1726 = vunpack.c.l.b16 %v532
    %v1727 = vunpack.c.h.b16 %v532
    %v1728 = vunpack.c.l.b16 %v533
    %v1729 = vunpack.c.h.b16 %v533
    %v1730 = vunpack.c.l.b16 %v534
    %v1731 = vunpack.c.h.b16 %v534
    %v1732 = vunpack.c.l.b16 %v535
    %v1733 = vunpack.c.h.b16 %v535
    %v1734 = vunpack.c.l.b16 %v536
    %v1735 = vunpack.c.h.b16 %v536
    %v1736 = vunpack.c.l.b16 %v537
    %v1737 = vunpack.c.h.b16 %v537
    %v1738 = vunpack.c.l.b16 %v538
    %v1739 = vunpack.c.h.b16 %v538
    %v1740 = vunpack.c.l.b16 %v539
    %v1741 = vunpack.c.h.b16 %v539
    %v1742 = vunpack.c.l.b16 %v540
    %v1743 = vunpack.c.h.b16 %v540
    %v1744 = vunpack.c.l.b16 %v541
    %v1745 = vunpack.c.h.b16 %v541
    %v1746 = vunpack.c.l.b16 %v542
    %v1747 = vunpack.c.h.b16 %v542
    %v1748 = vunpack.c.l.b16 %v543
    %v1749 = vunpack.c.h.b16 %v543
    %v1750 = vunpack.c.l.b16 %v544
    %v1751 = vunpack.c.h.b16 %v544
    %v1752 = vunpack.c.l.b16 %v545
    %v1753 = vunpack.c.h.b16 %v545
    %v1754 = vunpack.c.l.b16 %v546
    %v1755 = vunpack.c.h.b16 %v546
    %v1756 = vunpack.c.l.b16 %v547
    %v1757 = vunpack.c.h.b16 %v547
    %v1758 = vunpack.c.l.b16 %v548
    %v1759 = vunpack.c.h.b16 %v548
    %v1760 = vunpack.c.l.b16 %v549
    %v1761 = vunpack.c.h.b16 %v549
    %v1762 = vunpack.c.l.b16 %v550
    %v1763 = vunpack.c.h.b16 %v550
    %v1764 = vunpack.c.l.b16 %v551
    %v1765 = vunpack.c.h.b16 %v551
    %v1766 = vunpack.c.l.b16 %v552
    %v1767 = vunpack.c.h.b16 %v552
    %v1768 = vpack.c.b16 %v1008, %v1000
    %v1769 = vpack.c.b16 %v1009, %v1001
    %v1770 = vpack.c.b16 %v1010, %v1002
    %v1771 = vpack.c.b16 %v1011, %v1003
    %v1772 = vpack.c.b16 %v1012, %v1004
    %v1773 = vpack.c.b16 %v1013, %v1005
    %v1774 = vpack.c.b16 %v1014, %v1006
    %v1775 = vpack.c.b16 %v1015, %v1007
    %v1776 = vpack.c.b16 %v1024, %v1016
    %v1777 = vpack.c.b16 %v1025, %v1017
    %v1778 = vpack.c.b16 %v1026, %v1018
    %v1779 = vpack.c.b16 %v1027, %v1019
    %v1780 = vpack.c.b16 %v1028, %v1020
    %v1781 = vpack.c.b16 %v1029, %v1021
    %v1782 = vpack.c.b16 %v1030, %v1022
    %v1783 = vpack.c.b16 %v1031, %v1023
    %v1784 = vpack.c.b16 %v1040, %v1032
    %v1785 = vpack.c.b16 %v1041, %v1033
    %v1786 = vpack.c.b16 %v1042, %v1034
    %v1787 = vpack.c.b16 %v1043, %v1035
    %v1788 = vpack.c.b16 %v1044, %v1036
    %v1789 = vpack.c.b16 %v1045, %v1037
    %v1790 = vpack.c.b16 %v1046, %v1038
    %v1791 = vpack.c.b16 %v1047, %v1039
    %v1792 = vpack.c.b16 %v1056, %v1048
    %v1793 = vpack.c.b16 %v1057, %v1049
    %v1794 = vpack.c.b16 %v1058, %v1050
    %v1795 = vpack.c.b16 %v1059, %v1051
    %v1796 = vpack.c.b16 %v1060, %v1052
    %v1797 = vpack.c.b16 %v1061, %v1053
    %v1798 = vpack.c.b16 %v1062, %v1054
    %v1799 = vpack.c.b16 %v1063, %v1055
    %v1800 = vpack.c.b16 %v1072, %v1064
    %v1801 = vpack.c.b16 %v1073, %v1065
    %v1802 = vpack.c.b16 %v1074, %v1066
    %v1803 = vpack.c.b16 %v1075, %v1067
    %v1804 = vpack.c.b16 %v1076, %v1068
    %v1805 = vpack.c.b16 %v1077, %v1069
    %v1806 = vpack.c.b16 %v1078, %v1070
    %v1807 = vpack.c.b16 %v1079, %v1071
    %v1808 = vpack.c.b16 %v1088, %v1080
    %v1809 = vpack.c.b16 %v1089, %v1081
    %v1810 = vpack.c.b16 %v1090, %v1082
    %v1811 = vpack.c.b16 %v1091, %v1083
    %v1812 = vpack.c.b16 %v1092, %v1084
    %v1813 = vpack.c.b16 %v1093, %v1085
    %v1814 = vpack.c.b16 %v1094, %v1086
    %v1815 = vpack.c.b16 %v1095, %v1087
    %v1816 = vpack.c.b16 %v1104, %v1096
    %v1817 = vpack.c.b16 %v1105, %v1097
    %v1818 = vpack.c.b16 %v1106, %v1098
    %v1819 = vpack.c.b16 %v1107, %v1099
    %v1820 = vpack.c.b16 %v1108, %v1100
    %v1821 = vpack.c.b16 %v1109, %v1101
    %v1822 = vpack.c.b16 %v1110, %v1102
    %v1823 = vpack.c.b16 %v1111, %v1103
    %v1824 = vpack.c.b16 %v1120, %v1112
    %v1825 = vpack.c.b16 %v1121, %v1113
    %v1826 = vpack.c.b16 %v1122, %v1114
    %v1827 = vpack.c.b16 %v1123, %v1115
    %v1828 = vpack.c.b16 %v1124, %v1116
    %v1829 = vpack.c.b16 %v1125, %v1117
    %v1830 = vpack.c.b16 %v1126, %v1118
    %v1831 = vpack.c.b16 %v1127, %v1119
    %v1832 = vpack.c.b16 %v1136, %v1128
    %v1833 = vpack.c.b16 %v1137, %v1129
    %v1834 = vpack.c.b16 %v1138, %v1130
    %v1835 = vpack.c.b16 %v1139, %v1131
    %v1836 = vpack.c.b16 %v1140, %v1132
    %v1837 = vpack.c.b16 %v1141, %v1133
    %v1838 = vpack.c.b16 %v1142, %v1134
    %v1839 = vpack.c.b16 %v1143, %v1135
    %v1840 = vpack.c.b16 %v1152, %v1144
    %v1841 = vpack.c.b16 %v1153, %v1145
    %v1842 = vpack.c.b16 %v1154, %v1146
    %v1843 = vpack.c.b16 %v1155, %v1147
    %v1844 = vpack.c.b16 %v1156, %v1148
    %v1845 = vpack.c.b16 %v1157, %v1149
    %v1846 = vpack.c.b16 %v1158, %v1150
    %v1847 = vpack.c.b16 %v1159, %v1151
    %v1848 = vpack.c.b16 %v1168, %v1160
    %v1849 = vpack.c.b16 %v1169, %v1161
    %v1850 = vpack.c.b16 %v1170, %v1162
    %v1851 = vpack.c.b16 %v1171, %v1163
    %v1852 = vpack.c.b16 %v1172, %v1164
    %v1853 = vpack.c.b16 %v1173, %v1165
    %v1854 = vpack.c.b16 %v1174, %v1166
    %v1855 = vpack.c.b16 %v1175, %v1167
    %v1856 = vpack.c.b16 %v1184, %v1176
    %v1857 = vpack.c.b16 %v1185, %v1177
    %v1858 = vpack.c.b16 %v1186, %v1178
    %v1859 = vpack.c.b16 %v1187, %v1179
    %v1860 = vpack.c.b16 %v1188, %v1180
    %v1861 = vpack.c.b16 %v1189, %v1181
    %v1862 = vpack.c.b16 %v1190, %v1182
    %v1863 = vpack.c.b16 %v1191, %v1183
    %v1864 = vpack.c.b16 %v1200, %v1192
    %v1865 = vpack.c.b16 %v1201, %v1193
    %v1866 = vpack.c.b16 %v1202, %v1194
    %v1867 = vpack.c.b16 %v1203, %v1195
    %v1868 = vpack.c.b16 %v1204, %v1196
    %v1869 = vpack.c.b16 %v1205, %v1197
    %v1870 = vpack.c.b16 %v1206, %v1198
    %v1871 = vpack.c.b16 %v1207, %v1199
    %v1872 = vpack.c.b16 %v1216, %v1208
    %v1873 = vpack.c.b16 %v1217, %v1209
    %v1874 = vpack.c.b16 %v1218, %v1210
    %v1875 = vpack.c.b16 %v1219, %v1211
    %v1876 = vpack.c.b16 %v1220, %v1212
    %v1877 = vpack.c.b16 %v1221, %v1213
    %v1878 = vpack.c.b16 %v1222, %v1214
    %v1879 = vpack.c.b16 %v1223, %v1215
    %v1880 = vpack.c.b16 %v1232, %v1224
    %v1881 = vpack.c.b16 %v1233, %v1225
    %v1882 = vpack.c.b16 %v1234, %v1226
    %v1883 = vpack.c.b16 %v1235, %v1227
    %v1884 = vpack.c.b16 %v1236, %v1228
    %v1885 = vpack.c.b16 %v1237, %v1229
    %v1886 = vpack.c.b16 %v1238, %v1230
    %v1887 = vpack.c.b16 %v1239, %v1231
    %v1888 = vpack.c.b16 %v1248, %v1240
    %v1889 = vpack.c.b16 %v1249, %v1241
    %v1890 = vpack.c.b16 %v1250, %v1242
    %v1891 = vpack.c.b16 %v1251, %v1243
    %v1892 = vpack.c.b16 %v1252, %v1244
    %v1893 = vpack.c.b16 %v1253, %v1245
    %v1894 = vpack.c.b16 %v1254, %v1246
    %v1895 = vpack.c.b16 %v1255, %v1247
    %v1896 = vpack.c.b16 %v1264, %v1256
    %v1897 = vpack.c.b16 %v1265, %v1257
    %v1898 = vpack.c.b16 %v1266, %v1258
    %v1899 = vpack.c.b16 %v1267, %v1259
    %v1900 = vpack.c.b16 %v1268, %v1260
    %v1901 = vpack.c.b16 %v1269, %v1261
    %v1902 = vpack.c.b16 %v1270, %v1262
    %v1903 = vpack.c.b16 %v1271, %v1263
    %v1904 = vpack.c.b16 %v1280, %v1272
    %v1905 = vpack.c.b16 %v1281, %v1273
    %v1906 = vpack.c.b16 %v1282, %v1274
    %v1907 = vpack.c.b16 %v1283, %v1275
    %v1908 = vpack.c.b16 %v1284, %v1276
    %v1909 = vpack.c.b16 %v1285, %v1277
    %v1910 = vpack.c.b16 %v1286, %v1278
    %v1911 = vpack.c.b16 %v1287, %v1279
    %v1912 = vpack.c.b16 %v1296, %v1288
    %v1913 = vpack.c.b16 %v1297, %v1289
    %v1914 = vpack.c.b16 %v1298, %v1290
    %v1915 = vpack.c.b16 %v1299, %v1291
    %v1916 = vpack.c.b16 %v1300, %v1292
    %v1917 = vpack.c.b16 %v1301, %v1293
    %v1918 = vpack.c.b16 %v1302, %v1294
    %v1919 = vpack.c.b16 %v1303, %v1295
    %v1920 = vpack.c.b16 %v1312, %v1304
    %v1921 = vpack.c.b16 %v1313, %v1305
    %v1922 = vpack.c.b16 %v1314, %v1306
    %v1923 = vpack.c.b16 %v1315, %v1307
    %v1924 = vpack.c.b16 %v1316, %v1308
    %v1925 = vpack.c.b16 %v1317, %v1309
    %v1926 = vpack.c.b16 %v1318, %v1310
    %v1927 = vpack.c.b16 %v1319, %v1311
    %v1928 = vpack.c.b16 %v1328, %v1320
    %v1929 = vpack.c.b16 %v1329, %v1321
    %v1930 = vpack.c.b16 %v1330, %v1322
    %v1931 = vpack.c.b16 %v1331, %v1323
    %v1932 = vpack.c.b16 %v1332, %v1324
    %v1933 = vpack.c.b16 %v1333, %v1325
    %v1934 = vpack.c.b16 %v1334, %v1326
    %v1935 = vpack.c.b16 %v1335, %v1327
    %v1936 = vpack.c.b16 %v1344, %v1336
    %v1937 = vpack.c.b16 %v1345, %v1337
    %v1938 = vpack.c.b16 %v1346, %v1338
    %v1939 = vpack.c.b16 %v1347, %v1339
    %v1940 = vpack.c.b16 %v1348, %v1340
    %v1941 = vpack.c.b16 %v1349, %v1341
    %v1942 = vpack.c.b16 %v1350, %v1342
    %v1943 = vpack.c.b16 %v1351, %v1343
    %v1944 = vpack.c.b16 %v1360, %v1352
    %v1945 = vpack.c.b16 %v1361, %v1353
    %v1946 = vpack.c.b16 %v1362, %v1354
    %v1947 = vpack.c.b16 %v1363, %v1355
    %v1948 = vpack.c.b16 %v1364, %v1356
    %v1949 = vpack.c.b16 %v1365, %v1357
    %v1950 = vpack.c.b16 %v1366, %v1358
    %v1951 = vpack.c.b16 %v1367, %v1359
    %v1952 = vpack.c.b16 %v1376, %v1368
    %v1953 = vpack.c.b16 %v1377, %v1369
    %v1954 = vpack.c.b16 %v1378, %v1370
    %v1955 = vpack.c.b16 %v1379, %v1371
    %v1956 = vpack.c.b16 %v1380, %v1372
    %v1957 = vpack.c.b16 %v1381, %v1373
    %v1958 = vpack.c.b16 %v1382, %v1374
    %v1959 = vpack.c.b16 %v1383, %v1375
    %v1960 = vpack.c.b16 %v1392, %v1384
    %v1961 = vpack.c.b16 %v1393, %v1385
    %v1962 = vpack.c.b16 %v1394, %v1386
    %v1963 = vpack.c.b16 %v1395, %v1387
    %v1964 = vpack.c.b16 %v1396, %v1388
    %v1965 = vpack.c.b16 %v1397, %v1389
    %v1966 = vpack.c.b16 %v1398, %v1390
    %v1967 = vpack.c.b16 %v1399, %v1391
    %v1968 = vpack.c.b16 %v1408, %v1400
    %v1969 = vpack.c.b16 %v1409, %v1401
    %v1970 = vpack.c.b16 %v1410, %v1402
    %v1971 = vpack.c.b16 %v1411, %v1403
    %v1972 = vpack.c.b16 %v1412, %v1404
    %v1973 = vpack.c.b16 %v1413, %v1405
    %v1974 = vpack.c.b16 %v1414, %v1406
    %v1975 = vpack.c.b16 %v1415, %v1407
    %v1976 = vpack.c.b16 %v1424, %v1416
    %v1977 = vpack.c.b16 %v1425, %v1417
    %v1978 = vpack.c.b16 %v1426, %v1418
    %v1979 = vpack.c.b16 %v1427, %v1419
    %v1980 = vpack.c.b16 %v1428, %v1420
    %v1981 = vpack.c.b16 %v1429, %v1421
    %v1982 = vpack.c.b16 %v1430, %v1422
    %v1983 = vpack.c.b16 %v1431, %v1423
    %v1984 = vpack.c.b16 %v1440, %v1432
    %v1985 = vpack.c.b16 %v1441, %v1433
    %v1986 = vpack.c.b16 %v1442, %v1434
    %v1987 = vpack.c.b16 %v1443, %v1435
    %v1988 = vpack.c.b16 %v1444, %v1436
    %v1989 = vpack.c.b16 %v1445, %v1437
    %v1990 = vpack.c.b16 %v1446, %v1438
    %v1991 = vpack.c.b16 %v1447, %v1439
    %v1992 = vpack.c.b16 %v1456, %v1448
    %v1993 = vpack.c.b16 %v1457, %v1449
    %v1994 = vpack.c.b16 %v1458, %v1450
    %v1995 = vpack.c.b16 %v1459, %v1451
    %v1996 = vpack.c.b16 %v1460, %v1452
    %v1997 = vpack.c.b16 %v1461, %v1453
    %v1998 = vpack.c.b16 %v1462, %v1454
    %v1999 = vpack.c.b16 %v1463, %v1455
    %v2000 = vpack.c.b16 %v1472, %v1464
    %v2001 = vpack.c.b16 %v1473, %v1465
    %v2002 = vpack.c.b16 %v1474, %v1466
    %v2003 = vpack.c.b16 %v1475, %v1467
    %v2004 = vpack.c.b16 %v1476, %v1468
    %v2005 = vpack.c.b16 %v1477, %v1469
    %v2006 = vpack.c.b16 %v1478, %v1470
    %v2007 = vpack.c.b16 %v1479, %v1471
    %v2008 = vpack.c.b16 %v1488, %v1480
    %v2009 = vpack.c.b16 %v1489, %v1481
    %v2010 = vpack.c.b16 %v1490, %v1482
    %v2011 = vpack.c.b16 %v1491, %v1483
    %v2012 = vpack.c.b16 %v1492, %v1484
    %v2013 = vpack.c.b16 %v1493, %v1485
    %v2014 = vpack.c.b16 %v1494, %v1486
    %v2015 = vpack.c.b16 %v1495, %v1487
    %v2016 = vpack.c.b16 %v1504, %v1496
    %v2017 = vpack.c.b16 %v1505, %v1497
    %v2018 = vpack.c.b16 %v1506, %v1498
    %v2019 = vpack.c.b16 %v1507, %v1499
    %v2020 = vpack.c.b16 %v1508, %v1500
    %v2021 = vpack.c.b16 %v1509, %v1501
    %v2022 = vpack.c.b16 %v1510, %v1502
    %v2023 = vpack.c.b16 %v1511, %v1503
    %v2024 = vpack.c.b16 %v1520, %v1512
    %v2025 = vpack.c.b16 %v1521, %v1513
    %v2026 = vpack.c.b16 %v1522, %v1514
    %v2027 = vpack.c.b16 %v1523, %v1515
    %v2028 = vpack.c.b16 %v1524, %v1516
    %v2029 = vpack.c.b16 %v1525, %v1517
    %v2030 = vpack.c.b16 %v1526, %v1518
    %v2031 = vpack.c.b16 %v1527, %v1519
    %v2032 = vpack.c.b16 %v1536, %v1528
    %v2033 = vpack.c.b16 %v1537, %v1529
    %v2034 = vpack.c.b16 %v1538, %v1530
    %v2035 = vpack.c.b16 %v1539, %v1531
    %v2036 = vpack.c.b16 %v1540, %v1532
    %v2037 = vpack.c.b16 %v1541, %v1533
    %v2038 = vpack.c.b16 %v1542, %v1534
    %v2039 = vpack.c.b16 %v1543, %v1535
    %v2040 = vpack.c.b16 %v1552, %v1544
    %v2041 = vpack.c.b16 %v1553, %v1545
    %v2042 = vpack.c.b16 %v1554, %v1546
    %v2043 = vpack.c.b16 %v1555, %v1547
    %v2044 = vpack.c.b16 %v1556, %v1548
    %v2045 = vpack.c.b16 %v1557, %v1549
    %v2046 = vpack.c.b16 %v1558, %v1550
    %v2047 = vpack.c.b16 %v1559, %v1551
    %v2048 = vpack.c.b16 %v1568, %v1560
    %v2049 = vpack.c.b16 %v1569, %v1561
    %v2050 = vpack.c.b16 %v1570, %v1562
    %v2051 = vpack.c.b16 %v1571, %v1563
    %v2052 = vpack.c.b16 %v1572, %v1564
    %v2053 = vpack.c.b16 %v1573, %v1565
    %v2054 = vpack.c.b16 %v1574, %v1566
    %v2055 = vpack.c.b16 %v1575, %v1567
    %v2056 = vpack.c.b16 %v1584, %v1576
    %v2057 = vpack.c.b16 %v1585, %v1577
    %v2058 = vpack.c.b16 %v1586, %v1578
    %v2059 = vpack.c.b16 %v1587, %v1579
    %v2060 = vpack.c.b16 %v1588, %v1580
    %v2061 = vpack.c.b16 %v1589, %v1581
    %v2062 = vpack.c.b16 %v1590, %v1582
    %v2063 = vpack.c.b16 %v1591, %v1583
    %v2064 = vpack.c.b16 %v1600, %v1592
    %v2065 = vpack.c.b16 %v1601, %v1593
    %v2066 = vpack.c.b16 %v1602, %v1594
    %v2067 = vpack.c.b16 %v1603, %v1595
    %v2068 = vpack.c.b16 %v1604, %v1596
    %v2069 = vpack.c.b16 %v1605, %v1597
    %v2070 = vpack.c.b16 %v1606, %v1598
    %v2071 = vpack.c.b16 %v1607, %v1599
    %v2072 = vpack.c.b16 %v1616, %v1608
    %v2073 = vpack.c.b16 %v1617, %v1609
    %v2074 = vpack.c.b16 %v1618, %v1610
    %v2075 = vpack.c.b16 %v1619, %v1611
    %v2076 = vpack.c.b16 %v1620, %v1612
    %v2077 = vpack.c.b16 %v1621, %v1613
    %v2078 = vpack.c.b16 %v1622, %v1614
    %v2079 = vpack.c.b16 %v1623, %v1615
    %v2080 = vpack.c.b16 %v1632, %v1624
    %v2081 = vpack.c.b16 %v1633, %v1625
    %v2082 = vpack.c.b16 %v1634, %v1626
    %v2083 = vpack.c.b16 %v1635, %v1627
    %v2084 = vpack.c.b16 %v1636, %v1628
    %v2085 = vpack.c.b16 %v1637, %v1629
    %v2086 = vpack.c.b16 %v1638, %v1630
    %v2087 = vpack.c.b16 %v1639, %v1631
    %v2088 = vpack.c.b16 %v1648, %v1640
    %v2089 = vpack.c.b16 %v1649, %v1641
    %v2090 = vpack.c.b16 %v1650, %v1642
    %v2091 = vpack.c.b16 %v1651, %v1643
    %v2092 = vpack.c.b16 %v1652, %v1644
    %v2093 = vpack.c.b16 %v1653, %v1645
    %v2094 = vpack.c.b16 %v1654, %v1646
    %v2095 = vpack.c.b16 %v1655, %v1647
    %v2096 = vpack.c.b16 %v1664, %v1656
    %v2097 = vpack.c.b16 %v1665, %v1657
    %v2098 = vpack.c.b16 %v1666, %v1658
    %v2099 = vpack.c.b16 %v1667, %v1659
    %v2100 = vpack.c.b16 %v1668, %v1660
    %v2101 = vpack.c.b16 %v1669, %v1661
    %v2102 = vpack.c.b16 %v1670, %v1662
    %v2103 = vpack.c.b16 %v1671, %v1663
    %v2104 = vpack.c.b16 %v1680, %v1672
    %v2105 = vpack.c.b16 %v1681, %v1673
    %v2106 = vpack.c.b16 %v1682, %v1674
    %v2107 = vpack.c.b16 %v1683, %v1675
    %v2108 = vpack.c.b16 %v1684, %v1676
    %v2109 = vpack.c.b16 %v1685, %v1677
    %v2110 = vpack.c.b16 %v1686, %v1678
    %v2111 = vpack.c.b16 %v1687, %v1679
    %v2112 = vpack.c.b16 %v1696, %v1688
    %v2113 = vpack.c.b16 %v1697, %v1689
    %v2114 = vpack.c.b16 %v1698, %v1690
    %v2115 = vpack.c.b16 %v1699, %v1691
    %v2116 = vpack.c.b16 %v1700, %v1692
    %v2117 = vpack.c.b16 %v1701, %v1693
    %v2118 = vpack.c.b16 %v1702, %v1694
    %v2119 = vpack.c.b16 %v1703, %v1695
    %v2120 = vpack.c.b16 %v1712, %v1704
    %v2121 = vpack.c.b16 %v1713, %v1705
    %v2122 = vpack.c.b16 %v1714, %v1706
    %v2123 = vpack.c.b16 %v1715, %v1707
    %v2124 = vpack.c.b16 %v1716, %v1708
    %v2125 = vpack.c.b16 %v1717, %v1709
    %v2126 = vpack.c.b16 %v1718, %v1710
    %v2127 = vpack.c.b16 %v1719, %v1711
    %v2128 = vpack.c.b16 %v1728, %v1720
    %v2129 = vpack.c.b16 %v1729, %v1721
    %v2130 = vpack.c.b16 %v1730, %v1722
    %v2131 = vpack.c.b16 %v1731, %v1723
    %v2132 = vpack.c.b16 %v1732, %v1724
    %v2133 = vpack.c.b16 %v1733, %v1725
    %v2134 = vpack.c.b16 %v1734, %v1726
    %v2135 = vpack.c.b16 %v1735, %v1727
    %v2136 = vpack.c.b16 %v1744, %v1736
    %v2137 = vpack.c.b16 %v1745, %v1737
    %v2138 = vpack.c.b16 %v1746, %v1738
    %v2139 = vpack.c.b16 %v1747, %v1739
    %v2140 = vpack.c.b16 %v1748, %v1740
    %v2141 = vpack.c.b16 %v1749, %v1741
    %v2142 = vpack.c.b16 %v1750, %v1742
    %v2143 = vpack.c.b16 %v1751, %v1743
    %v2144 = vpack.c.b16 %v1760, %v1752
    %v2145 = vpack.c.b16 %v1761, %v1753
    %v2146 = vpack.c.b16 %v1762, %v1754
    %v2147 = vpack.c.b16 %v1763, %v1755
    %v2148 = vpack.c.b16 %v1764, %v1756
    %v2149 = vpack.c.b16 %v1765, %v1757
    %v2150 = vpack.c.b16 %v1766, %v1758
    %v2151 = vpack.c.b16 %v1767, %v1759
    %2536 = vmatprep.subr.bf16.mxu0 %v1769
    %2537 = vmatpush1.bf16.msra.mxu0 %v1768
    %2538 = vmatprep.subr.bf16.mxu0 %v1777
    %2539 = vmatpush1.bf16.msra.mxu0 %v1776
    %2540 = vmatprep.subr.bf16.mxu0 %v1785
    %2541 = vmatpush1.bf16.msra.mxu0 %v1784
    %2542 = vmatprep.subr.bf16.mxu0 %v1793
    %2543 = vmatpush1.bf16.msra.mxu0 %v1792
    %2544 = vmatprep.subr.bf16.mxu0 %v1801
    %2545 = vmatpush1.bf16.msra.mxu0 %v1800
    %2546 = vmatprep.subr.bf16.mxu0 %v1809
    %2547 = vmatpush1.bf16.msra.mxu0 %v1808
    %2548 = vmatprep.subr.bf16.mxu0 %v1817
    %2549 = vmatpush1.bf16.msra.mxu0 %v1816
    %2550 = vmatprep.subr.bf16.mxu0 %v1825
    %2551 = vmatpush1.bf16.msra.mxu0 %v1824
    %2552 = vmatprep.subr.bf16.mxu0 %v1833
    %2553 = vmatpush1.bf16.msra.mxu0 %v1832
    %2554 = vmatprep.subr.bf16.mxu0 %v1841
    %2555 = vmatpush1.bf16.msra.mxu0 %v1840
    %2556 = vmatprep.subr.bf16.mxu0 %v1849
    %2557 = vmatpush1.bf16.msra.mxu0 %v1848
    %2558 = vmatprep.subr.bf16.mxu0 %v1857
    %2559 = vmatpush1.bf16.msra.mxu0 %v1856
    %2560 = vmatprep.subr.bf16.mxu0 %v1865
    %2561 = vmatpush1.bf16.msra.mxu0 %v1864
    %2562 = vmatprep.subr.bf16.mxu0 %v1873
    %2563 = vmatpush1.bf16.msra.mxu0 %v1872
    %2564 = vmatprep.subr.bf16.mxu0 %v1881
    %2565 = vmatpush1.bf16.msra.mxu0 %v1880
    %2566 = vmatprep.subr.bf16.mxu0 %v1889
    %2567 = vmatpush1.bf16.msra.mxu0 %v1888
    %2568 = vmatprep.mubr.bf16.mxu0 %v605
    %2569 = vmatmul.mubr.bf16.gmra.mrb[0].mxu0 %v604
    %v2570 = vpop.f32.mrb[0].mxu0
    %v2571 = vadd.f32 %v558, %v2570
    %v2572 = vpop.f32.mrb[0].mxu0
    %v2573 = vadd.f32 %v562, %v2572
    %v2574 = vpop.f32.mrb[0].mxu0
    %v2575 = vpop.f32.mrb[0].mxu0
    %2576 = vdwg.mxu0
    %2577 = vmatprep.subr.bf16.mxu0 %v1897
    %2578 = vmatpush1.bf16.msra.mxu0 %v1896
    %2579 = vmatprep.subr.bf16.mxu0 %v1905
    %2580 = vmatpush1.bf16.msra.mxu0 %v1904
    %2581 = vmatprep.subr.bf16.mxu0 %v1913
    %2582 = vmatpush1.bf16.msra.mxu0 %v1912
    %2583 = vmatprep.subr.bf16.mxu0 %v1921
    %2584 = vmatpush1.bf16.msra.mxu0 %v1920
    %2585 = vmatprep.subr.bf16.mxu0 %v1929
    %2586 = vmatpush1.bf16.msra.mxu0 %v1928
    %2587 = vmatprep.subr.bf16.mxu0 %v1937
    %2588 = vmatpush1.bf16.msra.mxu0 %v1936
    %2589 = vmatprep.subr.bf16.mxu0 %v1945
    %2590 = vmatpush1.bf16.msra.mxu0 %v1944
    %2591 = vmatprep.subr.bf16.mxu0 %v1953
    %2592 = vmatpush1.bf16.msra.mxu0 %v1952
    %2593 = vmatprep.subr.bf16.mxu0 %v1961
    %2594 = vmatpush1.bf16.msra.mxu0 %v1960
    %2595 = vmatprep.subr.bf16.mxu0 %v1969
    %2596 = vmatpush1.bf16.msra.mxu0 %v1968
    %2597 = vmatprep.subr.bf16.mxu0 %v1977
    %2598 = vmatpush1.bf16.msra.mxu0 %v1976
    %2599 = vmatprep.subr.bf16.mxu0 %v1985
    %2600 = vmatpush1.bf16.msra.mxu0 %v1984
    %2601 = vmatprep.subr.bf16.mxu0 %v1993
    %2602 = vmatpush1.bf16.msra.mxu0 %v1992
    %2603 = vmatprep.subr.bf16.mxu0 %v2001
    %2604 = vmatpush1.bf16.msra.mxu0 %v2000
    %2605 = vmatprep.subr.bf16.mxu0 %v2009
    %2606 = vmatpush1.bf16.msra.mxu0 %v2008
    %2607 = vmatprep.subr.bf16.mxu0 %v2017
    %2608 = vmatpush1.bf16.msra.mxu0 %v2016
    %2609 = vmatprep.mubr.bf16.mxu0 %v607
    %2610 = vmatmul.mubr.bf16.gmra.mrb[0].mxu0 %v606
    %v2611 = vpop.f32.mrb[0].mxu0
    %v2612 = vadd.f32 %v2571, %v2611
    %v2613 = vpop.f32.mrb[0].mxu0
    %v2614 = vadd.f32 %v2573, %v2613
    %v2615 = vpop.f32.mrb[0].mxu0
    %v2616 = vpop.f32.mrb[0].mxu0
    %2617 = vdwg.mxu0
    %2618 = vmatprep.subr.bf16.mxu0 %v2025
    %2619 = vmatpush1.bf16.msra.mxu0 %v2024
    %2620 = vmatprep.subr.bf16.mxu0 %v2033
    %2621 = vmatpush1.bf16.msra.mxu0 %v2032
    %2622 = vmatprep.subr.bf16.mxu0 %v2041
    %2623 = vmatpush1.bf16.msra.mxu0 %v2040
    %2624 = vmatprep.subr.bf16.mxu0 %v2049
    %2625 = vmatpush1.bf16.msra.mxu0 %v2048
    %2626 = vmatprep.subr.bf16.mxu0 %v2057
    %2627 = vmatpush1.bf16.msra.mxu0 %v2056
    %2628 = vmatprep.subr.bf16.mxu0 %v2065
    %2629 = vmatpush1.bf16.msra.mxu0 %v2064
    %2630 = vmatprep.subr.bf16.mxu0 %v2073
    %2631 = vmatpush1.bf16.msra.mxu0 %v2072
    %2632 = vmatprep.subr.bf16.mxu0 %v2081
    %2633 = vmatpush1.bf16.msra.mxu0 %v2080
    %2634 = vmatprep.subr.bf16.mxu0 %v2089
    %2635 = vmatpush1.bf16.msra.mxu0 %v2088
    %2636 = vmatprep.subr.bf16.mxu0 %v2097
    %2637 = vmatpush1.bf16.msra.mxu0 %v2096
    %2638 = vmatprep.subr.bf16.mxu0 %v2105
    %2639 = vmatpush1.bf16.msra.mxu0 %v2104
    %2640 = vmatprep.subr.bf16.mxu0 %v2113
    %2641 = vmatpush1.bf16.msra.mxu0 %v2112
    %2642 = vmatprep.subr.bf16.mxu0 %v2121
    %2643 = vmatpush1.bf16.msra.mxu0 %v2120
    %2644 = vmatprep.subr.bf16.mxu0 %v2129
    %2645 = vmatpush1.bf16.msra.mxu0 %v2128
    %2646 = vmatprep.subr.bf16.mxu0 %v2137
    %2647 = vmatpush1.bf16.msra.mxu0 %v2136
    %2648 = vmatprep.subr.bf16.mxu0 %v2145
    %2649 = vmatpush1.bf16.msra.mxu0 %v2144
    %2650 = vmatprep.mubr.bf16.mxu0 %v609
    %2651 = vmatmul.mubr.bf16.gmra.mrb[0].mxu0 %v608
    %v2652 = vpop.f32.mrb[0].mxu0
    %v2653 = vadd.f32 %v2612, %v2652
    %v2654 = vpop.f32.mrb[0].mxu0
    %v2655 = vadd.f32 %v2614, %v2654
    %v2656 = vpop.f32.mrb[0].mxu0
    %v2657 = vpop.f32.mrb[0].mxu0
    %2658 = vdwg.mxu0
    %2659 = vmatprep.subr.bf16.mxu0 %v1771
    %2660 = vmatpush1.bf16.msra.mxu0 %v1770
    %2661 = vmatprep.subr.bf16.mxu0 %v1779
    %2662 = vmatpush1.bf16.msra.mxu0 %v1778
    %2663 = vmatprep.subr.bf16.mxu0 %v1787
    %2664 = vmatpush1.bf16.msra.mxu0 %v1786
    %2665 = vmatprep.subr.bf16.mxu0 %v1795
    %2666 = vmatpush1.bf16.msra.mxu0 %v1794
    %2667 = vmatprep.subr.bf16.mxu0 %v1803
    %2668 = vmatpush1.bf16.msra.mxu0 %v1802
    %2669 = vmatprep.subr.bf16.mxu0 %v1811
    %2670 = vmatpush1.bf16.msra.mxu0 %v1810
    %2671 = vmatprep.subr.bf16.mxu0 %v1819
    %2672 = vmatpush1.bf16.msra.mxu0 %v1818
    %2673 = vmatprep.subr.bf16.mxu0 %v1827
    %2674 = vmatpush1.bf16.msra.mxu0 %v1826
    %2675 = vmatprep.subr.bf16.mxu0 %v1835
    %2676 = vmatpush1.bf16.msra.mxu0 %v1834
    %2677 = vmatprep.subr.bf16.mxu0 %v1843
    %2678 = vmatpush1.bf16.msra.mxu0 %v1842
    %2679 = vmatprep.subr.bf16.mxu0 %v1851
    %2680 = vmatpush1.bf16.msra.mxu0 %v1850
    %2681 = vmatprep.subr.bf16.mxu0 %v1859
    %2682 = vmatpush1.bf16.msra.mxu0 %v1858
    %2683 = vmatprep.subr.bf16.mxu0 %v1867
    %2684 = vmatpush1.bf16.msra.mxu0 %v1866
    %2685 = vmatprep.subr.bf16.mxu0 %v1875
    %2686 = vmatpush1.bf16.msra.mxu0 %v1874
    %2687 = vmatprep.subr.bf16.mxu0 %v1883
    %2688 = vmatpush1.bf16.msra.mxu0 %v1882
    %2689 = vmatprep.subr.bf16.mxu0 %v1891
    %2690 = vmatpush1.bf16.msra.mxu0 %v1890
    %2691 = vmatprep.mubr.bf16.mxu0 %v605
    %2692 = vmatmul.mubr.bf16.gmra.mrb[0].mxu0 %v604
    %v2693 = vpop.f32.mrb[0].mxu0
    %v2694 = vadd.f32 %v566, %v2693
    %v2695 = vpop.f32.mrb[0].mxu0
    %v2696 = vadd.f32 %v570, %v2695
    %v2697 = vpop.f32.mrb[0].mxu0
    %v2698 = vpop.f32.mrb[0].mxu0
    %2699 = vdwg.mxu0
    %2700 = vmatprep.subr.bf16.mxu0 %v1899
    %2701 = vmatpush1.bf16.msra.mxu0 %v1898
    %2702 = vmatprep.subr.bf16.mxu0 %v1907
    %2703 = vmatpush1.bf16.msra.mxu0 %v1906
    %2704 = vmatprep.subr.bf16.mxu0 %v1915
    %2705 = vmatpush1.bf16.msra.mxu0 %v1914
    %2706 = vmatprep.subr.bf16.mxu0 %v1923
    %2707 = vmatpush1.bf16.msra.mxu0 %v1922
    %2708 = vmatprep.subr.bf16.mxu0 %v1931
    %2709 = vmatpush1.bf16.msra.mxu0 %v1930
    %2710 = vmatprep.subr.bf16.mxu0 %v1939
    %2711 = vmatpush1.bf16.msra.mxu0 %v1938
    %2712 = vmatprep.subr.bf16.mxu0 %v1947
    %2713 = vmatpush1.bf16.msra.mxu0 %v1946
    %2714 = vmatprep.subr.bf16.mxu0 %v1955
    %2715 = vmatpush1.bf16.msra.mxu0 %v1954
    %2716 = vmatprep.subr.bf16.mxu0 %v1963
    %2717 = vmatpush1.bf16.msra.mxu0 %v1962
    %2718 = vmatprep.subr.bf16.mxu0 %v1971
    %2719 = vmatpush1.bf16.msra.mxu0 %v1970
    %2720 = vmatprep.subr.bf16.mxu0 %v1979
    %2721 = vmatpush1.bf16.msra.mxu0 %v1978
    %2722 = vmatprep.subr.bf16.mxu0 %v1987
    %2723 = vmatpush1.bf16.msra.mxu0 %v1986
    %2724 = vmatprep.subr.bf16.mxu0 %v1995
    %2725 = vmatpush1.bf16.msra.mxu0 %v1994
    %2726 = vmatprep.subr.bf16.mxu0 %v2003
    %2727 = vmatpush1.bf16.msra.mxu0 %v2002
    %2728 = vmatprep.subr.bf16.mxu0 %v2011
    %2729 = vmatpush1.bf16.msra.mxu0 %v2010
    %2730 = vmatprep.subr.bf16.mxu0 %v2019
    %2731 = vmatpush1.bf16.msra.mxu0 %v2018
    %2732 = vmatprep.mubr.bf16.mxu0 %v607
    %2733 = vmatmul.mubr.bf16.gmra.mrb[0].mxu0 %v606
    %v2734 = vpop.f32.mrb[0].mxu0
    %v2735 = vadd.f32 %v2694, %v2734
    %v2736 = vpop.f32.mrb[0].mxu0
    %v2737 = vadd.f32 %v2696, %v2736
    %v2738 = vpop.f32.mrb[0].mxu0
    %v2739 = vpop.f32.mrb[0].mxu0
    %2740 = vdwg.mxu0
    %2741 = vmatprep.subr.bf16.mxu0 %v2027
    %2742 = vmatpush1.bf16.msra.mxu0 %v2026
    %2743 = vmatprep.subr.bf16.mxu0 %v2035
    %2744 = vmatpush1.bf16.msra.mxu0 %v2034
    %2745 = vmatprep.subr.bf16.mxu0 %v2043
    %2746 = vmatpush1.bf16.msra.mxu0 %v2042
    %2747 = vmatprep.subr.bf16.mxu0 %v2051
    %2748 = vmatpush1.bf16.msra.mxu0 %v2050
    %2749 = vmatprep.subr.bf16.mxu0 %v2059
    %2750 = vmatpush1.bf16.msra.mxu0 %v2058
    %2751 = vmatprep.subr.bf16.mxu0 %v2067
    %2752 = vmatpush1.bf16.msra.mxu0 %v2066
    %2753 = vmatprep.subr.bf16.mxu0 %v2075
    %2754 = vmatpush1.bf16.msra.mxu0 %v2074
    %2755 = vmatprep.subr.bf16.mxu0 %v2083
    %2756 = vmatpush1.bf16.msra.mxu0 %v2082
    %2757 = vmatprep.subr.bf16.mxu0 %v2091
    %2758 = vmatpush1.bf16.msra.mxu0 %v2090
    %2759 = vmatprep.subr.bf16.mxu0 %v2099
    %2760 = vmatpush1.bf16.msra.mxu0 %v2098
    %2761 = vmatprep.subr.bf16.mxu0 %v2107
    %2762 = vmatpush1.bf16.msra.mxu0 %v2106
    %2763 = vmatprep.subr.bf16.mxu0 %v2115
    %2764 = vmatpush1.bf16.msra.mxu0 %v2114
    %2765 = vmatprep.subr.bf16.mxu0 %v2123
    %2766 = vmatpush1.bf16.msra.mxu0 %v2122
    %2767 = vmatprep.subr.bf16.mxu0 %v2131
    %2768 = vmatpush1.bf16.msra.mxu0 %v2130
    %2769 = vmatprep.subr.bf16.mxu0 %v2139
    %2770 = vmatpush1.bf16.msra.mxu0 %v2138
    %2771 = vmatprep.subr.bf16.mxu0 %v2147
    %2772 = vmatpush1.bf16.msra.mxu0 %v2146
    %2773 = vmatprep.mubr.bf16.mxu0 %v609
    %2774 = vmatmul.mubr.bf16.gmra.mrb[0].mxu0 %v608
    %v2775 = vpop.f32.mrb[0].mxu0
    %v2776 = vadd.f32 %v2735, %v2775
    %v2777 = vpop.f32.mrb[0].mxu0
    %v2778 = vadd.f32 %v2737, %v2777
    %v2779 = vpop.f32.mrb[0].mxu0
    %v2780 = vpop.f32.mrb[0].mxu0
    %2781 = vdwg.mxu0
    %2782 = vmatprep.subr.bf16.mxu0 %v1773
    %2783 = vmatpush1.bf16.msra.mxu0 %v1772
    %2784 = vmatprep.subr.bf16.mxu0 %v1781
    %2785 = vmatpush1.bf16.msra.mxu0 %v1780
    %2786 = vmatprep.subr.bf16.mxu0 %v1789
    %2787 = vmatpush1.bf16.msra.mxu0 %v1788
    %2788 = vmatprep.subr.bf16.mxu0 %v1797
    %2789 = vmatpush1.bf16.msra.mxu0 %v1796
    %2790 = vmatprep.subr.bf16.mxu0 %v1805
    %2791 = vmatpush1.bf16.msra.mxu0 %v1804
    %2792 = vmatprep.subr.bf16.mxu0 %v1813
    %2793 = vmatpush1.bf16.msra.mxu0 %v1812
    %2794 = vmatprep.subr.bf16.mxu0 %v1821
    %2795 = vmatpush1.bf16.msra.mxu0 %v1820
    %2796 = vmatprep.subr.bf16.mxu0 %v1829
    %2797 = vmatpush1.bf16.msra.mxu0 %v1828
    %2798 = vmatprep.subr.bf16.mxu0 %v1837
    %2799 = vmatpush1.bf16.msra.mxu0 %v1836
    %2800 = vmatprep.subr.bf16.mxu0 %v1845
    %2801 = vmatpush1.bf16.msra.mxu0 %v1844
    %2802 = vmatprep.subr.bf16.mxu0 %v1853
    %2803 = vmatpush1.bf16.msra.mxu0 %v1852
    %2804 = vmatprep.subr.bf16.mxu0 %v1861
    %2805 = vmatpush1.bf16.msra.mxu0 %v1860
    %2806 = vmatprep.subr.bf16.mxu0 %v1869
    %2807 = vmatpush1.bf16.msra.mxu0 %v1868
    %2808 = vmatprep.subr.bf16.mxu0 %v1877
    %2809 = vmatpush1.bf16.msra.mxu0 %v1876
    %2810 = vmatprep.subr.bf16.mxu0 %v1885
    %2811 = vmatpush1.bf16.msra.mxu0 %v1884
    %2812 = vmatprep.subr.bf16.mxu0 %v1893
    %2813 = vmatpush1.bf16.msra.mxu0 %v1892
    %2814 = vmatprep.mubr.bf16.mxu0 %v605
    %2815 = vmatmul.mubr.bf16.gmra.mrb[0].mxu0 %v604
    %v2816 = vpop.f32.mrb[0].mxu0
    %v2817 = vadd.f32 %v574, %v2816
    %v2818 = vpop.f32.mrb[0].mxu0
    %v2819 = vadd.f32 %v578, %v2818
    %v2820 = vpop.f32.mrb[0].mxu0
    %v2821 = vpop.f32.mrb[0].mxu0
    %2822 = vdwg.mxu0
    %2823 = vmatprep.subr.bf16.mxu0 %v1901
    %2824 = vmatpush1.bf16.msra.mxu0 %v1900
    %2825 = vmatprep.subr.bf16.mxu0 %v1909
    %2826 = vmatpush1.bf16.msra.mxu0 %v1908
    %2827 = vmatprep.subr.bf16.mxu0 %v1917
    %2828 = vmatpush1.bf16.msra.mxu0 %v1916
    %2829 = vmatprep.subr.bf16.mxu0 %v1925
    %2830 = vmatpush1.bf16.msra.mxu0 %v1924
    %2831 = vmatprep.subr.bf16.mxu0 %v1933
    %2832 = vmatpush1.bf16.msra.mxu0 %v1932
    %2833 = vmatprep.subr.bf16.mxu0 %v1941
    %2834 = vmatpush1.bf16.msra.mxu0 %v1940
    %2835 = vmatprep.subr.bf16.mxu0 %v1949
    %2836 = vmatpush1.bf16.msra.mxu0 %v1948
    %2837 = vmatprep.subr.bf16.mxu0 %v1957
    %2838 = vmatpush1.bf16.msra.mxu0 %v1956
    %2839 = vmatprep.subr.bf16.mxu0 %v1965
    %2840 = vmatpush1.bf16.msra.mxu0 %v1964
    %2841 = vmatprep.subr.bf16.mxu0 %v1973
    %2842 = vmatpush1.bf16.msra.mxu0 %v1972
    %2843 = vmatprep.subr.bf16.mxu0 %v1981
    %2844 = vmatpush1.bf16.msra.mxu0 %v1980
    %2845 = vmatprep.subr.bf16.mxu0 %v1989
    %2846 = vmatpush1.bf16.msra.mxu0 %v1988
    %2847 = vmatprep.subr.bf16.mxu0 %v1997
    %2848 = vmatpush1.bf16.msra.mxu0 %v1996
    %2849 = vmatprep.subr.bf16.mxu0 %v2005
    %2850 = vmatpush1.bf16.msra.mxu0 %v2004
    %2851 = vmatprep.subr.bf16.mxu0 %v2013
    %2852 = vmatpush1.bf16.msra.mxu0 %v2012
    %2853 = vmatprep.subr.bf16.mxu0 %v2021
    %2854 = vmatpush1.bf16.msra.mxu0 %v2020
    %2855 = vmatprep.mubr.bf16.mxu0 %v607
    %2856 = vmatmul.mubr.bf16.gmra.mrb[0].mxu0 %v606
    %v2857 = vpop.f32.mrb[0].mxu0
    %v2858 = vadd.f32 %v2817, %v2857
    %v2859 = vpop.f32.mrb[0].mxu0
    %v2860 = vadd.f32 %v2819, %v2859
    %v2861 = vpop.f32.mrb[0].mxu0
    %v2862 = vpop.f32.mrb[0].mxu0
    %2863 = vdwg.mxu0
    %2864 = vmatprep.subr.bf16.mxu0 %v2029
    %2865 = vmatpush1.bf16.msra.mxu0 %v2028
    %2866 = vmatprep.subr.bf16.mxu0 %v2037
    %2867 = vmatpush1.bf16.msra.mxu0 %v2036
    %2868 = vmatprep.subr.bf16.mxu0 %v2045
    %2869 = vmatpush1.bf16.msra.mxu0 %v2044
    %2870 = vmatprep.subr.bf16.mxu0 %v2053
    %2871 = vmatpush1.bf16.msra.mxu0 %v2052
    %2872 = vmatprep.subr.bf16.mxu0 %v2061
    %2873 = vmatpush1.bf16.msra.mxu0 %v2060
    %2874 = vmatprep.subr.bf16.mxu0 %v2069
    %2875 = vmatpush1.bf16.msra.mxu0 %v2068
    %2876 = vmatprep.subr.bf16.mxu0 %v2077
    %2877 = vmatpush1.bf16.msra.mxu0 %v2076
    %2878 = vmatprep.subr.bf16.mxu0 %v2085
    %2879 = vmatpush1.bf16.msra.mxu0 %v2084
    %2880 = vmatprep.subr.bf16.mxu0 %v2093
    %2881 = vmatpush1.bf16.msra.mxu0 %v2092
    %2882 = vmatprep.subr.bf16.mxu0 %v2101
    %2883 = vmatpush1.bf16.msra.mxu0 %v2100
    %2884 = vmatprep.subr.bf16.mxu0 %v2109
    %2885 = vmatpush1.bf16.msra.mxu0 %v2108
    %2886 = vmatprep.subr.bf16.mxu0 %v2117
    %2887 = vmatpush1.bf16.msra.mxu0 %v2116
    %2888 = vmatprep.subr.bf16.mxu0 %v2125
    %2889 = vmatpush1.bf16.msra.mxu0 %v2124
    %2890 = vmatprep.subr.bf16.mxu0 %v2133
    %2891 = vmatpush1.bf16.msra.mxu0 %v2132
    %2892 = vmatprep.subr.bf16.mxu0 %v2141
    %2893 = vmatpush1.bf16.msra.mxu0 %v2140
    %2894 = vmatprep.subr.bf16.mxu0 %v2149
    %2895 = vmatpush1.bf16.msra.mxu0 %v2148
    %2896 = vmatprep.mubr.bf16.mxu0 %v609
    %2897 = vmatmul.mubr.bf16.gmra.mrb[0].mxu0 %v608
    %v2898 = vpop.f32.mrb[0].mxu0
    %v2899 = vadd.f32 %v2858, %v2898
    %v2900 = vpop.f32.mrb[0].mxu0
    %v2901 = vadd.f32 %v2860, %v2900
    %v2902 = vpop.f32.mrb[0].mxu0
    %v2903 = vpop.f32.mrb[0].mxu0
    %2904 = vdwg.mxu0
    %2905 = vmatprep.subr.bf16.mxu0 %v1775
    %2906 = vmatpush1.bf16.msra.mxu0 %v1774
    %2907 = vmatprep.subr.bf16.mxu0 %v1783
    %2908 = vmatpush1.bf16.msra.mxu0 %v1782
    %2909 = vmatprep.subr.bf16.mxu0 %v1791
    %2910 = vmatpush1.bf16.msra.mxu0 %v1790
    %2911 = vmatprep.subr.bf16.mxu0 %v1799
    %2912 = vmatpush1.bf16.msra.mxu0 %v1798
    %2913 = vmatprep.subr.bf16.mxu0 %v1807
    %2914 = vmatpush1.bf16.msra.mxu0 %v1806
    %2915 = vmatprep.subr.bf16.mxu0 %v1815
    %2916 = vmatpush1.bf16.msra.mxu0 %v1814
    %2917 = vmatprep.subr.bf16.mxu0 %v1823
    %2918 = vmatpush1.bf16.msra.mxu0 %v1822
    %2919 = vmatprep.subr.bf16.mxu0 %v1831
    %2920 = vmatpush1.bf16.msra.mxu0 %v1830
    %2921 = vmatprep.subr.bf16.mxu0 %v1839
    %2922 = vmatpush1.bf16.msra.mxu0 %v1838
    %2923 = vmatprep.subr.bf16.mxu0 %v1847
    %2924 = vmatpush1.bf16.msra.mxu0 %v1846
    %2925 = vmatprep.subr.bf16.mxu0 %v1855
    %2926 = vmatpush1.bf16.msra.mxu0 %v1854
    %2927 = vmatprep.subr.bf16.mxu0 %v1863
    %2928 = vmatpush1.bf16.msra.mxu0 %v1862
    %2929 = vmatprep.subr.bf16.mxu0 %v1871
    %2930 = vmatpush1.bf16.msra.mxu0 %v1870
    %2931 = vmatprep.subr.bf16.mxu0 %v1879
    %2932 = vmatpush1.bf16.msra.mxu0 %v1878
    %2933 = vmatprep.subr.bf16.mxu0 %v1887
    %2934 = vmatpush1.bf16.msra.mxu0 %v1886
    %2935 = vmatprep.subr.bf16.mxu0 %v1895
    %2936 = vmatpush1.bf16.msra.mxu0 %v1894
    %2937 = vmatprep.mubr.bf16.mxu0 %v605
    %2938 = vmatmul.mubr.bf16.gmra.mrb[0].mxu0 %v604
    %v2939 = vpop.f32.mrb[0].mxu0
    %v2940 = vadd.f32 %v582, %v2939
    %v2941 = vpop.f32.mrb[0].mxu0
    %v2942 = vadd.f32 %v586, %v2941
    %v2943 = vpop.f32.mrb[0].mxu0
    %v2944 = vpop.f32.mrb[0].mxu0
    %2945 = vdwg.mxu0
    %2946 = vmatprep.subr.bf16.mxu0 %v1903
    %2947 = vmatpush1.bf16.msra.mxu0 %v1902
    %2948 = vmatprep.subr.bf16.mxu0 %v1911
    %2949 = vmatpush1.bf16.msra.mxu0 %v1910
    %2950 = vmatprep.subr.bf16.mxu0 %v1919
    %2951 = vmatpush1.bf16.msra.mxu0 %v1918
    %2952 = vmatprep.subr.bf16.mxu0 %v1927
    %2953 = vmatpush1.bf16.msra.mxu0 %v1926
    %2954 = vmatprep.subr.bf16.mxu0 %v1935
    %2955 = vmatpush1.bf16.msra.mxu0 %v1934
    %2956 = vmatprep.subr.bf16.mxu0 %v1943
    %2957 = vmatpush1.bf16.msra.mxu0 %v1942
    %2958 = vmatprep.subr.bf16.mxu0 %v1951
    %2959 = vmatpush1.bf16.msra.mxu0 %v1950
    %2960 = vmatprep.subr.bf16.mxu0 %v1959
    %2961 = vmatpush1.bf16.msra.mxu0 %v1958
    %2962 = vmatprep.subr.bf16.mxu0 %v1967
    %2963 = vmatpush1.bf16.msra.mxu0 %v1966
    %2964 = vmatprep.subr.bf16.mxu0 %v1975
    %2965 = vmatpush1.bf16.msra.mxu0 %v1974
    %2966 = vmatprep.subr.bf16.mxu0 %v1983
    %2967 = vmatpush1.bf16.msra.mxu0 %v1982
    %2968 = vmatprep.subr.bf16.mxu0 %v1991
    %2969 = vmatpush1.bf16.msra.mxu0 %v1990
    %2970 = vmatprep.subr.bf16.mxu0 %v1999
    %2971 = vmatpush1.bf16.msra.mxu0 %v1998
    %2972 = vmatprep.subr.bf16.mxu0 %v2007
    %2973 = vmatpush1.bf16.msra.mxu0 %v2006
    %2974 = vmatprep.subr.bf16.mxu0 %v2015
    %2975 = vmatpush1.bf16.msra.mxu0 %v2014
    %2976 = vmatprep.subr.bf16.mxu0 %v2023
    %2977 = vmatpush1.bf16.msra.mxu0 %v2022
    %2978 = vmatprep.mubr.bf16.mxu0 %v607
    %2979 = vmatmul.mubr.bf16.gmra.mrb[0].mxu0 %v606
    %v2980 = vpop.f32.mrb[0].mxu0
    %v2981 = vadd.f32 %v2940, %v2980
    %v2982 = vpop.f32.mrb[0].mxu0
    %v2983 = vadd.f32 %v2942, %v2982
    %v2984 = vpop.f32.mrb[0].mxu0
    %v2985 = vpop.f32.mrb[0].mxu0
    %2986 = vdwg.mxu0
    %2987 = vmatprep.subr.bf16.mxu0 %v2031
    %2988 = vmatpush1.bf16.msra.mxu0 %v2030
    %2989 = vmatprep.subr.bf16.mxu0 %v2039
    %2990 = vmatpush1.bf16.msra.mxu0 %v2038
    %2991 = vmatprep.subr.bf16.mxu0 %v2047
    %2992 = vmatpush1.bf16.msra.mxu0 %v2046
    %2993 = vmatprep.subr.bf16.mxu0 %v2055
    %2994 = vmatpush1.bf16.msra.mxu0 %v2054
    %2995 = vmatprep.subr.bf16.mxu0 %v2063
    %2996 = vmatpush1.bf16.msra.mxu0 %v2062
    %2997 = vmatprep.subr.bf16.mxu0 %v2071
    %2998 = vmatpush1.bf16.msra.mxu0 %v2070
    %2999 = vmatprep.subr.bf16.mxu0 %v2079
    %3000 = vmatpush1.bf16.msra.mxu0 %v2078
    %3001 = vmatprep.subr.bf16.mxu0 %v2087
    %3002 = vmatpush1.bf16.msra.mxu0 %v2086
    %3003 = vmatprep.subr.bf16.mxu0 %v2095
    %3004 = vmatpush1.bf16.msra.mxu0 %v2094
    %3005 = vmatprep.subr.bf16.mxu0 %v2103
    %3006 = vmatpush1.bf16.msra.mxu0 %v2102
    %3007 = vmatprep.subr.bf16.mxu0 %v2111
    %3008 = vmatpush1.bf16.msra.mxu0 %v2110
    %3009 = vmatprep.subr.bf16.mxu0 %v2119
    %3010 = vmatpush1.bf16.msra.mxu0 %v2118
    %3011 = vmatprep.subr.bf16.mxu0 %v2127
    %3012 = vmatpush1.bf16.msra.mxu0 %v2126
    %3013 = vmatprep.subr.bf16.mxu0 %v2135
    %3014 = vmatpush1.bf16.msra.mxu0 %v2134
    %3015 = vmatprep.subr.bf16.mxu0 %v2143
    %3016 = vmatpush1.bf16.msra.mxu0 %v2142
    %3017 = vmatprep.subr.bf16.mxu0 %v2151
    %3018 = vmatpush1.bf16.msra.mxu0 %v2150
    %3019 = vmatprep.mubr.bf16.mxu0 %v609
    %3020 = vmatmul.mubr.bf16.gmra.mrb[0].mxu0 %v608
    %v3021 = vpop.f32.mrb[0].mxu0
    %v3022 = vadd.f32 %v2981, %v3021
    %v3023 = vpop.f32.mrb[0].mxu0
    %v3024 = vadd.f32 %v2983, %v3023
    %v3025 = vpop.f32.mrb[0].mxu0
    %v3026 = vpop.f32.mrb[0].mxu0
    %3027 = vdwg.mxu0
    %v3028 = vmax.f32 %v2653, 0.0
    %v3029 = vmax.f32 %v2655, 0.0
    %v3030 = vmax.f32 %v2776, 0.0
    %v3031 = vmax.f32 %v2778, 0.0
    %v3032 = vmax.f32 %v2899, 0.0
    %v3033 = vmax.f32 %v2901, 0.0
    %v3034 = vmax.f32 %v3022, 0.0
    %v3035 = vmax.f32 %v3024, 0.0
    %v3036 = vmax.f32 %v3028, %v3030
    %v3037 = vmax.f32 %v3029, %v3031
    %v3038 = vmax.f32 %v3032, %v3034
    %v3039 = vmax.f32 %v3033, %v3035
    %v3040 = vmax.f32 %v3036, %v3038
    %v3041 = vmax.f32 %v3037, %v3039
    %v3042 = vpack.c.bf16 %v3040, %v3040
    %v3043 = vpack.c.bf16 %v3041, %v3041
    %v3044 = vld [vmem:[#allocation9] sm:$0xff]
    %v3045 = vld [vmem:[#allocation9 + $0x8] sm:$0xff]
    %v3046 = vld [vmem:[#allocation9 + $0x10] sm:$0xff]
    %v3047 = vld [vmem:[#allocation9 + $0x18] sm:$0xff]
    %v3048 = vld [vmem:[#allocation9 + $0x20] sm:$0xff]
    %v3049 = vld [vmem:[#allocation9 + $0x28] sm:$0xff]
    %v3050 = vld [vmem:[#allocation9 + $0x30] sm:$0xff]
    %v3051 = vld [vmem:[#allocation9 + $0x38] sm:$0xff]
    %v3052 = vld [vmem:[#allocation9 + $0x40] sm:$0xff]
    %v3053 = vld [vmem:[#allocation9 + $0x48] sm:$0xff]
    %v3054 = vld [vmem:[#allocation9 + $0x50] sm:$0xff]
    %v3055 = vld [vmem:[#allocation9 + $0x58] sm:$0xff]
    %v3056 = vld [vmem:[#allocation9 + $0x60] sm:$0xff]
    %v3057 = vld [vmem:[#allocation9 + $0x68] sm:$0xff]
    %v3058 = vld [vmem:[#allocation9 + $0x70] sm:$0xff]
    %v3059 = vld [vmem:[#allocation9 + $0x78] sm:$0xff]
    %v3060 = vld [vmem:[#allocation9 + $0x80] sm:$0xff]
    %v3061 = vld [vmem:[#allocation9 + $0x88] sm:$0xff]
    %v3062 = vld [vmem:[#allocation9 + $0x90] sm:$0xff]
    %v3063 = vld [vmem:[#allocation9 + $0x98] sm:$0xff]
    %v3064 = vld [vmem:[#allocation9 + $0xa0] sm:$0xff]
    %v3065 = vld [vmem:[#allocation9 + $0xa8] sm:$0xff]
    %v3066 = vld [vmem:[#allocation9 + $0xb0] sm:$0xff]
    %v3067 = vld [vmem:[#allocation9 + $0xb8] sm:$0xff]
    %v3068 = vld [vmem:[#allocation9 + $0xc0] sm:$0xff]
    %v3069 = vld [vmem:[#allocation9 + $0xc8] sm:$0xff]
    %v3070 = vld [vmem:[#allocation9 + $0xd0] sm:$0xff]
    %v3071 = vld [vmem:[#allocation9 + $0xd8] sm:$0xff]
    %v3072 = vld [vmem:[#allocation9 + $0xe0] sm:$0xff]
    %v3073 = vld [vmem:[#allocation9 + $0xe8] sm:$0xff]
    %v3074 = vld [vmem:[#allocation9 + $0xf0] sm:$0xff]
    %v3075 = vld [vmem:[#allocation9 + $0xf8] sm:$0xff]
    %v3076 = vld [vmem:[#allocation9 + $0x100] sm:$0xff]
    %v3077 = vld [vmem:[#allocation9 + $0x108] sm:$0xff]
    %v3078 = vld [vmem:[#allocation9 + $0x110] sm:$0xff]
    %v3079 = vld [vmem:[#allocation9 + $0x118] sm:$0xff]
    %v3080 = vld [vmem:[#allocation9 + $0x120] sm:$0xff]
    %v3081 = vld [vmem:[#allocation9 + $0x128] sm:$0xff]
    %v3082 = vld [vmem:[#allocation9 + $0x130] sm:$0xff]
    %v3083 = vld [vmem:[#allocation9 + $0x138] sm:$0xff]
    %v3084 = vld [vmem:[#allocation9 + $0x140] sm:$0xff]
    %v3085 = vld [vmem:[#allocation9 + $0x148] sm:$0xff]
    %v3086 = vld [vmem:[#allocation9 + $0x150] sm:$0xff]
    %v3087 = vld [vmem:[#allocation9 + $0x158] sm:$0xff]
    %v3088 = vld [vmem:[#allocation9 + $0x160] sm:$0xff]
    %v3089 = vld [vmem:[#allocation9 + $0x168] sm:$0xff]
    %v3090 = vld [vmem:[#allocation9 + $0x170] sm:$0xff]
    %v3091 = vld [vmem:[#allocation9 + $0x178] sm:$0xff]
    %v3092 = vld [vmem:[#allocation9 + $0x180] sm:$0xff]
    %v3093 = vld [vmem:[#allocation9 + $0x188] sm:$0xff]
    %v3094 = vld [vmem:[#allocation9 + $0x190] sm:$0xff]
    %v3095 = vld [vmem:[#allocation9 + $0x198] sm:$0xff]
    %v3096 = vld [vmem:[#allocation9 + $0x1a0] sm:$0xff]
    %v3097 = vld [vmem:[#allocation9 + $0x1a8] sm:$0xff]
    %v3098 = vld [vmem:[#allocation9 + $0x1b0] sm:$0xff]
    %v3099 = vld [vmem:[#allocation9 + $0x1b8] sm:$0xff]
    %v3100 = vld [vmem:[#allocation9 + $0x1c0] sm:$0xff]
    %v3101 = vld [vmem:[#allocation9 + $0x1c8] sm:$0xff]
    %v3102 = vld [vmem:[#allocation9 + $0x1d0] sm:$0xff]
    %v3103 = vld [vmem:[#allocation9 + $0x1d8] sm:$0xff]
    %v3104 = vld [vmem:[#allocation9 + $0x1e0] sm:$0xff]
    %v3105 = vld [vmem:[#allocation9 + $0x1e8] sm:$0xff]
    %v3106 = vld [vmem:[#allocation9 + $0x1f0] sm:$0xff]
    %v3107 = vld [vmem:[#allocation9 + $0x1f8] sm:$0xff]
    %v3108 = vld [vmem:[#allocation11] sm:$0xf]
    %v3110 = vlaneseq
    %v3111 = vshrl.u32 %v3110, 7
    %v3112 = vsub.s32 0, %v3111
    %v3113 = vrot.slane %v3108, %v3112
    %v3114 = vlaneseq
    %v3115 = vshrl.u32 %v3114, 7
    %v3116 = vsub.s32 1, %v3115
    %v3117 = vrot.slane %v3108, %v3116
    %v3118 = vlaneseq
    %v3119 = vshrl.u32 %v3118, 7
    %v3120 = vsub.s32 2, %v3119
    %v3121 = vrot.slane %v3108, %v3120
    %v3122 = vlaneseq
    %v3123 = vshrl.u32 %v3122, 7
    %v3124 = vsub.s32 3, %v3123
    %v3125 = vrot.slane %v3108, %v3124
    %v3194 = vunpack.c.l.b16 %v3044
    %v3195 = vunpack.c.h.b16 %v3044
    %v3196 = vunpack.c.l.b16 %v3045
    %v3197 = vunpack.c.h.b16 %v3045
    %v3198 = vunpack.c.l.b16 %v3046
    %v3199 = vunpack.c.h.b16 %v3046
    %v3200 = vunpack.c.l.b16 %v3047
    %v3201 = vunpack.c.h.b16 %v3047
    %v3202 = vunpack.c.l.b16 %v3048
    %v3203 = vunpack.c.h.b16 %v3048
    %v3204 = vunpack.c.l.b16 %v3049
    %v3205 = vunpack.c.h.b16 %v3049
    %v3206 = vunpack.c.l.b16 %v3050
    %v3207 = vunpack.c.h.b16 %v3050
    %v3208 = vunpack.c.l.b16 %v3051
    %v3209 = vunpack.c.h.b16 %v3051
    %v3210 = vunpack.c.l.b16 %v3052
    %v3211 = vunpack.c.h.b16 %v3052
    %v3212 = vunpack.c.l.b16 %v3053
    %v3213 = vunpack.c.h.b16 %v3053
    %v3214 = vunpack.c.l.b16 %v3054
    %v3215 = vunpack.c.h.b16 %v3054
    %v3216 = vunpack.c.l.b16 %v3055
    %v3217 = vunpack.c.h.b16 %v3055
    %v3218 = vunpack.c.l.b16 %v3056
    %v3219 = vunpack.c.h.b16 %v3056
    %v3220 = vunpack.c.l.b16 %v3057
    %v3221 = vunpack.c.h.b16 %v3057
    %v3222 = vunpack.c.l.b16 %v3058
    %v3223 = vunpack.c.h.b16 %v3058
    %v3224 = vunpack.c.l.b16 %v3059
    %v3225 = vunpack.c.h.b16 %v3059
    %v3226 = vunpack.c.l.b16 %v3060
    %v3227 = vunpack.c.h.b16 %v3060
    %v3228 = vunpack.c.l.b16 %v3061
    %v3229 = vunpack.c.h.b16 %v3061
    %v3230 = vunpack.c.l.b16 %v3062
    %v3231 = vunpack.c.h.b16 %v3062
    %v3232 = vunpack.c.l.b16 %v3063
    %v3233 = vunpack.c.h.b16 %v3063
    %v3234 = vunpack.c.l.b16 %v3064
    %v3235 = vunpack.c.h.b16 %v3064
    %v3236 = vunpack.c.l.b16 %v3065
    %v3237 = vunpack.c.h.b16 %v3065
    %v3238 = vunpack.c.l.b16 %v3066
    %v3239 = vunpack.c.h.b16 %v3066
    %v3240 = vunpack.c.l.b16 %v3067
    %v3241 = vunpack.c.h.b16 %v3067
    %v3242 = vunpack.c.l.b16 %v3068
    %v3243 = vunpack.c.h.b16 %v3068
    %v3244 = vunpack.c.l.b16 %v3069
    %v3245 = vunpack.c.h.b16 %v3069
    %v3246 = vunpack.c.l.b16 %v3070
    %v3247 = vunpack.c.h.b16 %v3070
    %v3248 = vunpack.c.l.b16 %v3071
    %v3249 = vunpack.c.h.b16 %v3071
    %v3250 = vunpack.c.l.b16 %v3072
    %v3251 = vunpack.c.h.b16 %v3072
    %v3252 = vunpack.c.l.b16 %v3073
    %v3253 = vunpack.c.h.b16 %v3073
    %v3254 = vunpack.c.l.b16 %v3074
    %v3255 = vunpack.c.h.b16 %v3074
    %v3256 = vunpack.c.l.b16 %v3075
    %v3257 = vunpack.c.h.b16 %v3075
    %v3258 = vunpack.c.l.b16 %v3076
    %v3259 = vunpack.c.h.b16 %v3076
    %v3260 = vunpack.c.l.b16 %v3077
    %v3261 = vunpack.c.h.b16 %v3077
    %v3262 = vunpack.c.l.b16 %v3078
    %v3263 = vunpack.c.h.b16 %v3078
    %v3264 = vunpack.c.l.b16 %v3079
    %v3265 = vunpack.c.h.b16 %v3079
    %v3266 = vunpack.c.l.b16 %v3080
    %v3267 = vunpack.c.h.b16 %v3080
    %v3268 = vunpack.c.l.b16 %v3081
    %v3269 = vunpack.c.h.b16 %v3081
    %v3270 = vunpack.c.l.b16 %v3082
    %v3271 = vunpack.c.h.b16 %v3082
    %v3272 = vunpack.c.l.b16 %v3083
    %v3273 = vunpack.c.h.b16 %v3083
    %v3274 = vunpack.c.l.b16 %v3084
    %v3275 = vunpack.c.h.b16 %v3084
    %v3276 = vunpack.c.l.b16 %v3085
    %v3277 = vunpack.c.h.b16 %v3085
    %v3278 = vunpack.c.l.b16 %v3086
    %v3279 = vunpack.c.h.b16 %v3086
    %v3280 = vunpack.c.l.b16 %v3087
    %v3281 = vunpack.c.h.b16 %v3087
    %v3282 = vunpack.c.l.b16 %v3088
    %v3283 = vunpack.c.h.b16 %v3088
    %v3284 = vunpack.c.l.b16 %v3089
    %v3285 = vunpack.c.h.b16 %v3089
    %v3286 = vunpack.c.l.b16 %v3090
    %v3287 = vunpack.c.h.b16 %v3090
    %v3288 = vunpack.c.l.b16 %v3091
    %v3289 = vunpack.c.h.b16 %v3091
    %v3290 = vunpack.c.l.b16 %v3092
    %v3291 = vunpack.c.h.b16 %v3092
    %v3292 = vunpack.c.l.b16 %v3093
    %v3293 = vunpack.c.h.b16 %v3093
    %v3294 = vunpack.c.l.b16 %v3094
    %v3295 = vunpack.c.h.b16 %v3094
    %v3296 = vunpack.c.l.b16 %v3095
    %v3297 = vunpack.c.h.b16 %v3095
    %v3298 = vunpack.c.l.b16 %v3096
    %v3299 = vunpack.c.h.b16 %v3096
    %v3300 = vunpack.c.l.b16 %v3097
    %v3301 = vunpack.c.h.b16 %v3097
    %v3302 = vunpack.c.l.b16 %v3098
    %v3303 = vunpack.c.h.b16 %v3098
    %v3304 = vunpack.c.l.b16 %v3099
    %v3305 = vunpack.c.h.b16 %v3099
    %v3306 = vunpack.c.l.b16 %v3100
    %v3307 = vunpack.c.h.b16 %v3100
    %v3308 = vunpack.c.l.b16 %v3101
    %v3309 = vunpack.c.h.b16 %v3101
    %v3310 = vunpack.c.l.b16 %v3102
    %v3311 = vunpack.c.h.b16 %v3102
    %v3312 = vunpack.c.l.b16 %v3103
    %v3313 = vunpack.c.h.b16 %v3103
    %v3314 = vunpack.c.l.b16 %v3104
    %v3315 = vunpack.c.h.b16 %v3104
    %v3316 = vunpack.c.l.b16 %v3105
    %v3317 = vunpack.c.h.b16 %v3105
    %v3318 = vunpack.c.l.b16 %v3106
    %v3319 = vunpack.c.h.b16 %v3106
    %v3320 = vunpack.c.l.b16 %v3107
    %v3321 = vunpack.c.h.b16 %v3107
    %v3322 = vpack.c.b16 %v3198, %v3194
    %v3323 = vpack.c.b16 %v3199, %v3195
    %v3324 = vpack.c.b16 %v3200, %v3196
    %v3325 = vpack.c.b16 %v3201, %v3197
    %v3326 = vpack.c.b16 %v3206, %v3202
    %v3327 = vpack.c.b16 %v3207, %v3203
    %v3328 = vpack.c.b16 %v3208, %v3204
    %v3329 = vpack.c.b16 %v3209, %v3205
    %v3330 = vpack.c.b16 %v3214, %v3210
    %v3331 = vpack.c.b16 %v3215, %v3211
    %v3332 = vpack.c.b16 %v3216, %v3212
    %v3333 = vpack.c.b16 %v3217, %v3213
    %v3334 = vpack.c.b16 %v3222, %v3218
    %v3335 = vpack.c.b16 %v3223, %v3219
    %v3336 = vpack.c.b16 %v3224, %v3220
    %v3337 = vpack.c.b16 %v3225, %v3221
    %v3338 = vpack.c.b16 %v3230, %v3226
    %v3339 = vpack.c.b16 %v3231, %v3227
    %v3340 = vpack.c.b16 %v3232, %v3228
    %v3341 = vpack.c.b16 %v3233, %v3229
    %v3342 = vpack.c.b16 %v3238, %v3234
    %v3343 = vpack.c.b16 %v3239, %v3235
    %v3344 = vpack.c.b16 %v3240, %v3236
    %v3345 = vpack.c.b16 %v3241, %v3237
    %v3346 = vpack.c.b16 %v3246, %v3242
    %v3347 = vpack.c.b16 %v3247, %v3243
    %v3348 = vpack.c.b16 %v3248, %v3244
    %v3349 = vpack.c.b16 %v3249, %v3245
    %v3350 = vpack.c.b16 %v3254, %v3250
    %v3351 = vpack.c.b16 %v3255, %v3251
    %v3352 = vpack.c.b16 %v3256, %v3252
    %v3353 = vpack.c.b16 %v3257, %v3253
    %v3354 = vpack.c.b16 %v3262, %v3258
    %v3355 = vpack.c.b16 %v3263, %v3259
    %v3356 = vpack.c.b16 %v3264, %v3260
    %v3357 = vpack.c.b16 %v3265, %v3261
    %v3358 = vpack.c.b16 %v3270, %v3266
    %v3359 = vpack.c.b16 %v3271, %v3267
    %v3360 = vpack.c.b16 %v3272, %v3268
    %v3361 = vpack.c.b16 %v3273, %v3269
    %v3362 = vpack.c.b16 %v3278, %v3274
    %v3363 = vpack.c.b16 %v3279, %v3275
    %v3364 = vpack.c.b16 %v3280, %v3276
    %v3365 = vpack.c.b16 %v3281, %v3277
    %v3366 = vpack.c.b16 %v3286, %v3282
    %v3367 = vpack.c.b16 %v3287, %v3283
    %v3368 = vpack.c.b16 %v3288, %v3284
    %v3369 = vpack.c.b16 %v3289, %v3285
    %v3370 = vpack.c.b16 %v3294, %v3290
    %v3371 = vpack.c.b16 %v3295, %v3291
    %v3372 = vpack.c.b16 %v3296, %v3292
    %v3373 = vpack.c.b16 %v3297, %v3293
    %v3374 = vpack.c.b16 %v3302, %v3298
    %v3375 = vpack.c.b16 %v3303, %v3299
    %v3376 = vpack.c.b16 %v3304, %v3300
    %v3377 = vpack.c.b16 %v3305, %v3301
    %v3378 = vpack.c.b16 %v3310, %v3306
    %v3379 = vpack.c.b16 %v3311, %v3307
    %v3380 = vpack.c.b16 %v3312, %v3308
    %v3381 = vpack.c.b16 %v3313, %v3309
    %v3382 = vpack.c.b16 %v3318, %v3314
    %v3383 = vpack.c.b16 %v3319, %v3315
    %v3384 = vpack.c.b16 %v3320, %v3316
    %v3385 = vpack.c.b16 %v3321, %v3317
    %3450 = vmatprep.subr.bf16.mxu0 %v3323
    %3451 = vmatpush1.bf16.msra.mxu0 %v3322
    %3452 = vmatprep.subr.bf16.mxu0 %v3327
    %3453 = vmatpush1.bf16.msra.mxu0 %v3326
    %3454 = vmatprep.subr.bf16.mxu0 %v3331
    %3455 = vmatpush1.bf16.msra.mxu0 %v3330
    %3456 = vmatprep.subr.bf16.mxu0 %v3335
    %3457 = vmatpush1.bf16.msra.mxu0 %v3334
    %3458 = vmatprep.subr.bf16.mxu0 %v3339
    %3459 = vmatpush1.bf16.msra.mxu0 %v3338
    %3460 = vmatprep.subr.bf16.mxu0 %v3343
    %3461 = vmatpush1.bf16.msra.mxu0 %v3342
    %3462 = vmatprep.subr.bf16.mxu0 %v3347
    %3463 = vmatpush1.bf16.msra.mxu0 %v3346
    %3464 = vmatprep.subr.bf16.mxu0 %v3351
    %3465 = vmatpush1.bf16.msra.mxu0 %v3350
    %3466 = vmatprep.subr.bf16.mxu0 %v3355
    %3467 = vmatpush1.bf16.msra.mxu0 %v3354
    %3468 = vmatprep.subr.bf16.mxu0 %v3359
    %3469 = vmatpush1.bf16.msra.mxu0 %v3358
    %3470 = vmatprep.subr.bf16.mxu0 %v3363
    %3471 = vmatpush1.bf16.msra.mxu0 %v3362
    %3472 = vmatprep.subr.bf16.mxu0 %v3367
    %3473 = vmatpush1.bf16.msra.mxu0 %v3366
    %3474 = vmatprep.subr.bf16.mxu0 %v3371
    %3475 = vmatpush1.bf16.msra.mxu0 %v3370
    %3476 = vmatprep.subr.bf16.mxu0 %v3375
    %3477 = vmatpush1.bf16.msra.mxu0 %v3374
    %3478 = vmatprep.subr.bf16.mxu0 %v3379
    %3479 = vmatpush1.bf16.msra.mxu0 %v3378
    %3480 = vmatprep.subr.bf16.mxu0 %v3383
    %3481 = vmatpush1.bf16.msra.mxu0 %v3382
    %3482 = vmatprep.mubr.bf16.mxu0 %v3043
    %3483 = vmatmul.mubr.bf16.gmra.mrb[0].mxu0 %v3042
    %v3484 = vpop.f32.mrb[0].mxu0
    %v3485 = vadd.f32 %v3113, %v3484
    %v3486 = vpop.f32.mrb[0].mxu0
    %v3487 = vadd.f32 %v3117, %v3486
    %v3488 = vpop.f32.mrb[0].mxu0
    %v3489 = vpop.f32.mrb[0].mxu0
    %3490 = vdwg.mxu0
    %3491 = vmatprep.subr.bf16.mxu0 %v3325
    %3492 = vmatpush1.bf16.msra.mxu0 %v3324
    %3493 = vmatprep.subr.bf16.mxu0 %v3329
    %3494 = vmatpush1.bf16.msra.mxu0 %v3328
    %3495 = vmatprep.subr.bf16.mxu0 %v3333
    %3496 = vmatpush1.bf16.msra.mxu0 %v3332
    %3497 = vmatprep.subr.bf16.mxu0 %v3337
    %3498 = vmatpush1.bf16.msra.mxu0 %v3336
    %3499 = vmatprep.subr.bf16.mxu0 %v3341
    %3500 = vmatpush1.bf16.msra.mxu0 %v3340
    %3501 = vmatprep.subr.bf16.mxu0 %v3345
    %3502 = vmatpush1.bf16.msra.mxu0 %v3344
    %3503 = vmatprep.subr.bf16.mxu0 %v3349
    %3504 = vmatpush1.bf16.msra.mxu0 %v3348
    %3505 = vmatprep.subr.bf16.mxu0 %v3353
    %3506 = vmatpush1.bf16.msra.mxu0 %v3352
    %3507 = vmatprep.subr.bf16.mxu0 %v3357
    %3508 = vmatpush1.bf16.msra.mxu0 %v3356
    %3509 = vmatprep.subr.bf16.mxu0 %v3361
    %3510 = vmatpush1.bf16.msra.mxu0 %v3360
    %3511 = vmatprep.subr.bf16.mxu0 %v3365
    %3512 = vmatpush1.bf16.msra.mxu0 %v3364
    %3513 = vmatprep.subr.bf16.mxu0 %v3369
    %3514 = vmatpush1.bf16.msra.mxu0 %v3368
    %3515 = vmatprep.subr.bf16.mxu0 %v3373
    %3516 = vmatpush1.bf16.msra.mxu0 %v3372
    %3517 = vmatprep.subr.bf16.mxu0 %v3377
    %3518 = vmatpush1.bf16.msra.mxu0 %v3376
    %3519 = vmatprep.subr.bf16.mxu0 %v3381
    %3520 = vmatpush1.bf16.msra.mxu0 %v3380
    %3521 = vmatprep.subr.bf16.mxu0 %v3385
    %3522 = vmatpush1.bf16.msra.mxu0 %v3384
    %3523 = vmatprep.mubr.bf16.mxu0 %v3043
    %3524 = vmatmul.mubr.bf16.gmra.mrb[0].mxu0 %v3042
    %v3525 = vpop.f32.mrb[0].mxu0
    %v3526 = vadd.f32 %v3121, %v3525
    %v3527 = vpop.f32.mrb[0].mxu0
    %v3528 = vadd.f32 %v3125, %v3527
    %v3529 = vpop.f32.mrb[0].mxu0
    %v3530 = vpop.f32.mrb[0].mxu0
    %3531 = vdwg.mxu0
    %v3532 = vmax.f32 %v3485, 0.0
    %v3533 = vmax.f32 %v3487, 0.0
    %v3534 = vmax.f32 %v3526, 0.0
    %v3535 = vmax.f32 %v3528, 0.0
    %v3536 = vmax.f32 %v3532, %v3533
    %v3537 = vmax.f32 %v3534, %v3535
    %v3538 = vmax.f32 %v3536, %v3537
    %v3539 = vpack.c.bf16 %v3538, %v3538
    %v3540 = vld [vmem:[#allocation12] sm:$0xff]
    %v3541 = vld [vmem:[#allocation12 + $0x8] sm:$0xff]
    %v3542 = vld [vmem:[#allocation12 + $0x10] sm:$0xff]
    %v3543 = vld [vmem:[#allocation12 + $0x18] sm:$0xff]
    %v3544 = vld [vmem:[#allocation12 + $0x20] sm:$0xff]
    %v3545 = vld [vmem:[#allocation12 + $0x28] sm:$0xff]
    %v3546 = vld [vmem:[#allocation12 + $0x30] sm:$0xff]
    %v3547 = vld [vmem:[#allocation12 + $0x38] sm:$0xff]
    %v3548 = vld [vmem:[#allocation12 + $0x40] sm:$0xff]
    %v3549 = vld [vmem:[#allocation12 + $0x48] sm:$0xff]
    %v3550 = vld [vmem:[#allocation12 + $0x50] sm:$0xff]
    %v3551 = vld [vmem:[#allocation12 + $0x58] sm:$0xff]
    %v3552 = vld [vmem:[#allocation12 + $0x60] sm:$0xff]
    %v3553 = vld [vmem:[#allocation12 + $0x68] sm:$0xff]
    %v3554 = vld [vmem:[#allocation12 + $0x70] sm:$0xff]
    %v3555 = vld [vmem:[#allocation12 + $0x78] sm:$0xff]
    %v3556 = vld [vmem:[#allocation12 + $0x80] sm:$0xff]
    %v3557 = vld [vmem:[#allocation12 + $0x88] sm:$0xff]
    %v3558 = vld [vmem:[#allocation12 + $0x90] sm:$0xff]
    %v3559 = vld [vmem:[#allocation12 + $0x98] sm:$0xff]
    %v3560 = vld [vmem:[#allocation12 + $0xa0] sm:$0xff]
    %v3561 = vld [vmem:[#allocation12 + $0xa8] sm:$0xff]
    %v3562 = vld [vmem:[#allocation12 + $0xb0] sm:$0xff]
    %v3563 = vld [vmem:[#allocation12 + $0xb8] sm:$0xff]
    %v3564 = vld [vmem:[#allocation12 + $0xc0] sm:$0xff]
    %v3565 = vld [vmem:[#allocation12 + $0xc8] sm:$0xff]
    %v3566 = vld [vmem:[#allocation12 + $0xd0] sm:$0xff]
    %v3567 = vld [vmem:[#allocation12 + $0xd8] sm:$0xff]
    %v3568 = vld [vmem:[#allocation12 + $0xe0] sm:$0xff]
    %v3569 = vld [vmem:[#allocation12 + $0xe8] sm:$0xff]
    %v3570 = vld [vmem:[#allocation12 + $0xf0] sm:$0xff]
    %v3571 = vld [vmem:[#allocation12 + $0xf8] sm:$0xff]
    %v3572 = vld [vmem:[#allocation14] sm:$0xf]
    %v3574 = vlaneseq
    %v3575 = vshrl.u32 %v3574, 7
    %v3576 = vsub.s32 0, %v3575
    %v3577 = vrot.slane %v3572, %v3576
    %v3578 = vlaneseq
    %v3579 = vshrl.u32 %v3578, 7
    %v3580 = vsub.s32 1, %v3579
    %v3581 = vrot.slane %v3572, %v3580
    %v3582 = vlaneseq
    %v3583 = vshrl.u32 %v3582, 7
    %v3584 = vsub.s32 2, %v3583
    %v3585 = vrot.slane %v3572, %v3584
    %v3586 = vlaneseq
    %v3587 = vshrl.u32 %v3586, 7
    %v3588 = vsub.s32 3, %v3587
    %v3589 = vrot.slane %v3572, %v3588
    %v3626 = vunpack.c.l.b16 %v3540
    %v3627 = vunpack.c.h.b16 %v3540
    %v3628 = vunpack.c.l.b16 %v3541
    %v3629 = vunpack.c.h.b16 %v3541
    %v3630 = vunpack.c.l.b16 %v3542
    %v3631 = vunpack.c.h.b16 %v3542
    %v3632 = vunpack.c.l.b16 %v3543
    %v3633 = vunpack.c.h.b16 %v3543
    %v3634 = vunpack.c.l.b16 %v3544
    %v3635 = vunpack.c.h.b16 %v3544
    %v3636 = vunpack.c.l.b16 %v3545
    %v3637 = vunpack.c.h.b16 %v3545
    %v3638 = vunpack.c.l.b16 %v3546
    %v3639 = vunpack.c.h.b16 %v3546
    %v3640 = vunpack.c.l.b16 %v3547
    %v3641 = vunpack.c.h.b16 %v3547
    %v3642 = vunpack.c.l.b16 %v3548
    %v3643 = vunpack.c.h.b16 %v3548
    %v3644 = vunpack.c.l.b16 %v3549
    %v3645 = vunpack.c.h.b16 %v3549
    %v3646 = vunpack.c.l.b16 %v3550
    %v3647 = vunpack.c.h.b16 %v3550
    %v3648 = vunpack.c.l.b16 %v3551
    %v3649 = vunpack.c.h.b16 %v3551
    %v3650 = vunpack.c.l.b16 %v3552
    %v3651 = vunpack.c.h.b16 %v3552
    %v3652 = vunpack.c.l.b16 %v3553
    %v3653 = vunpack.c.h.b16 %v3553
    %v3654 = vunpack.c.l.b16 %v3554
    %v3655 = vunpack.c.h.b16 %v3554
    %v3656 = vunpack.c.l.b16 %v3555
    %v3657 = vunpack.c.h.b16 %v3555
    %v3658 = vunpack.c.l.b16 %v3556
    %v3659 = vunpack.c.h.b16 %v3556
    %v3660 = vunpack.c.l.b16 %v3557
    %v3661 = vunpack.c.h.b16 %v3557
    %v3662 = vunpack.c.l.b16 %v3558
    %v3663 = vunpack.c.h.b16 %v3558
    %v3664 = vunpack.c.l.b16 %v3559
    %v3665 = vunpack.c.h.b16 %v3559
    %v3666 = vunpack.c.l.b16 %v3560
    %v3667 = vunpack.c.h.b16 %v3560
    %v3668 = vunpack.c.l.b16 %v3561
    %v3669 = vunpack.c.h.b16 %v3561
    %v3670 = vunpack.c.l.b16 %v3562
    %v3671 = vunpack.c.h.b16 %v3562
    %v3672 = vunpack.c.l.b16 %v3563
    %v3673 = vunpack.c.h.b16 %v3563
    %v3674 = vunpack.c.l.b16 %v3564
    %v3675 = vunpack.c.h.b16 %v3564
    %v3676 = vunpack.c.l.b16 %v3565
    %v3677 = vunpack.c.h.b16 %v3565
    %v3678 = vunpack.c.l.b16 %v3566
    %v3679 = vunpack.c.h.b16 %v3566
    %v3680 = vunpack.c.l.b16 %v3567
    %v3681 = vunpack.c.h.b16 %v3567
    %v3682 = vunpack.c.l.b16 %v3568
    %v3683 = vunpack.c.h.b16 %v3568
    %v3684 = vunpack.c.l.b16 %v3569
    %v3685 = vunpack.c.h.b16 %v3569
    %v3686 = vunpack.c.l.b16 %v3570
    %v3687 = vunpack.c.h.b16 %v3570
    %v3688 = vunpack.c.l.b16 %v3571
    %v3689 = vunpack.c.h.b16 %v3571
    %v3690 = vpack.c.b16 %v3630, %v3626
    %v3691 = vpack.c.b16 %v3631, %v3627
    %v3692 = vpack.c.b16 %v3632, %v3628
    %v3693 = vpack.c.b16 %v3633, %v3629
    %v3694 = vpack.c.b16 %v3638, %v3634
    %v3695 = vpack.c.b16 %v3639, %v3635
    %v3696 = vpack.c.b16 %v3640, %v3636
    %v3697 = vpack.c.b16 %v3641, %v3637
    %v3698 = vpack.c.b16 %v3646, %v3642
    %v3699 = vpack.c.b16 %v3647, %v3643
    %v3700 = vpack.c.b16 %v3648, %v3644
    %v3701 = vpack.c.b16 %v3649, %v3645
    %v3702 = vpack.c.b16 %v3654, %v3650
    %v3703 = vpack.c.b16 %v3655, %v3651
    %v3704 = vpack.c.b16 %v3656, %v3652
    %v3705 = vpack.c.b16 %v3657, %v3653
    %v3706 = vpack.c.b16 %v3662, %v3658
    %v3707 = vpack.c.b16 %v3663, %v3659
    %v3708 = vpack.c.b16 %v3664, %v3660
    %v3709 = vpack.c.b16 %v3665, %v3661
    %v3710 = vpack.c.b16 %v3670, %v3666
    %v3711 = vpack.c.b16 %v3671, %v3667
    %v3712 = vpack.c.b16 %v3672, %v3668
    %v3713 = vpack.c.b16 %v3673, %v3669
    %v3714 = vpack.c.b16 %v3678, %v3674
    %v3715 = vpack.c.b16 %v3679, %v3675
    %v3716 = vpack.c.b16 %v3680, %v3676
    %v3717 = vpack.c.b16 %v3681, %v3677
    %v3718 = vpack.c.b16 %v3686, %v3682
    %v3719 = vpack.c.b16 %v3687, %v3683
    %v3720 = vpack.c.b16 %v3688, %v3684
    %v3721 = vpack.c.b16 %v3689, %v3685
    %3754 = vmatprep.subr.bf16.mxu0 %v3691
    %3755 = vmatpush1.bf16.msra.mxu0 %v3690
    %3756 = vmatprep.subr.bf16.mxu0 %v3695
    %3757 = vmatpush1.bf16.msra.mxu0 %v3694
    %3758 = vmatprep.subr.bf16.mxu0 %v3699
    %3759 = vmatpush1.bf16.msra.mxu0 %v3698
    %3760 = vmatprep.subr.bf16.mxu0 %v3703
    %3761 = vmatpush1.bf16.msra.mxu0 %v3702
    %3762 = vmatprep.subr.bf16.mxu0 %v3707
    %3763 = vmatpush1.bf16.msra.mxu0 %v3706
    %3764 = vmatprep.subr.bf16.mxu0 %v3711
    %3765 = vmatpush1.bf16.msra.mxu0 %v3710
    %3766 = vmatprep.subr.bf16.mxu0 %v3715
    %3767 = vmatpush1.bf16.msra.mxu0 %v3714
    %3768 = vmatprep.subr.bf16.mxu0 %v3719
    %3769 = vmatpush1.bf16.msra.mxu0 %v3718
    %3770 = vmatprep.subr.bf16.mxu0 0
    %3771 = vmatpush1.bf16.msra.mxu0 0
    %3772 = vmatprep.subr.bf16.mxu0 0
    %3773 = vmatpush1.bf16.msra.mxu0 0
    %3774 = vmatprep.subr.bf16.mxu0 0
    %3775 = vmatpush1.bf16.msra.mxu0 0
    %3776 = vmatprep.subr.bf16.mxu0 0
    %3777 = vmatpush1.bf16.msra.mxu0 0
    %3778 = vmatprep.subr.bf16.mxu0 0
    %3779 = vmatpush1.bf16.msra.mxu0 0
    %3780 = vmatprep.subr.bf16.mxu0 0
    %3781 = vmatpush1.bf16.msra.mxu0 0
    %3782 = vmatprep.subr.bf16.mxu0 0
    %3783 = vmatpush1.bf16.msra.mxu0 0
    %3784 = vmatprep.subr.bf16.mxu0 0
    %3785 = vmatpush1.bf16.msra.mxu0 0
    %3786 = vmatprep.mubr.bf16.mxu0 0
    %3787 = vmatmul.mubr.bf16.gmra.mrb[0].mxu0 %v3539
    %v3788 = vpop.f32.mrb[0].mxu0
    %v3789 = vadd.f32 %v3577, %v3788
    %v3790 = vpop.f32.mrb[0].mxu0
    %v3791 = vadd.f32 %v3581, %v3790
    %v3792 = vpop.f32.mrb[0].mxu0
    %v3793 = vpop.f32.mrb[0].mxu0
    %3794 = vdwg.mxu0
    %3795 = vmatprep.subr.bf16.mxu0 %v3693
    %3796 = vmatpush1.bf16.msra.mxu0 %v3692
    %3797 = vmatprep.subr.bf16.mxu0 %v3697
    %3798 = vmatpush1.bf16.msra.mxu0 %v3696
    %3799 = vmatprep.subr.bf16.mxu0 %v3701
    %3800 = vmatpush1.bf16.msra.mxu0 %v3700
    %3801 = vmatprep.subr.bf16.mxu0 %v3705
    %3802 = vmatpush1.bf16.msra.mxu0 %v3704
    %3803 = vmatprep.subr.bf16.mxu0 %v3709
    %3804 = vmatpush1.bf16.msra.mxu0 %v3708
    %3805 = vmatprep.subr.bf16.mxu0 %v3713
    %3806 = vmatpush1.bf16.msra.mxu0 %v3712
    %3807 = vmatprep.subr.bf16.mxu0 %v3717
    %3808 = vmatpush1.bf16.msra.mxu0 %v3716
    %3809 = vmatprep.subr.bf16.mxu0 %v3721
    %3810 = vmatpush1.bf16.msra.mxu0 %v3720
    %3811 = vmatprep.subr.bf16.mxu0 0
    %3812 = vmatpush1.bf16.msra.mxu0 0
    %3813 = vmatprep.subr.bf16.mxu0 0
    %3814 = vmatpush1.bf16.msra.mxu0 0
    %3815 = vmatprep.subr.bf16.mxu0 0
    %3816 = vmatpush1.bf16.msra.mxu0 0
    %3817 = vmatprep.subr.bf16.mxu0 0
    %3818 = vmatpush1.bf16.msra.mxu0 0
    %3819 = vmatprep.subr.bf16.mxu0 0
    %3820 = vmatpush1.bf16.msra.mxu0 0
    %3821 = vmatprep.subr.bf16.mxu0 0
    %3822 = vmatpush1.bf16.msra.mxu0 0
    %3823 = vmatprep.subr.bf16.mxu0 0
    %3824 = vmatpush1.bf16.msra.mxu0 0
    %3825 = vmatprep.subr.bf16.mxu0 0
    %3826 = vmatpush1.bf16.msra.mxu0 0
    %3827 = vmatprep.mubr.bf16.mxu0 0
    %3828 = vmatmul.mubr.bf16.gmra.mrb[0].mxu0 %v3539
    %v3829 = vpop.f32.mrb[0].mxu0
    %v3830 = vadd.f32 %v3585, %v3829
    %v3831 = vpop.f32.mrb[0].mxu0
    %v3832 = vadd.f32 %v3589, %v3831
    %v3833 = vpop.f32.mrb[0].mxu0
    %v3834 = vpop.f32.mrb[0].mxu0
    %3835 = vdwg.mxu0
    %v3836 = vmax.f32 %v3789, 0.0
    %v3837 = vmax.f32 %v3791, 0.0
    %v3838 = vmax.f32 %v3830, 0.0
    %v3839 = vmax.f32 %v3832, 0.0
    %v3840 = vmax.f32 %v3836, %v3837
    %v3841 = vmax.f32 %v3838, %v3839
    %v3842 = vmax.f32 %v3840, %v3841
    %v3843 = vpack.c.bf16 %v3842, %v3842
    %v3844 = vld [vmem:[#allocation15] sm:$0xf]
    %v3845 = vld [vmem:[#allocation15 + $0x4] sm:$0xf]
    %v3846 = vld [vmem:[#allocation15 + $0x8] sm:$0xf]
    %v3847 = vld [vmem:[#allocation15 + $0xc] sm:$0xf]
    %v3848 = vld [vmem:[#allocation15 + $0x10] sm:$0xf]
    %v3849 = vld [vmem:[#allocation15 + $0x14] sm:$0xf]
    %v3850 = vld [vmem:[#allocation15 + $0x18] sm:$0xf]
    %v3851 = vld [vmem:[#allocation15 + $0x1c] sm:$0xf]
    %v3852 = vld [vmem:[#allocation15 + $0x20] sm:$0xf]
    %v3853 = vld [vmem:[#allocation15 + $0x24] sm:$0xf]
    %v3854 = vld [vmem:[#allocation15 + $0x28] sm:$0xf]
    %v3855 = vld [vmem:[#allocation15 + $0x2c] sm:$0xf]
    %v3856 = vld [vmem:[#allocation15 + $0x30] sm:$0xf]
    %v3857 = vld [vmem:[#allocation15 + $0x34] sm:$0xf]
    %v3858 = vld [vmem:[#allocation15 + $0x38] sm:$0xf]
    %v3859 = vld [vmem:[#allocation15 + $0x3c] sm:$0xf]
    %v3860 = vld [vmem:[#allocation17] sm:$0x1]
    %v3862 = vlaneseq
    %v3863 = vshrl.u32 %v3862, 7
    %v3864 = vsub.s32 0, %v3863
    %v3865 = vrot.slane %v3860, %v3864
    %v3883 = vunpack.c.l.b16 %v3844
    %v3884 = vunpack.c.l.b16 %v3845
    %v3885 = vunpack.c.l.b16 %v3846
    %v3886 = vunpack.c.l.b16 %v3847
    %v3887 = vunpack.c.l.b16 %v3848
    %v3888 = vunpack.c.l.b16 %v3849
    %v3889 = vunpack.c.l.b16 %v3850
    %v3890 = vunpack.c.l.b16 %v3851
    %v3891 = vunpack.c.l.b16 %v3852
    %v3892 = vunpack.c.l.b16 %v3853
    %v3893 = vunpack.c.l.b16 %v3854
    %v3894 = vunpack.c.l.b16 %v3855
    %v3895 = vunpack.c.l.b16 %v3856
    %v3896 = vunpack.c.l.b16 %v3857
    %v3897 = vunpack.c.l.b16 %v3858
    %v3898 = vunpack.c.l.b16 %v3859
    %v3899 = vpack.c.b16 %v3884, %v3883
    %v3900 = vpack.c.b16 %v3886, %v3885
    %v3901 = vpack.c.b16 %v3888, %v3887
    %v3902 = vpack.c.b16 %v3890, %v3889
    %v3903 = vpack.c.b16 %v3892, %v3891
    %v3904 = vpack.c.b16 %v3894, %v3893
    %v3905 = vpack.c.b16 %v3896, %v3895
    %v3906 = vpack.c.b16 %v3898, %v3897
    %3915 = vmatprep.subr.bf16.mxu0 0
    %3916 = vmatpush1.bf16.msra.mxu0 %v3899
    %3917 = vmatprep.subr.bf16.mxu0 0
    %3918 = vmatpush1.bf16.msra.mxu0 %v3900
    %3919 = vmatprep.subr.bf16.mxu0 0
    %3920 = vmatpush1.bf16.msra.mxu0 %v3901
    %3921 = vmatprep.subr.bf16.mxu0 0
    %3922 = vmatpush1.bf16.msra.mxu0 %v3902
    %3923 = vmatprep.subr.bf16.mxu0 0
    %3924 = vmatpush1.bf16.msra.mxu0 %v3903
    %3925 = vmatprep.subr.bf16.mxu0 0
    %3926 = vmatpush1.bf16.msra.mxu0 %v3904
    %3927 = vmatprep.subr.bf16.mxu0 0
    %3928 = vmatpush1.bf16.msra.mxu0 %v3905
    %3929 = vmatprep.subr.bf16.mxu0 0
    %3930 = vmatpush1.bf16.msra.mxu0 %v3906
    %3931 = vmatprep.subr.bf16.mxu0 0
    %3932 = vmatpush1.bf16.msra.mxu0 0
    %3933 = vmatprep.subr.bf16.mxu0 0
    %3934 = vmatpush1.bf16.msra.mxu0 0
    %3935 = vmatprep.subr.bf16.mxu0 0
    %3936 = vmatpush1.bf16.msra.mxu0 0
    %3937 = vmatprep.subr.bf16.mxu0 0
    %3938 = vmatpush1.bf16.msra.mxu0 0
    %3939 = vmatprep.subr.bf16.mxu0 0
    %3940 = vmatpush1.bf16.msra.mxu0 0
    %3941 = vmatprep.subr.bf16.mxu0 0
    %3942 = vmatpush1.bf16.msra.mxu0 0
    %3943 = vmatprep.subr.bf16.mxu0 0
    %3944 = vmatpush1.bf16.msra.mxu0 0
    %3945 = vmatprep.subr.bf16.mxu0 0
    %3946 = vmatpush1.bf16.msra.mxu0 0
    %3947 = vmatprep.mubr.bf16.mxu0 0
    %3948 = vmatmul.mubr.bf16.gmra.mrb[0].mxu0 %v3843
    %v3949 = vpop.f32.mrb[0].mxu0
    %v3950 = vadd.f32 %v3865, %v3949
    %v3951 = vpop.f32.mrb[0].mxu0
    %v3952 = vpop.f32.mrb[0].mxu0
    %v3953 = vpop.f32.mrb[0].mxu0
    %3954 = vdwg.mxu0
    %v3955 = vmax.f32 %v3950, 0.0
    %v3956 = vld [vmem:[#allocation18] sm:$0x1]
    %v3958 = vlaneseq
    %v3959 = vshrl.u32 %v3958, 7
    %v3960 = vsub.s32 0, %v3959
    %v3961 = vrot.slane %v3956, %v3960
    %v3963 = vmul.f32 %v3955, %v3961
    %3964 = vadd.xlane.f32.xlu0 %v3963
    %v3965 = vpop.xlane.xlu0 %3964
    %v3966 = vld [vmem:[#allocation2] sm:$0x1]
    %v3968 = vlaneseq
    %v3969 = vshrl.u32 %v3968, 7
    %v3970 = vsub.s32 0, %v3969
    %v3971 = vrot.slane %v3966, %v3970
    %v3973 = vadd.f32 %v3965, %v3971
    %v3974 = vsub.f32 0.0, %v3973
    %v3975 = vmul.f32 %v3974, 1.442695
    %v3976 = vpow.pop %v3975
    %v3977 = vadd.f32 %v3976, 1.0
    %v3978 = vrcp.pop %v3977
    %3980 = vset.pattern.permute.xlu0 0
    %3981 = vperm.xlu0 %3980, %v3978
    %v3982 = vpop.permute.xlu0 %3981
    %3984 = vst [vmem:[#allocation20] sm:$0xff] %v3982
    // Predicated region
    $region86: #{tpu_custom_call.1} parent=1 // pred_check
      _
    $region87: #{tpu_custom_call.1} parent=1 // pred_check_branch
      %3986 = sbr.rel (0) target = $region89
    $region88: #{tpu_custom_call.1} parent=1 // pred_region
      %s3988 = ssub.s32 128, 128
      %3989 = vsyncadd [#allocation5], %s3988
      %s3991 = sshll.u32 [#allocation20], 4
      %s3992 = int_to_ptr.vmem [resolvable:$true] %s3991
      %3994 = dma.vmem_to_hbm [thread:$0]  %s3992, 128, %s11, [#allocation5]
    $region89: #{tpu_custom_call.1} parent=1 // pred_fallthru
      _
    // Predicated region
    $region90: #{tpu_custom_call.1} parent=1 // pred_check
      _
    $region91: #{tpu_custom_call.1} parent=1 // pred_check_branch
      %3996 = sbr.rel (0) target = $region93
    $region92: #{tpu_custom_call.1} parent=1 // pred_region
      %3997 = dma.done [#allocation5], 128
    $region93: #{tpu_custom_call.1} parent=1 // pred_fallthru
      _
    %3998 = vsyncpa [#allocation4], 1
    %3999 = vsyncpa [#allocation7], 1
    %4000 = vsyncpa [#allocation10], 1
    %4001 = vsyncpa [#allocation13], 1
    %4002 = vsyncpa [#allocation16], 1
    %4003 = vsyncpa [#allocation19], 1
    %4004 = vsyncpa [#allocation5], 1

</llo_original>
